<compile_context>
chip_gen: v7x
topology: tpu7x:2x2x1
jax: 0.10.0
libtpu: 0.0.40
codegen_flags: <defaults>
</compile_context>

<pallas_src>
import numpy as np
import jax
import jax.numpy as jnp
from jax import lax
from jax.experimental import pallas as pl
from jax.experimental.pallas import tpu as pltpu

_VMEM_LIMIT = 32 * 1024 * 1024  # safe on v5e/v6e (128M phys) and v7x (64M phys)


# ---------------------------------------------------------------------------
# Fully fused Inception kernel (per-image grid step)
# ---------------------------------------------------------------------------
def _make_inception_kernel(H, W, Cin, c1, c3red, c3, c4, padw):
    Cc = c1 + c3red
    ctot = c1 + c3 + c4

    def kernel(x_ref, wc_ref, bc_ref, w3_ref, w4_ref, be_ref, o_ref,
               ypad_ref, xpad_ref):
        # ---- branch1 + branch2-reduce (shared single read of x) ------------
        x2d = x_ref[0].reshape(H * W, Cin)
        ycomb = jnp.maximum(
            jnp.dot(x2d, wc_ref[...], preferred_element_type=jnp.float32)
            + bc_ref[...], 0.0)

        # ---- stage padded halos in VMEM scratch (no HBM padding pass) ------
        # Scratch persists across grid steps but interior + halo are rewritten
        # every step (cheap VPU fill), which stays correct under megacore.
        ypad_ref[...] = jnp.zeros_like(ypad_ref)
        ypad_ref[1:H + 1, padw:padw + W, :] = ycomb.reshape(H, W, Cc)
        xpad_ref[...] = jnp.full(xpad_ref.shape, -jnp.inf, dtype=xpad_ref.dtype)
        xpad_ref[1:H + 1, padw:padw + W, :] = x_ref[0]

        # ---- branch2 3x3 conv (+ branch1 identity tap): 9 shifted matmuls --
        acc = jnp.zeros((H * W, ctot), jnp.float32)
        for dh in range(3):
            for dw in range(3):
                patch = ypad_ref[dh:dh + H, padw - 1 + dw:padw - 1 + dw + W, :]
                acc = acc + jnp.dot(patch.reshape(H * W, Cc),
                                    w3_ref[dh, dw],
                                    preferred_element_type=jnp.float32)

        # ---- branch4: 3x3/s1/SAME maxpool (VPU) + 1x1 projection (MXU) -----
        m = xpad_ref[0:H, padw - 1:padw - 1 + W, :]
        for dh in range(3):
            for dw in range(3):
                if dh == 0 and dw == 0:
                    continue
                m = jnp.maximum(
                    m, xpad_ref[dh:dh + H, padw - 1 + dw:padw - 1 + dw + W, :])
        acc = acc + jnp.dot(m.reshape(H * W, Cin), w4_ref[...],
                            preferred_element_type=jnp.float32)

        # ---- bias + relu + single lane-dense store of the concat'd tile ----
        out = jnp.maximum(acc + be_ref[...], 0.0)
        o_ref[0] = out.reshape(H, W, ctot).astype(o_ref.dtype)

    return kernel


def inception_fused(x_nhwc, params):
    N, H, W, Cin = x_nhwc.shape
    w1, b1 = params["w1"], params["b1"]
    w2a, b2a = params["w2a"], params["b2a"]
    w2b, b2b = params["w2b"], params["b2b"]
    w4, b4 = params["w4"], params["b4"]

    c1, c3red = w1.shape[1], w2a.shape[1]
    c3, c4 = w2b.shape[-1], w4.shape[1]
    Cc = c1 + c3red
    ctot = c1 + c3 + c4
    padw = 8                        # 8-aligned left halo -> aligned sublane stores
    Wp = W + 2 * padw

    # Fused 1x1 pair weights: ycomb = relu(x @ [w1 | w2a] + [b1 | b2a]).
    wc = jnp.concatenate([w1, w2a], axis=1).astype(jnp.float32)
    bc = jnp.concatenate([b1, b2a]).reshape(1, Cc).astype(jnp.float32)

    # Embed every branch into one (.., ctot)-wide output space:
    #  - 3x3 weights occupy output columns [c1 : c1+c3] and input rows [c1 : Cc]
    #  - branch1 passthrough = identity block folded into the centre tap
    #  - pool-projection weights occupy output columns [c1+c3 : ctot]
    # Disjoint columns => one final ReLU is equivalent to per-branch ReLU
    # (branch1 values are already >= 0 after the first ReLU).
    w3e = jnp.zeros((3, 3, Cc, ctot), jnp.float32)
    w3e = w3e.at[:, :, c1:, c1:c1 + c3].set(w2b.astype(jnp.float32))
    w3e = w3e.at[1, 1, :c1, :c1].set(jnp.eye(c1, dtype=jnp.float32))
    w4e = jnp.zeros((Cin, ctot), jnp.float32)
    w4e = w4e.at[:, c1 + c3:].set(w4.astype(jnp.float32))
    be = jnp.concatenate([jnp.zeros((c1,), jnp.float32),
                          b2b.astype(jnp.float32),
                          b4.astype(jnp.float32)]).reshape(1, ctot)

    kernel = _make_inception_kernel(H, W, Cin, c1, c3red, c3, c4, padw)

    flops = 2 * N * H * W * (Cin * Cc + 9 * Cc * ctot + Cin * ctot)
    bytes_acc = 4 * (N * H * W * (Cin + ctot)
                     + Cin * Cc + Cc + 9 * Cc * ctot + Cin * ctot + ctot)

    return pl.pallas_call(
        kernel,
        out_shape=jax.ShapeDtypeStruct((N, H, W, ctot), jnp.float32),
        grid=(N,),
        in_specs=[
            pl.BlockSpec((1, H, W, Cin), lambda b: (b, 0, 0, 0)),
            pl.BlockSpec((Cin, Cc), lambda b: (0, 0)),
            pl.BlockSpec((1, Cc), lambda b: (0, 0)),
            pl.BlockSpec((3, 3, Cc, ctot), lambda b: (0, 0, 0, 0)),
            pl.BlockSpec((Cin, ctot), lambda b: (0, 0)),
            pl.BlockSpec((1, ctot), lambda b: (0, 0)),
        ],
        out_specs=pl.BlockSpec((1, H, W, ctot), lambda b: (b, 0, 0, 0)),
        scratch_shapes=[
            pltpu.VMEM((H + 2, Wp, Cc), jnp.float32),
            pltpu.VMEM((H + 2, Wp, Cin), jnp.float32),
        ],
        compiler_params=pltpu.CompilerParams(
            dimension_semantics=("parallel",),
            vmem_limit_bytes=_VMEM_LIMIT),
        cost_estimate=pl.CostEstimate(flops=flops, transcendentals=0,
                                      bytes_accessed=bytes_acc),
    )(x_nhwc, wc, bc, w3e, w4e, be)


# ---------------------------------------------------------------------------
# Inception module
# ---------------------------------------------------------------------------
def init_params(key, in_channels, ch1x1, ch3x3red, ch3x3, pool_proj):
    ks = jax.random.split(key, 8)

    def w(k, shape, fan_in):
        return jax.random.normal(k, shape, jnp.float32) / jnp.sqrt(float(fan_in))

    return {
        "w1":  w(ks[0], (in_channels, ch1x1), in_channels),
        "b1":  0.01 * jax.random.normal(ks[1], (ch1x1,), jnp.float32),
        "w2a": w(ks[2], (in_channels, ch3x3red), in_channels),
        "b2a": 0.01 * jax.random.normal(ks[3], (ch3x3red,), jnp.float32),
        "w2b": w(ks[4], (3, 3, ch3x3red, ch3x3), 9 * ch3x3red),
        "b2b": 0.01 * jax.random.normal(ks[5], (ch3x3,), jnp.float32),
        "w4":  w(ks[6], (in_channels, pool_proj), in_channels),
        "b4":  0.01 * jax.random.normal(ks[7], (pool_proj,), jnp.float32),
    }


def inception_forward(x_nchw, params):
    x = jnp.transpose(x_nchw, (0, 2, 3, 1))         # NCHW -> NHWC
    out = inception_fused(x, params)                 # concat'd NHWC output
    return jnp.transpose(out, (0, 3, 1, 2))          # NHWC -> NCHW


# ---------------------------------------------------------------------------
# Pure-JAX reference (for correctness check)
# ---------------------------------------------------------------------------
def ref_forward(x_nchw, params):
    x = jnp.transpose(x_nchw, (0, 2, 3, 1))
    dn = ("NHWC", "HWIO", "NHWC")

    def conv(xx, w, b, pad):
        y = lax.conv_general_dilated(xx, w, (1, 1), pad, dimension_numbers=dn)
        return jax.nn.relu(y + b)

    b1 = conv(x, params["w1"][None, None], params["b1"], "VALID")
    b2 = conv(x, params["w2a"][None, None], params["b2a"], "VALID")
    b2 = conv(b2, params["w2b"], params["b2b"], "SAME")
    mp = lax.reduce_window(x, -jnp.inf, lax.max, (1, 3, 3, 1), (1, 1, 1, 1),
                           ((0, 0), (1, 1), (1, 1), (0, 0)))
    b4 = conv(mp, params["w4"][None, None], params["b4"], "VALID")
    out = jnp.concatenate([b1, b2, b4], axis=-1)
    return jnp.transpose(out, (0, 3, 1, 2))


if __name__ == "__main__":
    key = jax.random.PRNGKey(0)
    kx, kp = jax.random.split(key)

    in_channels, ch1x1, ch3x3red, ch3x3, pool_proj = 8, 8, 8, 16, 8
    x = jax.random.normal(kx, (2, in_channels, 16, 16), jnp.float32)
    params = init_params(kp, in_channels, ch1x1, ch3x3red, ch3x3, pool_proj)

    fwd = jax.jit(inception_forward)
    out = jax.block_until_ready(fwd(x, params))

    assert out.shape == (2, ch1x1 + ch3x3 + pool_proj, 16, 16), out.shape
    ref = ref_forward(x, params)
    np.testing.assert_allclose(np.asarray(out), np.asarray(ref),
                               atol=2e-4, rtol=2e-4)
    print("KERNEL_OK")
</pallas_src>

<mosaic_0001>
module attributes {stable_mosaic.version = 11 : i64} {
  func.func @kernel(%arg0: i32, %arg1: memref<1x16x16x8xf32, #tpu.memory_space<vmem>>, %arg2: memref<8x16xf32, #tpu.memory_space<vmem>>, %arg3: memref<1x16xf32, #tpu.memory_space<vmem>>, %arg4: memref<3x3x16x32xf32, #tpu.memory_space<vmem>>, %arg5: memref<8x32xf32, #tpu.memory_space<vmem>>, %arg6: memref<1x32xf32, #tpu.memory_space<vmem>>, %arg7: memref<1x16x16x32xf32, #tpu.memory_space<vmem>>, %arg8: memref<18x32x16xf32, #tpu.memory_space<vmem>>, %arg9: memref<18x32x8xf32, #tpu.memory_space<vmem>>) attributes {dimension_semantics = [#tpu.dimension_semantics<parallel>], iteration_bounds = array<i64: 2>, scalar_prefetch = 0 : i64, scratch_operands = 2 : i64, tpu.core_type = #tpu.core_type<tc>, window_params = [{transform_indices = @transform_0, window_bounds = array<i64: 1, 16, 16, 8>}, {pipeline_mode = #tpu.pipeline_mode<synchronous>, transform_indices = @transform_1, window_bounds = array<i64: 8, 16>}, {pipeline_mode = #tpu.pipeline_mode<synchronous>, transform_indices = @transform_2, window_bounds = array<i64: 1, 16>}, {pipeline_mode = #tpu.pipeline_mode<synchronous>, transform_indices = @transform_3, window_bounds = array<i64: 3, 3, 16, 32>}, {pipeline_mode = #tpu.pipeline_mode<synchronous>, transform_indices = @transform_4, window_bounds = array<i64: 8, 32>}, {pipeline_mode = #tpu.pipeline_mode<synchronous>, transform_indices = @transform_5, window_bounds = array<i64: 1, 32>}, {transform_indices = @transform_6, window_bounds = array<i64: 1, 16, 16, 32>}]} {
    %c0 = arith.constant 0 : index
    %c0_0 = arith.constant 0 : index
    %c0_1 = arith.constant 0 : index
    %c0_2 = arith.constant 0 : index
    %0 = vector.load %arg1[%c0, %c0_0, %c0_1, %c0_2] : memref<1x16x16x8xf32, #tpu.memory_space<vmem>>, vector<1x16x16x8xf32>
    %1 = vector.shape_cast %0 : vector<1x16x16x8xf32> to vector<16x16x8xf32>
    %2 = vector.shape_cast %1 : vector<16x16x8xf32> to vector<256x8xf32>
    %c0_3 = arith.constant 0 : index
    %c0_4 = arith.constant 0 : index
    %3 = vector.load %arg2[%c0_3, %c0_4] : memref<8x16xf32, #tpu.memory_space<vmem>>, vector<8x16xf32>
    %cst = arith.constant dense<0.000000e+00> : vector<256x16xf32>
    %4 = tpu.matmul %2, %3, %cst {dimension_numbers = #tpu.dot_dimension_numbers<[1], [0], [0], [1], [0, 0, 1, 1], [], []>} : vector<256x8xf32>, vector<8x16xf32>, vector<256x16xf32> -> vector<256x16xf32>
    %c0_5 = arith.constant 0 : index
    %c0_6 = arith.constant 0 : index
    %5 = vector.load %arg3[%c0_5, %c0_6] : memref<1x16xf32, #tpu.memory_space<vmem>>, vector<1x16xf32>
    %6 = vector.broadcast %5 : vector<1x16xf32> to vector<256x16xf32>
    %7 = arith.addf %4, %6 : vector<256x16xf32>
    %cst_7 = arith.constant 0.000000e+00 : f32
    %8 = vector.broadcast %cst_7 : f32 to vector<256x16xf32>
    %9 = arith.maximumf %7, %8 : vector<256x16xf32>
    %cst_8 = arith.constant 0.000000e+00 : f32
    %10 = vector.broadcast %cst_8 : f32 to vector<18x32x16xf32>
    %c0_9 = arith.constant 0 : index
    %c0_10 = arith.constant 0 : index
    %c0_11 = arith.constant 0 : index
    %11 = vector.load %arg8[%c0_9, %c0_10, %c0_11] : memref<18x32x16xf32, #tpu.memory_space<vmem>>, vector<18x32x16xf32>
    tpu.vector_store %arg8[%c0_9, %c0_10, %c0_11], %10 {strides = array<i32>} : memref<18x32x16xf32, #tpu.memory_space<vmem>>, vector<18x32x16xf32>,
    %12 = vector.shape_cast %9 : vector<256x16xf32> to vector<16x16x16xf32>
    %c1 = arith.constant 1 : index
    %c8 = arith.constant 8 : index
    %c0_12 = arith.constant 0 : index
    %13 = vector.load %arg8[%c1, %c8, %c0_12] : memref<18x32x16xf32, #tpu.memory_space<vmem>>, vector<16x16x16xf32>
    tpu.vector_store %arg8[%c1, %c8, %c0_12], %12 {strides = array<i32>} : memref<18x32x16xf32, #tpu.memory_space<vmem>>, vector<16x16x16xf32>,
    %cst_13 = arith.constant 0xFF800000 : f32
    %14 = vector.broadcast %cst_13 : f32 to vector<18x32x8xf32>
    %c0_14 = arith.constant 0 : index
    %c0_15 = arith.constant 0 : index
    %c0_16 = arith.constant 0 : index
    %15 = vector.load %arg9[%c0_14, %c0_15, %c0_16] : memref<18x32x8xf32, #tpu.memory_space<vmem>>, vector<18x32x8xf32>
    tpu.vector_store %arg9[%c0_14, %c0_15, %c0_16], %14 {strides = array<i32>} : memref<18x32x8xf32, #tpu.memory_space<vmem>>, vector<18x32x8xf32>,
    %c0_17 = arith.constant 0 : index
    %c0_18 = arith.constant 0 : index
    %c0_19 = arith.constant 0 : index
    %c0_20 = arith.constant 0 : index
    %16 = vector.load %arg1[%c0_17, %c0_18, %c0_19, %c0_20] : memref<1x16x16x8xf32, #tpu.memory_space<vmem>>, vector<1x16x16x8xf32>
    %17 = vector.shape_cast %16 : vector<1x16x16x8xf32> to vector<16x16x8xf32>
    %c1_21 = arith.constant 1 : index
    %c8_22 = arith.constant 8 : index
    %c0_23 = arith.constant 0 : index
    %18 = vector.load %arg9[%c1_21, %c8_22, %c0_23] : memref<18x32x8xf32, #tpu.memory_space<vmem>>, vector<16x16x8xf32>
    tpu.vector_store %arg9[%c1_21, %c8_22, %c0_23], %17 {strides = array<i32>} : memref<18x32x8xf32, #tpu.memory_space<vmem>>, vector<16x16x8xf32>,
    %cst_24 = arith.constant 0.000000e+00 : f32
    %19 = vector.broadcast %cst_24 : f32 to vector<256x32xf32>
    %c0_25 = arith.constant 0 : index
    %c7 = arith.constant 7 : index
    %c0_26 = arith.constant 0 : index
    %20 = vector.load %arg8[%c0_25, %c7, %c0_26] : memref<18x32x16xf32, #tpu.memory_space<vmem>>, vector<16x16x16xf32>
    %21 = vector.shape_cast %20 : vector<16x16x16xf32> to vector<256x16xf32>
    %c0_27 = arith.constant 0 : index
    %c0_28 = arith.constant 0 : index
    %c0_29 = arith.constant 0 : index
    %c0_30 = arith.constant 0 : index
    %22 = vector.load %arg4[%c0_27, %c0_28, %c0_29, %c0_30] : memref<3x3x16x32xf32, #tpu.memory_space<vmem>>, vector<1x1x16x32xf32>
    %23 = vector.shape_cast %22 : vector<1x1x16x32xf32> to vector<16x32xf32>
    %cst_31 = arith.constant dense<0.000000e+00> : vector<256x32xf32>
    %24 = tpu.matmul %21, %23, %cst_31 {dimension_numbers = #tpu.dot_dimension_numbers<[1], [0], [0], [1], [0, 0, 1, 1], [], []>} : vector<256x16xf32>, vector<16x32xf32>, vector<256x32xf32> -> vector<256x32xf32>
    %25 = arith.addf %19, %24 : vector<256x32xf32>
    %c0_32 = arith.constant 0 : index
    %c8_33 = arith.constant 8 : index
    %c0_34 = arith.constant 0 : index
    %26 = vector.load %arg8[%c0_32, %c8_33, %c0_34] : memref<18x32x16xf32, #tpu.memory_space<vmem>>, vector<16x16x16xf32>
    %27 = vector.shape_cast %26 : vector<16x16x16xf32> to vector<256x16xf32>
    %c0_35 = arith.constant 0 : index
    %c1_36 = arith.constant 1 : index
    %c0_37 = arith.constant 0 : index
    %c0_38 = arith.constant 0 : index
    %28 = vector.load %arg4[%c0_35, %c1_36, %c0_37, %c0_38] : memref<3x3x16x32xf32, #tpu.memory_space<vmem>>, vector<1x1x16x32xf32>
    %29 = vector.shape_cast %28 : vector<1x1x16x32xf32> to vector<16x32xf32>
    %cst_39 = arith.constant dense<0.000000e+00> : vector<256x32xf32>
    %30 = tpu.matmul %27, %29, %cst_39 {dimension_numbers = #tpu.dot_dimension_numbers<[1], [0], [0], [1], [0, 0, 1, 1], [], []>} : vector<256x16xf32>, vector<16x32xf32>, vector<256x32xf32> -> vector<256x32xf32>
    %31 = arith.addf %25, %30 : vector<256x32xf32>
    %c0_40 = arith.constant 0 : index
    %c9 = arith.constant 9 : index
    %c0_41 = arith.constant 0 : index
    %32 = vector.load %arg8[%c0_40, %c9, %c0_41] : memref<18x32x16xf32, #tpu.memory_space<vmem>>, vector<16x16x16xf32>
    %33 = vector.shape_cast %32 : vector<16x16x16xf32> to vector<256x16xf32>
    %c0_42 = arith.constant 0 : index
    %c2 = arith.constant 2 : index
    %c0_43 = arith.constant 0 : index
    %c0_44 = arith.constant 0 : index
    %34 = vector.load %arg4[%c0_42, %c2, %c0_43, %c0_44] : memref<3x3x16x32xf32, #tpu.memory_space<vmem>>, vector<1x1x16x32xf32>
    %35 = vector.shape_cast %34 : vector<1x1x16x32xf32> to vector<16x32xf32>
    %cst_45 = arith.constant dense<0.000000e+00> : vector<256x32xf32>
    %36 = tpu.matmul %33, %35, %cst_45 {dimension_numbers = #tpu.dot_dimension_numbers<[1], [0], [0], [1], [0, 0, 1, 1], [], []>} : vector<256x16xf32>, vector<16x32xf32>, vector<256x32xf32> -> vector<256x32xf32>
    %37 = arith.addf %31, %36 : vector<256x32xf32>
    %c1_46 = arith.constant 1 : index
    %c7_47 = arith.constant 7 : index
    %c0_48 = arith.constant 0 : index
    %38 = vector.load %arg8[%c1_46, %c7_47, %c0_48] : memref<18x32x16xf32, #tpu.memory_space<vmem>>, vector<16x16x16xf32>
    %39 = vector.shape_cast %38 : vector<16x16x16xf32> to vector<256x16xf32>
    %c1_49 = arith.constant 1 : index
    %c0_50 = arith.constant 0 : index
    %c0_51 = arith.constant 0 : index
    %c0_52 = arith.constant 0 : index
    %40 = vector.load %arg4[%c1_49, %c0_50, %c0_51, %c0_52] : memref<3x3x16x32xf32, #tpu.memory_space<vmem>>, vector<1x1x16x32xf32>
    %41 = vector.shape_cast %40 : vector<1x1x16x32xf32> to vector<16x32xf32>
    %cst_53 = arith.constant dense<0.000000e+00> : vector<256x32xf32>
    %42 = tpu.matmul %39, %41, %cst_53 {dimension_numbers = #tpu.dot_dimension_numbers<[1], [0], [0], [1], [0, 0, 1, 1], [], []>} : vector<256x16xf32>, vector<16x32xf32>, vector<256x32xf32> -> vector<256x32xf32>
    %43 = arith.addf %37, %42 : vector<256x32xf32>
    %c1_54 = arith.constant 1 : index
    %c8_55 = arith.constant 8 : index
    %c0_56 = arith.constant 0 : index
    %44 = vector.load %arg8[%c1_54, %c8_55, %c0_56] : memref<18x32x16xf32, #tpu.memory_space<vmem>>, vector<16x16x16xf32>
    %45 = vector.shape_cast %44 : vector<16x16x16xf32> to vector<256x16xf32>
    %c1_57 = arith.constant 1 : index
    %c1_58 = arith.constant 1 : index
    %c0_59 = arith.constant 0 : index
    %c0_60 = arith.constant 0 : index
    %46 = vector.load %arg4[%c1_57, %c1_58, %c0_59, %c0_60] : memref<3x3x16x32xf32, #tpu.memory_space<vmem>>, vector<1x1x16x32xf32>
    %47 = vector.shape_cast %46 : vector<1x1x16x32xf32> to vector<16x32xf32>
    %cst_61 = arith.constant dense<0.000000e+00> : vector<256x32xf32>
    %48 = tpu.matmul %45, %47, %cst_61 {dimension_numbers = #tpu.dot_dimension_numbers<[1], [0], [0], [1], [0, 0, 1, 1], [], []>} : vector<256x16xf32>, vector<16x32xf32>, vector<256x32xf32> -> vector<256x32xf32>
    %49 = arith.addf %43, %48 : vector<256x32xf32>
    %c1_62 = arith.constant 1 : index
    %c9_63 = arith.constant 9 : index
    %c0_64 = arith.constant 0 : index
    %50 = vector.load %arg8[%c1_62, %c9_63, %c0_64] : memref<18x32x16xf32, #tpu.memory_space<vmem>>, vector<16x16x16xf32>
    %51 = vector.shape_cast %50 : vector<16x16x16xf32> to vector<256x16xf32>
    %c1_65 = arith.constant 1 : index
    %c2_66 = arith.constant 2 : index
    %c0_67 = arith.constant 0 : index
    %c0_68 = arith.constant 0 : index
    %52 = vector.load %arg4[%c1_65, %c2_66, %c0_67, %c0_68] : memref<3x3x16x32xf32, #tpu.memory_space<vmem>>, vector<1x1x16x32xf32>
    %53 = vector.shape_cast %52 : vector<1x1x16x32xf32> to vector<16x32xf32>
    %cst_69 = arith.constant dense<0.000000e+00> : vector<256x32xf32>
    %54 = tpu.matmul %51, %53, %cst_69 {dimension_numbers = #tpu.dot_dimension_numbers<[1], [0], [0], [1], [0, 0, 1, 1], [], []>} : vector<256x16xf32>, vector<16x32xf32>, vector<256x32xf32> -> vector<256x32xf32>
    %55 = arith.addf %49, %54 : vector<256x32xf32>
    %c2_70 = arith.constant 2 : index
    %c7_71 = arith.constant 7 : index
    %c0_72 = arith.constant 0 : index
    %56 = vector.load %arg8[%c2_70, %c7_71, %c0_72] : memref<18x32x16xf32, #tpu.memory_space<vmem>>, vector<16x16x16xf32>
    %57 = vector.shape_cast %56 : vector<16x16x16xf32> to vector<256x16xf32>
    %c2_73 = arith.constant 2 : index
    %c0_74 = arith.constant 0 : index
    %c0_75 = arith.constant 0 : index
    %c0_76 = arith.constant 0 : index
    %58 = vector.load %arg4[%c2_73, %c0_74, %c0_75, %c0_76] : memref<3x3x16x32xf32, #tpu.memory_space<vmem>>, vector<1x1x16x32xf32>
    %59 = vector.shape_cast %58 : vector<1x1x16x32xf32> to vector<16x32xf32>
    %cst_77 = arith.constant dense<0.000000e+00> : vector<256x32xf32>
    %60 = tpu.matmul %57, %59, %cst_77 {dimension_numbers = #tpu.dot_dimension_numbers<[1], [0], [0], [1], [0, 0, 1, 1], [], []>} : vector<256x16xf32>, vector<16x32xf32>, vector<256x32xf32> -> vector<256x32xf32>
    %61 = arith.addf %55, %60 : vector<256x32xf32>
    %c2_78 = arith.constant 2 : index
    %c8_79 = arith.constant 8 : index
    %c0_80 = arith.constant 0 : index
    %62 = vector.load %arg8[%c2_78, %c8_79, %c0_80] : memref<18x32x16xf32, #tpu.memory_space<vmem>>, vector<16x16x16xf32>
    %63 = vector.shape_cast %62 : vector<16x16x16xf32> to vector<256x16xf32>
    %c2_81 = arith.constant 2 : index
    %c1_82 = arith.constant 1 : index
    %c0_83 = arith.constant 0 : index
    %c0_84 = arith.constant 0 : index
    %64 = vector.load %arg4[%c2_81, %c1_82, %c0_83, %c0_84] : memref<3x3x16x32xf32, #tpu.memory_space<vmem>>, vector<1x1x16x32xf32>
    %65 = vector.shape_cast %64 : vector<1x1x16x32xf32> to vector<16x32xf32>
    %cst_85 = arith.constant dense<0.000000e+00> : vector<256x32xf32>
    %66 = tpu.matmul %63, %65, %cst_85 {dimension_numbers = #tpu.dot_dimension_numbers<[1], [0], [0], [1], [0, 0, 1, 1], [], []>} : vector<256x16xf32>, vector<16x32xf32>, vector<256x32xf32> -> vector<256x32xf32>
    %67 = arith.addf %61, %66 : vector<256x32xf32>
    %c2_86 = arith.constant 2 : index
    %c9_87 = arith.constant 9 : index
    %c0_88 = arith.constant 0 : index
    %68 = vector.load %arg8[%c2_86, %c9_87, %c0_88] : memref<18x32x16xf32, #tpu.memory_space<vmem>>, vector<16x16x16xf32>
    %69 = vector.shape_cast %68 : vector<16x16x16xf32> to vector<256x16xf32>
    %c2_89 = arith.constant 2 : index
    %c2_90 = arith.constant 2 : index
    %c0_91 = arith.constant 0 : index
    %c0_92 = arith.constant 0 : index
    %70 = vector.load %arg4[%c2_89, %c2_90, %c0_91, %c0_92] : memref<3x3x16x32xf32, #tpu.memory_space<vmem>>, vector<1x1x16x32xf32>
    %71 = vector.shape_cast %70 : vector<1x1x16x32xf32> to vector<16x32xf32>
    %cst_93 = arith.constant dense<0.000000e+00> : vector<256x32xf32>
    %72 = tpu.matmul %69, %71, %cst_93 {dimension_numbers = #tpu.dot_dimension_numbers<[1], [0], [0], [1], [0, 0, 1, 1], [], []>} : vector<256x16xf32>, vector<16x32xf32>, vector<256x32xf32> -> vector<256x32xf32>
    %73 = arith.addf %67, %72 : vector<256x32xf32>
    %c0_94 = arith.constant 0 : index
    %c7_95 = arith.constant 7 : index
    %c0_96 = arith.constant 0 : index
    %74 = vector.load %arg9[%c0_94, %c7_95, %c0_96] : memref<18x32x8xf32, #tpu.memory_space<vmem>>, vector<16x16x8xf32>
    %c0_97 = arith.constant 0 : index
    %c8_98 = arith.constant 8 : index
    %c0_99 = arith.constant 0 : index
    %75 = vector.load %arg9[%c0_97, %c8_98, %c0_99] : memref<18x32x8xf32, #tpu.memory_space<vmem>>, vector<16x16x8xf32>
    %76 = arith.maximumf %74, %75 : vector<16x16x8xf32>
    %c0_100 = arith.constant 0 : index
    %c9_101 = arith.constant 9 : index
    %c0_102 = arith.constant 0 : index
    %77 = vector.load %arg9[%c0_100, %c9_101, %c0_102] : memref<18x32x8xf32, #tpu.memory_space<vmem>>, vector<16x16x8xf32>
    %78 = arith.maximumf %76, %77 : vector<16x16x8xf32>
    %c1_103 = arith.constant 1 : index
    %c7_104 = arith.constant 7 : index
    %c0_105 = arith.constant 0 : index
    %79 = vector.load %arg9[%c1_103, %c7_104, %c0_105] : memref<18x32x8xf32, #tpu.memory_space<vmem>>, vector<16x16x8xf32>
    %80 = arith.maximumf %78, %79 : vector<16x16x8xf32>
    %c1_106 = arith.constant 1 : index
    %c8_107 = arith.constant 8 : index
    %c0_108 = arith.constant 0 : index
    %81 = vector.load %arg9[%c1_106, %c8_107, %c0_108] : memref<18x32x8xf32, #tpu.memory_space<vmem>>, vector<16x16x8xf32>
    %82 = arith.maximumf %80, %81 : vector<16x16x8xf32>
    %c1_109 = arith.constant 1 : index
    %c9_110 = arith.constant 9 : index
    %c0_111 = arith.constant 0 : index
    %83 = vector.load %arg9[%c1_109, %c9_110, %c0_111] : memref<18x32x8xf32, #tpu.memory_space<vmem>>, vector<16x16x8xf32>
    %84 = arith.maximumf %82, %83 : vector<16x16x8xf32>
    %c2_112 = arith.constant 2 : index
    %c7_113 = arith.constant 7 : index
    %c0_114 = arith.constant 0 : index
    %85 = vector.load %arg9[%c2_112, %c7_113, %c0_114] : memref<18x32x8xf32, #tpu.memory_space<vmem>>, vector<16x16x8xf32>
    %86 = arith.maximumf %84, %85 : vector<16x16x8xf32>
    %c2_115 = arith.constant 2 : index
    %c8_116 = arith.constant 8 : index
    %c0_117 = arith.constant 0 : index
    %87 = vector.load %arg9[%c2_115, %c8_116, %c0_117] : memref<18x32x8xf32, #tpu.memory_space<vmem>>, vector<16x16x8xf32>
    %88 = arith.maximumf %86, %87 : vector<16x16x8xf32>
    %c2_118 = arith.constant 2 : index
    %c9_119 = arith.constant 9 : index
    %c0_120 = arith.constant 0 : index
    %89 = vector.load %arg9[%c2_118, %c9_119, %c0_120] : memref<18x32x8xf32, #tpu.memory_space<vmem>>, vector<16x16x8xf32>
    %90 = arith.maximumf %88, %89 : vector<16x16x8xf32>
    %91 = vector.shape_cast %90 : vector<16x16x8xf32> to vector<256x8xf32>
    %c0_121 = arith.constant 0 : index
    %c0_122 = arith.constant 0 : index
    %92 = vector.load %arg5[%c0_121, %c0_122] : memref<8x32xf32, #tpu.memory_space<vmem>>, vector<8x32xf32>
    %cst_123 = arith.constant dense<0.000000e+00> : vector<256x32xf32>
    %93 = tpu.matmul %91, %92, %cst_123 {dimension_numbers = #tpu.dot_dimension_numbers<[1], [0], [0], [1], [0, 0, 1, 1], [], []>} : vector<256x8xf32>, vector<8x32xf32>, vector<256x32xf32> -> vector<256x32xf32>
    %94 = arith.addf %73, %93 : vector<256x32xf32>
    %c0_124 = arith.constant 0 : index
    %c0_125 = arith.constant 0 : index
    %95 = vector.load %arg6[%c0_124, %c0_125] : memref<1x32xf32, #tpu.memory_space<vmem>>, vector<1x32xf32>
    %96 = vector.broadcast %95 : vector<1x32xf32> to vector<256x32xf32>
    %97 = arith.addf %94, %96 : vector<256x32xf32>
    %cst_126 = arith.constant 0.000000e+00 : f32
    %98 = vector.broadcast %cst_126 : f32 to vector<256x32xf32>
    %99 = arith.maximumf %97, %98 : vector<256x32xf32>
    %100 = vector.shape_cast %99 : vector<256x32xf32> to vector<16x16x32xf32>
    %c0_127 = arith.constant 0 : index
    %c0_128 = arith.constant 0 : index
    %c0_129 = arith.constant 0 : index
    %c0_130 = arith.constant 0 : index
    %101 = vector.load %arg7[%c0_127, %c0_128, %c0_129, %c0_130] : memref<1x16x16x32xf32, #tpu.memory_space<vmem>>, vector<1x16x16x32xf32>
    %102 = vector.shape_cast %101 : vector<1x16x16x32xf32> to vector<16x16x32xf32>
    %103 = vector.shape_cast %100 : vector<16x16x32xf32> to vector<1x16x16x32xf32>
    tpu.vector_store %arg7[%c0_127, %c0_128, %c0_129, %c0_130], %103 {strides = array<i32>} : memref<1x16x16x32xf32, #tpu.memory_space<vmem>>, vector<1x16x16x32xf32>,
    return
  }
  func.func @transform_0(%arg0: i32) -> (i32, i32, i32, i32) {
    %c0_i32 = arith.constant 0 : i32
    %c0_i32_0 = arith.constant 0 : i32
    %c0_i32_1 = arith.constant 0 : i32
    %c0_i32_2 = arith.constant 0 : i32
    return %arg0, %c0_i32, %c0_i32_0, %c0_i32_1 : i32, i32, i32, i32
  }
  func.func @transform_1(%arg0: i32) -> (i32, i32) {
    %c0_i32 = arith.constant 0 : i32
    %c0_i32_0 = arith.constant 0 : i32
    %c0_i32_1 = arith.constant 0 : i32
    return %c0_i32, %c0_i32_0 : i32, i32
  }
  func.func @transform_2(%arg0: i32) -> (i32, i32) {
    %c0_i32 = arith.constant 0 : i32
    %c0_i32_0 = arith.constant 0 : i32
    %c0_i32_1 = arith.constant 0 : i32
    return %c0_i32, %c0_i32_0 : i32, i32
  }
  func.func @transform_3(%arg0: i32) -> (i32, i32, i32, i32) {
    %c0_i32 = arith.constant 0 : i32
    %c0_i32_0 = arith.constant 0 : i32
    %c0_i32_1 = arith.constant 0 : i32
    %c0_i32_2 = arith.constant 0 : i32
    %c0_i32_3 = arith.constant 0 : i32
    return %c0_i32, %c0_i32_0, %c0_i32_1, %c0_i32_2 : i32, i32, i32, i32
  }
  func.func @transform_4(%arg0: i32) -> (i32, i32) {
    %c0_i32 = arith.constant 0 : i32
    %c0_i32_0 = arith.constant 0 : i32
    %c0_i32_1 = arith.constant 0 : i32
    return %c0_i32, %c0_i32_0 : i32, i32
  }
  func.func @transform_5(%arg0: i32) -> (i32, i32) {
    %c0_i32 = arith.constant 0 : i32
    %c0_i32_0 = arith.constant 0 : i32
    %c0_i32_1 = arith.constant 0 : i32
    return %c0_i32, %c0_i32_0 : i32, i32
  }
  func.func @transform_6(%arg0: i32) -> (i32, i32, i32, i32) {
    %c0_i32 = arith.constant 0 : i32
    %c0_i32_0 = arith.constant 0 : i32
    %c0_i32_1 = arith.constant 0 : i32
    %c0_i32_2 = arith.constant 0 : i32
    return %arg0, %c0_i32, %c0_i32_0, %c0_i32_1 : i32, i32, i32, i32
  }
}

</mosaic_0001>

<llo_original>
// kernel: inception_forward.1
$region0: #{inception_forward.1}
  #allocation0 [shape = 'u32[]', space=smem, size = 0x4, offset = 0x4, fixed_abs, tag = 'smem constant byte address 0x4 - core index']
  #allocation1 [shape = 'u32[144,128]{1,0:T(1,128)}', space=vmem, size = 0x12000, scoped, tag = 'internal scratch']
  #allocation2 [shape = 'f32[18,32,16]{2,1,0:T(8,128)}', space=vmem, size = 0x48000, scoped, tag = 'scratch operand']
  #allocation3 [shape = 'f32[18,32,8]{2,1,0:T(8,128)}', space=vmem, size = 0x48000, scoped, tag = 'scratch operand']
  %s0 = inlined_call_operand.vmem [shape: f32[2,16,16,8], index: 0, kind: input, shape index: {}]
  %s1 = inlined_call_operand.vmem [shape: f32[8,16], index: 1, kind: input, shape index: {}]
  %s2 = inlined_call_operand.vmem [shape: f32[1,16], index: 2, kind: input, shape index: {}]
  %s3 = inlined_call_operand.vmem [shape: f32[3,3,16,32], index: 3, kind: input, shape index: {}]
  %s4 = inlined_call_operand.vmem [shape: f32[8,32], index: 4, kind: input, shape index: {}]
  %s5 = inlined_call_operand.vmem [shape: f32[1,32], index: 5, kind: input, shape index: {}]
  %s6 = inlined_call_operand.hbm [shape: f32[2,16,16,32], index: 6, kind: output, shape index: {}]
  %s7 = sld [smem:[#allocation0]]
  $region57: #{inception_forward.1} parent=0
    _
  %s9 = ssub.s32 1, %s7
  %s10 = scalar_select 0, %s9, %s7
  $region1: #{inception_forward.1} parent=0
    #allocation4 [shape = 'u8[262144]{0}', space=vmem, size = 0x40000, scoped, tag = 'output window, operand 0']
    #allocation5 [shape = 's32[2]{0}', space=sflag, size = 0x8, scoped, tag = 'scoped memory for inception_forward.1']
    %11 = vsyncpa [#allocation5], 0
    %s12 = scalar_lea.sflag [#allocation5], 1
    %13 = vsyncpa %s12, 0
    loop: start=0, step=1, limit=4
    $region2: #{inception_forward.1} parent=1 // loop_pre_header
      _
    $region3: #{inception_forward.1} parent=1 // loop_header
      %s15 = sphi 0, %s19
      %p16 = scmp.ge.s32.totalorder %s15, 4
      %s25 = sphi 0, %s27
      %s28 = sphi 0, %s25
      %s29 = sphi 0, %s28
      %s45 = sphi 0, %s29
      %s49 = sphi 0, %s49
      %s51 = sphi 0, %s49
      %s52 = sphi 0, %s51
      %s66 = sphi 0, %s52
      %s70 = sphi 0, %s70
      %s72 = sphi 0, %s70
      %s73 = sphi 0, %s72
      %s87 = sphi 0, %s73
      %s91 = sphi 0, %s91
      %s93 = sphi 0, %s91
      %s94 = sphi 0, %s93
      %s108 = sphi 0, %s94
      %s112 = sphi 0, %s112
      %s114 = sphi 0, %s112
      %s115 = sphi 0, %s114
      %s129 = sphi 0, %s115
      %s133 = sphi 0, %s133
      %s135 = sphi 0, %s133
      %s136 = sphi 0, %s135
      %s150 = sphi 0, %s136
      %s156 = sphi 0, %s158
      %s159 = sphi 0, %s156
      %s160 = sphi 0, %s159
      %s176 = sphi 0, %s160
    $region4: #{inception_forward.1} parent=1 // loop_header_branch
      %18 = sbr.rel (%p16) target = $region8
    $region5: #{inception_forward.1} parent=1 // loop_body
      %s20 = ssub.s32 %s15, 1
      %s21 = ssub.s32 %s15, 2
      %s22 = sadd.s32 %s15, 1
      %s23 = ssub.s32 %s15, %s22
      %p24 = scmp.eq.s32.totalorder %s23, 0
      %s26 = sadd.s32 %s25, 1
      %s27 = scalar_select %p24, %s25, %s26
      %p30 = pneg %p24
      %p31 = scmp.eq.s32.totalorder %s15, 1
      %p32 = por %p30, %p31
      %p33 = scmp.ne.s32.totalorder %s25, %s28
      %p34 = scmp.eq.s32.totalorder %s15, 0
      %p35 = por %p33, %p34
      %p36 = scmp.ne.s32.totalorder %s25, %s28
      %p37 = scmp.eq.s32.totalorder %s20, 1
      %p38 = por %p36, %p37
      %p39 = scmp.ne.s32.totalorder %s28, %s29
      %p40 = scmp.eq.s32.totalorder %s20, 0
      %p41 = por %p39, %p40
      %p42 = scmp.ne.s32.totalorder %s28, %s29
      %p43 = scmp.eq.s32.totalorder %s21, 1
      %p44 = por %p42, %p43
      %p46 = scmp.ne.s32.totalorder %s29, %s45
      %p47 = scmp.eq.s32.totalorder %s21, 0
      %p48 = por %p46, %p47
      %s50 = sadd.s32 %s49, 1
      %p53 = scmp.eq.s32.totalorder %s15, 1
      %p54 = scmp.ne.s32.totalorder %s49, %s51
      %p55 = scmp.eq.s32.totalorder %s15, 0
      %p56 = por %p54, %p55
      %p57 = scmp.ne.s32.totalorder %s49, %s51
      %p58 = scmp.eq.s32.totalorder %s20, 1
      %p59 = por %p57, %p58
      %p60 = scmp.ne.s32.totalorder %s51, %s52
      %p61 = scmp.eq.s32.totalorder %s20, 0
      %p62 = por %p60, %p61
      %p63 = scmp.ne.s32.totalorder %s51, %s52
      %p64 = scmp.eq.s32.totalorder %s21, 1
      %p65 = por %p63, %p64
      %p67 = scmp.ne.s32.totalorder %s52, %s66
      %p68 = scmp.eq.s32.totalorder %s21, 0
      %p69 = por %p67, %p68
      %s71 = sadd.s32 %s70, 1
      %p74 = scmp.eq.s32.totalorder %s15, 1
      %p75 = scmp.ne.s32.totalorder %s70, %s72
      %p76 = scmp.eq.s32.totalorder %s15, 0
      %p77 = por %p75, %p76
      %p78 = scmp.ne.s32.totalorder %s70, %s72
      %p79 = scmp.eq.s32.totalorder %s20, 1
      %p80 = por %p78, %p79
      %p81 = scmp.ne.s32.totalorder %s72, %s73
      %p82 = scmp.eq.s32.totalorder %s20, 0
      %p83 = por %p81, %p82
      %p84 = scmp.ne.s32.totalorder %s72, %s73
      %p85 = scmp.eq.s32.totalorder %s21, 1
      %p86 = por %p84, %p85
      %p88 = scmp.ne.s32.totalorder %s73, %s87
      %p89 = scmp.eq.s32.totalorder %s21, 0
      %p90 = por %p88, %p89
      %s92 = sadd.s32 %s91, 1
      %p95 = scmp.eq.s32.totalorder %s15, 1
      %p96 = scmp.ne.s32.totalorder %s91, %s93
      %p97 = scmp.eq.s32.totalorder %s15, 0
      %p98 = por %p96, %p97
      %p99 = scmp.ne.s32.totalorder %s91, %s93
      %p100 = scmp.eq.s32.totalorder %s20, 1
      %p101 = por %p99, %p100
      %p102 = scmp.ne.s32.totalorder %s93, %s94
      %p103 = scmp.eq.s32.totalorder %s20, 0
      %p104 = por %p102, %p103
      %p105 = scmp.ne.s32.totalorder %s93, %s94
      %p106 = scmp.eq.s32.totalorder %s21, 1
      %p107 = por %p105, %p106
      %p109 = scmp.ne.s32.totalorder %s94, %s108
      %p110 = scmp.eq.s32.totalorder %s21, 0
      %p111 = por %p109, %p110
      %s113 = sadd.s32 %s112, 1
      %p116 = scmp.eq.s32.totalorder %s15, 1
      %p117 = scmp.ne.s32.totalorder %s112, %s114
      %p118 = scmp.eq.s32.totalorder %s15, 0
      %p119 = por %p117, %p118
      %p120 = scmp.ne.s32.totalorder %s112, %s114
      %p121 = scmp.eq.s32.totalorder %s20, 1
      %p122 = por %p120, %p121
      %p123 = scmp.ne.s32.totalorder %s114, %s115
      %p124 = scmp.eq.s32.totalorder %s20, 0
      %p125 = por %p123, %p124
      %p126 = scmp.ne.s32.totalorder %s114, %s115
      %p127 = scmp.eq.s32.totalorder %s21, 1
      %p128 = por %p126, %p127
      %p130 = scmp.ne.s32.totalorder %s115, %s129
      %p131 = scmp.eq.s32.totalorder %s21, 0
      %p132 = por %p130, %p131
      %s134 = sadd.s32 %s133, 1
      %p137 = scmp.eq.s32.totalorder %s15, 1
      %p138 = scmp.ne.s32.totalorder %s133, %s135
      %p139 = scmp.eq.s32.totalorder %s15, 0
      %p140 = por %p138, %p139
      %p141 = scmp.ne.s32.totalorder %s133, %s135
      %p142 = scmp.eq.s32.totalorder %s20, 1
      %p143 = por %p141, %p142
      %p144 = scmp.ne.s32.totalorder %s135, %s136
      %p145 = scmp.eq.s32.totalorder %s20, 0
      %p146 = por %p144, %p145
      %p147 = scmp.ne.s32.totalorder %s135, %s136
      %p148 = scmp.eq.s32.totalorder %s21, 1
      %p149 = por %p147, %p148
      %p151 = scmp.ne.s32.totalorder %s136, %s150
      %p152 = scmp.eq.s32.totalorder %s21, 0
      %p153 = por %p151, %p152
      %s154 = ssub.s32 %s15, %s22
      %p155 = scmp.eq.s32.totalorder %s154, 0
      %s157 = sadd.s32 %s156, 1
      %s158 = scalar_select %p155, %s156, %s157
      %p161 = pneg %p155
      %p162 = scmp.eq.s32.totalorder %s15, 1
      %p163 = por %p161, %p162
      %p164 = scmp.ne.s32.totalorder %s156, %s159
      %p165 = scmp.eq.s32.totalorder %s15, 0
      %p166 = por %p164, %p165
      %p167 = scmp.ne.s32.totalorder %s156, %s159
      %p168 = scmp.eq.s32.totalorder %s20, 1
      %p169 = por %p167, %p168
      %p170 = scmp.ne.s32.totalorder %s159, %s160
      %p171 = scmp.eq.s32.totalorder %s20, 0
      %p172 = por %p170, %p171
      %p173 = scmp.ne.s32.totalorder %s159, %s160
      %p174 = scmp.eq.s32.totalorder %s21, 1
      %p175 = por %p173, %p174
      %p177 = scmp.ne.s32.totalorder %s160, %s176
      %p178 = scmp.eq.s32.totalorder %s21, 0
      %p179 = por %p177, %p178
      %p180 = scmp.le.s32.totalorder 1, %s15
      %p181 = scmp.lt.s32.totalorder %s15, 3
      %p182 = pnand %p180, %p181
      %p183 = pneg %p182
      // Predicated region
      $region9: #{inception_forward.1} parent=5 // pred_check
        _
      $region10: #{inception_forward.1} parent=5 // pred_check_branch
        %185 = sbr.rel (%p182) target = $region12
      $region11: #{inception_forward.1} parent=5 // pred_region
        %s186 = ssub.s32 %s15, 1
        // Predicated region
        $region13: #{inception_forward.1} parent=11 // pred_check
          %p187 = pneg %p62
        $region14: #{inception_forward.1} parent=11 // pred_check_branch
          %189 = sbr.rel (%p187) target = $region16
        $region15: #{inception_forward.1} parent=11 // pred_region
          _
        $region16: #{inception_forward.1} parent=11 // pred_fallthru
          _
        // Predicated region
        $region17: #{inception_forward.1} parent=11 // pred_check
          %p190 = pneg %p83
        $region18: #{inception_forward.1} parent=11 // pred_check_branch
          %192 = sbr.rel (%p190) target = $region20
        $region19: #{inception_forward.1} parent=11 // pred_region
          _
        $region20: #{inception_forward.1} parent=11 // pred_fallthru
          _
        // Predicated region
        $region21: #{inception_forward.1} parent=11 // pred_check
          %p193 = pneg %p104
        $region22: #{inception_forward.1} parent=11 // pred_check_branch
          %195 = sbr.rel (%p193) target = $region24
        $region23: #{inception_forward.1} parent=11 // pred_region
          _
        $region24: #{inception_forward.1} parent=11 // pred_fallthru
          _
        // Predicated region
        $region25: #{inception_forward.1} parent=11 // pred_check
          %p196 = pneg %p125
        $region26: #{inception_forward.1} parent=11 // pred_check_branch
          %198 = sbr.rel (%p196) target = $region28
        $region27: #{inception_forward.1} parent=11 // pred_region
          _
        $region28: #{inception_forward.1} parent=11 // pred_fallthru
          _
        // Predicated region
        $region29: #{inception_forward.1} parent=11 // pred_check
          %p199 = pneg %p146
        $region30: #{inception_forward.1} parent=11 // pred_check_branch
          %201 = sbr.rel (%p199) target = $region32
        $region31: #{inception_forward.1} parent=11 // pred_region
          _
        $region32: #{inception_forward.1} parent=11 // pred_fallthru
          _
      $region12: #{inception_forward.1} parent=5 // pred_fallthru
        _
      %p202 = scmp.lt.s32.totalorder %s15, 2
      // Predicated region
      $region33: #{inception_forward.1} parent=5 // pred_check
        %p203 = pneg %p202
      $region34: #{inception_forward.1} parent=5 // pred_check_branch
        %205 = sbr.rel (%p203) target = $region36
      $region35: #{inception_forward.1} parent=5 // pred_region
        // Predicated region
        $region37: #{inception_forward.1} parent=35 // pred_check
          %p206 = pneg %p35
        $region38: #{inception_forward.1} parent=35 // pred_check_branch
          %208 = sbr.rel (%p206) target = $region40
        $region39: #{inception_forward.1} parent=35 // pred_region
          %p209 = scmp.lt.s32.totalorder %s15, 1
          %s210 = scalar_select %p209, %s15, 1
          %s211 = smul.addr %s210, 32
          %s212 = smul.addr %s211, 8
          %s213 = scalar_lea.vmem %s0, %s212
        $region40: #{inception_forward.1} parent=35 // pred_fallthru
          _
      $region36: #{inception_forward.1} parent=5 // pred_fallthru
        _
      %p214 = scmp.le.s32.totalorder 1, %s15
      %p215 = scmp.lt.s32.totalorder %s15, 3
      %p216 = pnand %p214, %p215
      %p217 = pneg %p216
      // Predicated region
      $region41: #{inception_forward.1} parent=5 // pred_check
        _
      $region42: #{inception_forward.1} parent=5 // pred_check_branch
        %219 = sbr.rel (%p216) target = $region44
      $region43: #{inception_forward.1} parent=5 // pred_region
        %s220 = ssub.s32 %s15, 1
        %p221 = scmp.lt.s32.totalorder %s20, 1
        %s222 = scalar_select %p221, %s20, 1
        %s223 = smul.addr %s222, 32
        %s224 = smul.addr %s223, 8
        %s225 = scalar_lea.vmem %s0, %s224
        %p226 = pneg %p41
        %p227 = pneg %p38
        %p228 = pneg %p62
        %p229 = pneg %p59
        %p230 = pneg %p83
        %p231 = pneg %p80
        %p232 = pneg %p104
        %p233 = pneg %p101
        %p234 = pneg %p125
        %p235 = pneg %p122
        %p236 = pneg %p146
        %p237 = pneg %p143
        %p238 = pneg %p172
        %p239 = pneg %p169
        %s240 = sand.u32 %s159, 1
        %s241 = scalar_lea.sflag [#allocation5], %s240
        %s242 = sand.u32 %s159, 1
        %s243 = smul.addr %s242, 256
        %s244 = scalar_lea.vmem [#allocation4], %s243
        %p245 = scmp.lt.s32.totalorder %s20, 1
        %s246 = scalar_select %p245, %s20, 1
        %s247 = smul.addr %s246, 32
        %s248 = smul.addr %s247, 8
        %s249 = scalar_lea.vmem %s0, %s248
        %v250 = vld [vmem:[%s249] sm:$0xff]
        %v251 = vld [vmem:[%s249 + $0x8] sm:$0xff]
        %v252 = vld [vmem:[%s249 + $0x10] sm:$0xff]
        %v253 = vld [vmem:[%s249 + $0x18] sm:$0xff]
        %v254 = vld [vmem:[%s249 + $0x20] sm:$0xff]
        %v255 = vld [vmem:[%s249 + $0x28] sm:$0xff]
        %v256 = vld [vmem:[%s249 + $0x30] sm:$0xff]
        %v257 = vld [vmem:[%s249 + $0x38] sm:$0xff]
        %v258 = vld [vmem:[%s249 + $0x40] sm:$0xff]
        %v259 = vld [vmem:[%s249 + $0x48] sm:$0xff]
        %v260 = vld [vmem:[%s249 + $0x50] sm:$0xff]
        %v261 = vld [vmem:[%s249 + $0x58] sm:$0xff]
        %v262 = vld [vmem:[%s249 + $0x60] sm:$0xff]
        %v263 = vld [vmem:[%s249 + $0x68] sm:$0xff]
        %v264 = vld [vmem:[%s249 + $0x70] sm:$0xff]
        %v265 = vld [vmem:[%s249 + $0x78] sm:$0xff]
        %v266 = vld [vmem:[%s249 + $0x80] sm:$0xff]
        %v267 = vld [vmem:[%s249 + $0x88] sm:$0xff]
        %v268 = vld [vmem:[%s249 + $0x90] sm:$0xff]
        %v269 = vld [vmem:[%s249 + $0x98] sm:$0xff]
        %v270 = vld [vmem:[%s249 + $0xa0] sm:$0xff]
        %v271 = vld [vmem:[%s249 + $0xa8] sm:$0xff]
        %v272 = vld [vmem:[%s249 + $0xb0] sm:$0xff]
        %v273 = vld [vmem:[%s249 + $0xb8] sm:$0xff]
        %v274 = vld [vmem:[%s249 + $0xc0] sm:$0xff]
        %v275 = vld [vmem:[%s249 + $0xc8] sm:$0xff]
        %v276 = vld [vmem:[%s249 + $0xd0] sm:$0xff]
        %v277 = vld [vmem:[%s249 + $0xd8] sm:$0xff]
        %v278 = vld [vmem:[%s249 + $0xe0] sm:$0xff]
        %v279 = vld [vmem:[%s249 + $0xe8] sm:$0xff]
        %v280 = vld [vmem:[%s249 + $0xf0] sm:$0xff]
        %v281 = vld [vmem:[%s249 + $0xf8] sm:$0xff]
        %v282 = vld [vmem:[%s1] sm:$0xff]
        %v283 = vld [vmem:[%s2] sm:$0x1]
        %v285 = vlaneseq
        %v286 = vshrl.u32 %v285, 7
        %v287 = vsub.s32 0, %v286
        %v288 = vrot.slane %v283, %v287
        %vm290 = vcmask 64512
        %v292 = vsel %vm290, %v250, 0
        %v295 = vsel %vm290, %v251, 0
        %v298 = vsel %vm290, %v252, 0
        %v301 = vsel %vm290, %v253, 0
        %v304 = vsel %vm290, %v254, 0
        %v307 = vsel %vm290, %v255, 0
        %v310 = vsel %vm290, %v256, 0
        %v313 = vsel %vm290, %v257, 0
        %v316 = vsel %vm290, %v258, 0
        %v319 = vsel %vm290, %v259, 0
        %v322 = vsel %vm290, %v260, 0
        %v325 = vsel %vm290, %v261, 0
        %v328 = vsel %vm290, %v262, 0
        %v331 = vsel %vm290, %v263, 0
        %v334 = vsel %vm290, %v264, 0
        %v337 = vsel %vm290, %v265, 0
        %v340 = vsel %vm290, %v266, 0
        %v343 = vsel %vm290, %v267, 0
        %v346 = vsel %vm290, %v268, 0
        %v349 = vsel %vm290, %v269, 0
        %v352 = vsel %vm290, %v270, 0
        %v355 = vsel %vm290, %v271, 0
        %v358 = vsel %vm290, %v272, 0
        %v361 = vsel %vm290, %v273, 0
        %v364 = vsel %vm290, %v274, 0
        %v367 = vsel %vm290, %v275, 0
        %v370 = vsel %vm290, %v276, 0
        %v373 = vsel %vm290, %v277, 0
        %v376 = vsel %vm290, %v278, 0
        %v379 = vsel %vm290, %v279, 0
        %v382 = vsel %vm290, %v280, 0
        %v385 = vsel %vm290, %v281, 0
        %387 = vmatprep.subr.mxu0 0.0
        %388 = vmatpush1.msra.mxu0 %v282
        %389 = vmatprep.subr.mxu0 0.0
        %390 = vmatpush1.msra.mxu0 0.0
        %391 = vmatprep.subr.mxu0 0.0
        %392 = vmatpush1.msra.mxu0 0.0
        %393 = vmatprep.subr.mxu0 0.0
        %394 = vmatpush1.msra.mxu0 0.0
        %395 = vmatprep.subr.mxu0 0.0
        %396 = vmatpush1.msra.mxu0 0.0
        %397 = vmatprep.subr.mxu0 0.0
        %398 = vmatpush1.msra.mxu0 0.0
        %399 = vmatprep.subr.mxu0 0.0
        %400 = vmatpush1.msra.mxu0 0.0
        %401 = vmatprep.subr.mxu0 0.0
        %402 = vmatpush1.msra.mxu0 0.0
        %403 = vmatprep.subr.mxu0 0.0
        %404 = vmatpush1.msra.mxu0 0.0
        %405 = vmatprep.subr.mxu0 0.0
        %406 = vmatpush1.msra.mxu0 0.0
        %407 = vmatprep.subr.mxu0 0.0
        %408 = vmatpush1.msra.mxu0 0.0
        %409 = vmatprep.subr.mxu0 0.0
        %410 = vmatpush1.msra.mxu0 0.0
        %411 = vmatprep.subr.mxu0 0.0
        %412 = vmatpush1.msra.mxu0 0.0
        %413 = vmatprep.subr.mxu0 0.0
        %414 = vmatpush1.msra.mxu0 0.0
        %415 = vmatprep.subr.mxu0 0.0
        %416 = vmatpush1.msra.mxu0 0.0
        %417 = vmatprep.subr.mxu0 0.0
        %418 = vmatpush1.msra.mxu0 0.0
        %419 = vmatprep.subr.mxu0 0.0
        %420 = vmatpush1.msra.mxu0 0.0
        %421 = vmatprep.subr.mxu0 0.0
        %422 = vmatpush1.msra.mxu0 0.0
        %423 = vmatprep.subr.mxu0 0.0
        %424 = vmatpush1.msra.mxu0 0.0
        %425 = vmatprep.subr.mxu0 0.0
        %426 = vmatpush1.msra.mxu0 0.0
        %427 = vmatprep.subr.mxu0 0.0
        %428 = vmatpush1.msra.mxu0 0.0
        %429 = vmatprep.subr.mxu0 0.0
        %430 = vmatpush1.msra.mxu0 0.0
        %431 = vmatprep.subr.mxu0 0.0
        %432 = vmatpush1.msra.mxu0 0.0
        %433 = vmatprep.subr.mxu0 0.0
        %434 = vmatpush1.msra.mxu0 0.0
        %435 = vmatprep.subr.mxu0 0.0
        %436 = vmatpush1.msra.mxu0 0.0
        %437 = vmatprep.subr.mxu0 0.0
        %438 = vmatpush1.msra.mxu0 0.0
        %439 = vmatprep.subr.mxu0 0.0
        %440 = vmatpush1.msra.mxu0 0.0
        %441 = vmatprep.subr.mxu0 0.0
        %442 = vmatpush1.msra.mxu0 0.0
        %443 = vmatprep.subr.mxu0 0.0
        %444 = vmatpush1.msra.mxu0 0.0
        %445 = vmatprep.subr.mxu0 0.0
        %446 = vmatpush1.msra.mxu0 0.0
        %447 = vmatprep.subr.mxu0 0.0
        %448 = vmatpush1.msra.mxu0 0.0
        %449 = vmatprep.subr.mxu0 0.0
        %450 = vmatpush1.msra.mxu0 0.0
        %451 = vmatprep.mubr.f32.mxu0 0.0
        %452 = vmatmul.mubr.f32.gmra.mrb[0].mxu0 %v292
        %v453 = vpop.f32.mrb[0].mxu0
        %v454 = vadd.f32 %v288, %v453
        %v455 = vpop.f32.mrb[0].mxu0
        %456 = vmatprep.mubr.f32.mxu0 0.0
        %457 = vmatmul.mubr.f32.gmra.mrb[0].mxu0 %v295
        %v458 = vpop.f32.mrb[0].mxu0
        %v459 = vadd.f32 %v288, %v458
        %v460 = vpop.f32.mrb[0].mxu0
        %461 = vmatprep.mubr.f32.mxu0 0.0
        %462 = vmatmul.mubr.f32.gmra.mrb[0].mxu0 %v298
        %v463 = vpop.f32.mrb[0].mxu0
        %v464 = vadd.f32 %v288, %v463
        %v465 = vpop.f32.mrb[0].mxu0
        %466 = vmatprep.mubr.f32.mxu0 0.0
        %467 = vmatmul.mubr.f32.gmra.mrb[0].mxu0 %v301
        %v468 = vpop.f32.mrb[0].mxu0
        %v469 = vadd.f32 %v288, %v468
        %v470 = vpop.f32.mrb[0].mxu0
        %471 = vmatprep.mubr.f32.mxu0 0.0
        %472 = vmatmul.mubr.f32.gmra.mrb[0].mxu0 %v304
        %v473 = vpop.f32.mrb[0].mxu0
        %v474 = vadd.f32 %v288, %v473
        %v475 = vpop.f32.mrb[0].mxu0
        %476 = vmatprep.mubr.f32.mxu0 0.0
        %477 = vmatmul.mubr.f32.gmra.mrb[0].mxu0 %v307
        %v478 = vpop.f32.mrb[0].mxu0
        %v479 = vadd.f32 %v288, %v478
        %v480 = vpop.f32.mrb[0].mxu0
        %481 = vmatprep.mubr.f32.mxu0 0.0
        %482 = vmatmul.mubr.f32.gmra.mrb[0].mxu0 %v310
        %v483 = vpop.f32.mrb[0].mxu0
        %v484 = vadd.f32 %v288, %v483
        %v485 = vpop.f32.mrb[0].mxu0
        %486 = vmatprep.mubr.f32.mxu0 0.0
        %487 = vmatmul.mubr.f32.gmra.mrb[0].mxu0 %v313
        %v488 = vpop.f32.mrb[0].mxu0
        %v489 = vadd.f32 %v288, %v488
        %v490 = vpop.f32.mrb[0].mxu0
        %491 = vmatprep.mubr.f32.mxu0 0.0
        %492 = vmatmul.mubr.f32.gmra.mrb[0].mxu0 %v316
        %v493 = vpop.f32.mrb[0].mxu0
        %v494 = vadd.f32 %v288, %v493
        %v495 = vpop.f32.mrb[0].mxu0
        %496 = vmatprep.mubr.f32.mxu0 0.0
        %497 = vmatmul.mubr.f32.gmra.mrb[0].mxu0 %v319
        %v498 = vpop.f32.mrb[0].mxu0
        %v499 = vadd.f32 %v288, %v498
        %v500 = vpop.f32.mrb[0].mxu0
        %501 = vmatprep.mubr.f32.mxu0 0.0
        %502 = vmatmul.mubr.f32.gmra.mrb[0].mxu0 %v322
        %v503 = vpop.f32.mrb[0].mxu0
        %v504 = vadd.f32 %v288, %v503
        %v505 = vpop.f32.mrb[0].mxu0
        %506 = vmatprep.mubr.f32.mxu0 0.0
        %507 = vmatmul.mubr.f32.gmra.mrb[0].mxu0 %v325
        %v508 = vpop.f32.mrb[0].mxu0
        %v509 = vadd.f32 %v288, %v508
        %v510 = vpop.f32.mrb[0].mxu0
        %511 = vmatprep.mubr.f32.mxu0 0.0
        %512 = vmatmul.mubr.f32.gmra.mrb[0].mxu0 %v328
        %v513 = vpop.f32.mrb[0].mxu0
        %v514 = vadd.f32 %v288, %v513
        %v515 = vpop.f32.mrb[0].mxu0
        %516 = vmatprep.mubr.f32.mxu0 0.0
        %517 = vmatmul.mubr.f32.gmra.mrb[0].mxu0 %v331
        %v518 = vpop.f32.mrb[0].mxu0
        %v519 = vadd.f32 %v288, %v518
        %v520 = vpop.f32.mrb[0].mxu0
        %521 = vmatprep.mubr.f32.mxu0 0.0
        %522 = vmatmul.mubr.f32.gmra.mrb[0].mxu0 %v334
        %v523 = vpop.f32.mrb[0].mxu0
        %v524 = vadd.f32 %v288, %v523
        %v525 = vpop.f32.mrb[0].mxu0
        %526 = vmatprep.mubr.f32.mxu0 0.0
        %527 = vmatmul.mubr.f32.gmra.mrb[0].mxu0 %v337
        %v528 = vpop.f32.mrb[0].mxu0
        %v529 = vadd.f32 %v288, %v528
        %v530 = vpop.f32.mrb[0].mxu0
        %531 = vmatprep.mubr.f32.mxu0 0.0
        %532 = vmatmul.mubr.f32.gmra.mrb[0].mxu0 %v340
        %v533 = vpop.f32.mrb[0].mxu0
        %v534 = vadd.f32 %v288, %v533
        %v535 = vpop.f32.mrb[0].mxu0
        %536 = vmatprep.mubr.f32.mxu0 0.0
        %537 = vmatmul.mubr.f32.gmra.mrb[0].mxu0 %v343
        %v538 = vpop.f32.mrb[0].mxu0
        %v539 = vadd.f32 %v288, %v538
        %v540 = vpop.f32.mrb[0].mxu0
        %541 = vmatprep.mubr.f32.mxu0 0.0
        %542 = vmatmul.mubr.f32.gmra.mrb[0].mxu0 %v346
        %v543 = vpop.f32.mrb[0].mxu0
        %v544 = vadd.f32 %v288, %v543
        %v545 = vpop.f32.mrb[0].mxu0
        %546 = vmatprep.mubr.f32.mxu0 0.0
        %547 = vmatmul.mubr.f32.gmra.mrb[0].mxu0 %v349
        %v548 = vpop.f32.mrb[0].mxu0
        %v549 = vadd.f32 %v288, %v548
        %v550 = vpop.f32.mrb[0].mxu0
        %551 = vmatprep.mubr.f32.mxu0 0.0
        %552 = vmatmul.mubr.f32.gmra.mrb[0].mxu0 %v352
        %v553 = vpop.f32.mrb[0].mxu0
        %v554 = vadd.f32 %v288, %v553
        %v555 = vpop.f32.mrb[0].mxu0
        %556 = vmatprep.mubr.f32.mxu0 0.0
        %557 = vmatmul.mubr.f32.gmra.mrb[0].mxu0 %v355
        %v558 = vpop.f32.mrb[0].mxu0
        %v559 = vadd.f32 %v288, %v558
        %v560 = vpop.f32.mrb[0].mxu0
        %561 = vmatprep.mubr.f32.mxu0 0.0
        %562 = vmatmul.mubr.f32.gmra.mrb[0].mxu0 %v358
        %v563 = vpop.f32.mrb[0].mxu0
        %v564 = vadd.f32 %v288, %v563
        %v565 = vpop.f32.mrb[0].mxu0
        %566 = vmatprep.mubr.f32.mxu0 0.0
        %567 = vmatmul.mubr.f32.gmra.mrb[0].mxu0 %v361
        %v568 = vpop.f32.mrb[0].mxu0
        %v569 = vadd.f32 %v288, %v568
        %v570 = vpop.f32.mrb[0].mxu0
        %571 = vmatprep.mubr.f32.mxu0 0.0
        %572 = vmatmul.mubr.f32.gmra.mrb[0].mxu0 %v364
        %v573 = vpop.f32.mrb[0].mxu0
        %v574 = vadd.f32 %v288, %v573
        %v575 = vpop.f32.mrb[0].mxu0
        %576 = vmatprep.mubr.f32.mxu0 0.0
        %577 = vmatmul.mubr.f32.gmra.mrb[0].mxu0 %v367
        %v578 = vpop.f32.mrb[0].mxu0
        %v579 = vadd.f32 %v288, %v578
        %v580 = vpop.f32.mrb[0].mxu0
        %581 = vmatprep.mubr.f32.mxu0 0.0
        %582 = vmatmul.mubr.f32.gmra.mrb[0].mxu0 %v370
        %v583 = vpop.f32.mrb[0].mxu0
        %v584 = vadd.f32 %v288, %v583
        %v585 = vpop.f32.mrb[0].mxu0
        %586 = vmatprep.mubr.f32.mxu0 0.0
        %587 = vmatmul.mubr.f32.gmra.mrb[0].mxu0 %v373
        %v588 = vpop.f32.mrb[0].mxu0
        %v589 = vadd.f32 %v288, %v588
        %v590 = vpop.f32.mrb[0].mxu0
        %591 = vmatprep.mubr.f32.mxu0 0.0
        %592 = vmatmul.mubr.f32.gmra.mrb[0].mxu0 %v376
        %v593 = vpop.f32.mrb[0].mxu0
        %v594 = vadd.f32 %v288, %v593
        %v595 = vpop.f32.mrb[0].mxu0
        %596 = vmatprep.mubr.f32.mxu0 0.0
        %597 = vmatmul.mubr.f32.gmra.mrb[0].mxu0 %v379
        %v598 = vpop.f32.mrb[0].mxu0
        %v599 = vadd.f32 %v288, %v598
        %v600 = vpop.f32.mrb[0].mxu0
        %601 = vmatprep.mubr.f32.mxu0 0.0
        %602 = vmatmul.mubr.f32.gmra.mrb[0].mxu0 %v382
        %v603 = vpop.f32.mrb[0].mxu0
        %v604 = vadd.f32 %v288, %v603
        %v605 = vpop.f32.mrb[0].mxu0
        %606 = vmatprep.mubr.f32.mxu0 0.0
        %607 = vmatmul.mubr.f32.gmra.mrb[0].mxu0 %v385
        %v608 = vpop.f32.mrb[0].mxu0
        %v609 = vadd.f32 %v288, %v608
        %v610 = vpop.f32.mrb[0].mxu0
        %611 = vdwg.mxu0
        %v612 = vmax.f32 %v454, 0.0
        %v613 = vmax.f32 %v459, 0.0
        %v614 = vmax.f32 %v464, 0.0
        %v615 = vmax.f32 %v469, 0.0
        %v616 = vmax.f32 %v474, 0.0
        %v617 = vmax.f32 %v479, 0.0
        %v618 = vmax.f32 %v484, 0.0
        %v619 = vmax.f32 %v489, 0.0
        %v620 = vmax.f32 %v494, 0.0
        %v621 = vmax.f32 %v499, 0.0
        %v622 = vmax.f32 %v504, 0.0
        %v623 = vmax.f32 %v509, 0.0
        %v624 = vmax.f32 %v514, 0.0
        %v625 = vmax.f32 %v519, 0.0
        %v626 = vmax.f32 %v524, 0.0
        %v627 = vmax.f32 %v529, 0.0
        %v628 = vmax.f32 %v534, 0.0
        %v629 = vmax.f32 %v539, 0.0
        %v630 = vmax.f32 %v544, 0.0
        %v631 = vmax.f32 %v549, 0.0
        %v632 = vmax.f32 %v554, 0.0
        %v633 = vmax.f32 %v559, 0.0
        %v634 = vmax.f32 %v564, 0.0
        %v635 = vmax.f32 %v569, 0.0
        %v636 = vmax.f32 %v574, 0.0
        %v637 = vmax.f32 %v579, 0.0
        %v638 = vmax.f32 %v584, 0.0
        %v639 = vmax.f32 %v589, 0.0
        %v640 = vmax.f32 %v594, 0.0
        %v641 = vmax.f32 %v599, 0.0
        %v642 = vmax.f32 %v604, 0.0
        %v643 = vmax.f32 %v609, 0.0
        %vm644 = vcmask 130048
        %645 = vst.msk [vmem:[#allocation2] sm:$0xff] %vm644, 0.0
        %646 = vst.msk [vmem:[#allocation2 + $0x8] sm:$0xff] %vm644, 0.0
        %647 = vst.msk [vmem:[#allocation2 + $0x10] sm:$0xff] %vm644, 0.0
        %648 = vst.msk [vmem:[#allocation2 + $0x18] sm:$0xff] %vm644, 0.0
        %649 = vst.msk [vmem:[#allocation2 + $0x20] sm:$0xff] %vm644, 0.0
        %650 = vst.msk [vmem:[#allocation2 + $0x28] sm:$0xff] %vm644, 0.0
        %651 = vst.msk [vmem:[#allocation2 + $0x30] sm:$0xff] %vm644, 0.0
        %652 = vst.msk [vmem:[#allocation2 + $0x38] sm:$0xff] %vm644, 0.0
        %653 = vst.msk [vmem:[#allocation2 + $0x40] sm:$0xff] %vm644, 0.0
        %654 = vst.msk [vmem:[#allocation2 + $0x48] sm:$0xff] %vm644, 0.0
        %655 = vst.msk [vmem:[#allocation2 + $0x50] sm:$0xff] %vm644, 0.0
        %656 = vst.msk [vmem:[#allocation2 + $0x58] sm:$0xff] %vm644, 0.0
        %657 = vst.msk [vmem:[#allocation2 + $0x60] sm:$0xff] %vm644, 0.0
        %658 = vst.msk [vmem:[#allocation2 + $0x68] sm:$0xff] %vm644, 0.0
        %659 = vst.msk [vmem:[#allocation2 + $0x70] sm:$0xff] %vm644, 0.0
        %660 = vst.msk [vmem:[#allocation2 + $0x78] sm:$0xff] %vm644, 0.0
        %661 = vst.msk [vmem:[#allocation2 + $0x80] sm:$0xff] %vm644, 0.0
        %662 = vst.msk [vmem:[#allocation2 + $0x88] sm:$0xff] %vm644, 0.0
        %663 = vst.msk [vmem:[#allocation2 + $0x90] sm:$0xff] %vm644, 0.0
        %664 = vst.msk [vmem:[#allocation2 + $0x98] sm:$0xff] %vm644, 0.0
        %665 = vst.msk [vmem:[#allocation2 + $0xa0] sm:$0xff] %vm644, 0.0
        %666 = vst.msk [vmem:[#allocation2 + $0xa8] sm:$0xff] %vm644, 0.0
        %667 = vst.msk [vmem:[#allocation2 + $0xb0] sm:$0xff] %vm644, 0.0
        %668 = vst.msk [vmem:[#allocation2 + $0xb8] sm:$0xff] %vm644, 0.0
        %669 = vst.msk [vmem:[#allocation2 + $0xc0] sm:$0xff] %vm644, 0.0
        %670 = vst.msk [vmem:[#allocation2 + $0xc8] sm:$0xff] %vm644, 0.0
        %671 = vst.msk [vmem:[#allocation2 + $0xd0] sm:$0xff] %vm644, 0.0
        %672 = vst.msk [vmem:[#allocation2 + $0xd8] sm:$0xff] %vm644, 0.0
        %673 = vst.msk [vmem:[#allocation2 + $0xe0] sm:$0xff] %vm644, 0.0
        %674 = vst.msk [vmem:[#allocation2 + $0xe8] sm:$0xff] %vm644, 0.0
        %675 = vst.msk [vmem:[#allocation2 + $0xf0] sm:$0xff] %vm644, 0.0
        %676 = vst.msk [vmem:[#allocation2 + $0xf8] sm:$0xff] %vm644, 0.0
        %677 = vst.msk [vmem:[#allocation2 + $0x100] sm:$0xff] %vm644, 0.0
        %678 = vst.msk [vmem:[#allocation2 + $0x108] sm:$0xff] %vm644, 0.0
        %679 = vst.msk [vmem:[#allocation2 + $0x110] sm:$0xff] %vm644, 0.0
        %680 = vst.msk [vmem:[#allocation2 + $0x118] sm:$0xff] %vm644, 0.0
        %681 = vst.msk [vmem:[#allocation2 + $0x120] sm:$0xff] %vm644, 0.0
        %682 = vst.msk [vmem:[#allocation2 + $0x128] sm:$0xff] %vm644, 0.0
        %683 = vst.msk [vmem:[#allocation2 + $0x130] sm:$0xff] %vm644, 0.0
        %684 = vst.msk [vmem:[#allocation2 + $0x138] sm:$0xff] %vm644, 0.0
        %685 = vst.msk [vmem:[#allocation2 + $0x140] sm:$0xff] %vm644, 0.0
        %686 = vst.msk [vmem:[#allocation2 + $0x148] sm:$0xff] %vm644, 0.0
        %687 = vst.msk [vmem:[#allocation2 + $0x150] sm:$0xff] %vm644, 0.0
        %688 = vst.msk [vmem:[#allocation2 + $0x158] sm:$0xff] %vm644, 0.0
        %689 = vst.msk [vmem:[#allocation2 + $0x160] sm:$0xff] %vm644, 0.0
        %690 = vst.msk [vmem:[#allocation2 + $0x168] sm:$0xff] %vm644, 0.0
        %691 = vst.msk [vmem:[#allocation2 + $0x170] sm:$0xff] %vm644, 0.0
        %692 = vst.msk [vmem:[#allocation2 + $0x178] sm:$0xff] %vm644, 0.0
        %693 = vst.msk [vmem:[#allocation2 + $0x180] sm:$0xff] %vm644, 0.0
        %694 = vst.msk [vmem:[#allocation2 + $0x188] sm:$0xff] %vm644, 0.0
        %695 = vst.msk [vmem:[#allocation2 + $0x190] sm:$0xff] %vm644, 0.0
        %696 = vst.msk [vmem:[#allocation2 + $0x198] sm:$0xff] %vm644, 0.0
        %697 = vst.msk [vmem:[#allocation2 + $0x1a0] sm:$0xff] %vm644, 0.0
        %698 = vst.msk [vmem:[#allocation2 + $0x1a8] sm:$0xff] %vm644, 0.0
        %699 = vst.msk [vmem:[#allocation2 + $0x1b0] sm:$0xff] %vm644, 0.0
        %700 = vst.msk [vmem:[#allocation2 + $0x1b8] sm:$0xff] %vm644, 0.0
        %701 = vst.msk [vmem:[#allocation2 + $0x1c0] sm:$0xff] %vm644, 0.0
        %702 = vst.msk [vmem:[#allocation2 + $0x1c8] sm:$0xff] %vm644, 0.0
        %703 = vst.msk [vmem:[#allocation2 + $0x1d0] sm:$0xff] %vm644, 0.0
        %704 = vst.msk [vmem:[#allocation2 + $0x1d8] sm:$0xff] %vm644, 0.0
        %705 = vst.msk [vmem:[#allocation2 + $0x1e0] sm:$0xff] %vm644, 0.0
        %706 = vst.msk [vmem:[#allocation2 + $0x1e8] sm:$0xff] %vm644, 0.0
        %707 = vst.msk [vmem:[#allocation2 + $0x1f0] sm:$0xff] %vm644, 0.0
        %708 = vst.msk [vmem:[#allocation2 + $0x1f8] sm:$0xff] %vm644, 0.0
        %709 = vst.msk [vmem:[#allocation2 + $0x200] sm:$0xff] %vm644, 0.0
        %710 = vst.msk [vmem:[#allocation2 + $0x208] sm:$0xff] %vm644, 0.0
        %711 = vst.msk [vmem:[#allocation2 + $0x210] sm:$0xff] %vm644, 0.0
        %712 = vst.msk [vmem:[#allocation2 + $0x218] sm:$0xff] %vm644, 0.0
        %713 = vst.msk [vmem:[#allocation2 + $0x220] sm:$0xff] %vm644, 0.0
        %714 = vst.msk [vmem:[#allocation2 + $0x228] sm:$0xff] %vm644, 0.0
        %715 = vst.msk [vmem:[#allocation2 + $0x230] sm:$0xff] %vm644, 0.0
        %716 = vst.msk [vmem:[#allocation2 + $0x238] sm:$0xff] %vm644, 0.0
        %s717 = scalar_lea.vmem [#allocation2], 32
        %718 = vst.msk [vmem:[%s717 + $0x8] sm:$0xff] %vm644, %v612
        %719 = vst.msk [vmem:[%s717 + $0x10] sm:$0xff] %vm644, %v613
        %720 = vst.msk [vmem:[%s717 + $0x28] sm:$0xff] %vm644, %v614
        %721 = vst.msk [vmem:[%s717 + $0x30] sm:$0xff] %vm644, %v615
        %722 = vst.msk [vmem:[%s717 + $0x48] sm:$0xff] %vm644, %v616
        %723 = vst.msk [vmem:[%s717 + $0x50] sm:$0xff] %vm644, %v617
        %724 = vst.msk [vmem:[%s717 + $0x68] sm:$0xff] %vm644, %v618
        %725 = vst.msk [vmem:[%s717 + $0x70] sm:$0xff] %vm644, %v619
        %726 = vst.msk [vmem:[%s717 + $0x88] sm:$0xff] %vm644, %v620
        %727 = vst.msk [vmem:[%s717 + $0x90] sm:$0xff] %vm644, %v621
        %728 = vst.msk [vmem:[%s717 + $0xa8] sm:$0xff] %vm644, %v622
        %729 = vst.msk [vmem:[%s717 + $0xb0] sm:$0xff] %vm644, %v623
        %730 = vst.msk [vmem:[%s717 + $0xc8] sm:$0xff] %vm644, %v624
        %731 = vst.msk [vmem:[%s717 + $0xd0] sm:$0xff] %vm644, %v625
        %732 = vst.msk [vmem:[%s717 + $0xe8] sm:$0xff] %vm644, %v626
        %733 = vst.msk [vmem:[%s717 + $0xf0] sm:$0xff] %vm644, %v627
        %734 = vst.msk [vmem:[%s717 + $0x108] sm:$0xff] %vm644, %v628
        %735 = vst.msk [vmem:[%s717 + $0x110] sm:$0xff] %vm644, %v629
        %736 = vst.msk [vmem:[%s717 + $0x128] sm:$0xff] %vm644, %v630
        %737 = vst.msk [vmem:[%s717 + $0x130] sm:$0xff] %vm644, %v631
        %738 = vst.msk [vmem:[%s717 + $0x148] sm:$0xff] %vm644, %v632
        %739 = vst.msk [vmem:[%s717 + $0x150] sm:$0xff] %vm644, %v633
        %740 = vst.msk [vmem:[%s717 + $0x168] sm:$0xff] %vm644, %v634
        %741 = vst.msk [vmem:[%s717 + $0x170] sm:$0xff] %vm644, %v635
        %742 = vst.msk [vmem:[%s717 + $0x188] sm:$0xff] %vm644, %v636
        %743 = vst.msk [vmem:[%s717 + $0x190] sm:$0xff] %vm644, %v637
        %744 = vst.msk [vmem:[%s717 + $0x1a8] sm:$0xff] %vm644, %v638
        %745 = vst.msk [vmem:[%s717 + $0x1b0] sm:$0xff] %vm644, %v639
        %746 = vst.msk [vmem:[%s717 + $0x1c8] sm:$0xff] %vm644, %v640
        %747 = vst.msk [vmem:[%s717 + $0x1d0] sm:$0xff] %vm644, %v641
        %748 = vst.msk [vmem:[%s717 + $0x1e8] sm:$0xff] %vm644, %v642
        %749 = vst.msk [vmem:[%s717 + $0x1f0] sm:$0xff] %vm644, %v643
        %750 = vst.msk [vmem:[#allocation3] sm:$0xff] %vm290, -inf
        %751 = vst.msk [vmem:[#allocation3 + $0x8] sm:$0xff] %vm290, -inf
        %752 = vst.msk [vmem:[#allocation3 + $0x10] sm:$0xff] %vm290, -inf
        %753 = vst.msk [vmem:[#allocation3 + $0x18] sm:$0xff] %vm290, -inf
        %754 = vst.msk [vmem:[#allocation3 + $0x20] sm:$0xff] %vm290, -inf
        %755 = vst.msk [vmem:[#allocation3 + $0x28] sm:$0xff] %vm290, -inf
        %756 = vst.msk [vmem:[#allocation3 + $0x30] sm:$0xff] %vm290, -inf
        %757 = vst.msk [vmem:[#allocation3 + $0x38] sm:$0xff] %vm290, -inf
        %758 = vst.msk [vmem:[#allocation3 + $0x40] sm:$0xff] %vm290, -inf
        %759 = vst.msk [vmem:[#allocation3 + $0x48] sm:$0xff] %vm290, -inf
        %760 = vst.msk [vmem:[#allocation3 + $0x50] sm:$0xff] %vm290, -inf
        %761 = vst.msk [vmem:[#allocation3 + $0x58] sm:$0xff] %vm290, -inf
        %762 = vst.msk [vmem:[#allocation3 + $0x60] sm:$0xff] %vm290, -inf
        %763 = vst.msk [vmem:[#allocation3 + $0x68] sm:$0xff] %vm290, -inf
        %764 = vst.msk [vmem:[#allocation3 + $0x70] sm:$0xff] %vm290, -inf
        %765 = vst.msk [vmem:[#allocation3 + $0x78] sm:$0xff] %vm290, -inf
        %766 = vst.msk [vmem:[#allocation3 + $0x80] sm:$0xff] %vm290, -inf
        %767 = vst.msk [vmem:[#allocation3 + $0x88] sm:$0xff] %vm290, -inf
        %768 = vst.msk [vmem:[#allocation3 + $0x90] sm:$0xff] %vm290, -inf
        %769 = vst.msk [vmem:[#allocation3 + $0x98] sm:$0xff] %vm290, -inf
        %770 = vst.msk [vmem:[#allocation3 + $0xa0] sm:$0xff] %vm290, -inf
        %771 = vst.msk [vmem:[#allocation3 + $0xa8] sm:$0xff] %vm290, -inf
        %772 = vst.msk [vmem:[#allocation3 + $0xb0] sm:$0xff] %vm290, -inf
        %773 = vst.msk [vmem:[#allocation3 + $0xb8] sm:$0xff] %vm290, -inf
        %774 = vst.msk [vmem:[#allocation3 + $0xc0] sm:$0xff] %vm290, -inf
        %775 = vst.msk [vmem:[#allocation3 + $0xc8] sm:$0xff] %vm290, -inf
        %776 = vst.msk [vmem:[#allocation3 + $0xd0] sm:$0xff] %vm290, -inf
        %777 = vst.msk [vmem:[#allocation3 + $0xd8] sm:$0xff] %vm290, -inf
        %778 = vst.msk [vmem:[#allocation3 + $0xe0] sm:$0xff] %vm290, -inf
        %779 = vst.msk [vmem:[#allocation3 + $0xe8] sm:$0xff] %vm290, -inf
        %780 = vst.msk [vmem:[#allocation3 + $0xf0] sm:$0xff] %vm290, -inf
        %781 = vst.msk [vmem:[#allocation3 + $0xf8] sm:$0xff] %vm290, -inf
        %782 = vst.msk [vmem:[#allocation3 + $0x100] sm:$0xff] %vm290, -inf
        %783 = vst.msk [vmem:[#allocation3 + $0x108] sm:$0xff] %vm290, -inf
        %784 = vst.msk [vmem:[#allocation3 + $0x110] sm:$0xff] %vm290, -inf
        %785 = vst.msk [vmem:[#allocation3 + $0x118] sm:$0xff] %vm290, -inf
        %786 = vst.msk [vmem:[#allocation3 + $0x120] sm:$0xff] %vm290, -inf
        %787 = vst.msk [vmem:[#allocation3 + $0x128] sm:$0xff] %vm290, -inf
        %788 = vst.msk [vmem:[#allocation3 + $0x130] sm:$0xff] %vm290, -inf
        %789 = vst.msk [vmem:[#allocation3 + $0x138] sm:$0xff] %vm290, -inf
        %790 = vst.msk [vmem:[#allocation3 + $0x140] sm:$0xff] %vm290, -inf
        %791 = vst.msk [vmem:[#allocation3 + $0x148] sm:$0xff] %vm290, -inf
        %792 = vst.msk [vmem:[#allocation3 + $0x150] sm:$0xff] %vm290, -inf
        %793 = vst.msk [vmem:[#allocation3 + $0x158] sm:$0xff] %vm290, -inf
        %794 = vst.msk [vmem:[#allocation3 + $0x160] sm:$0xff] %vm290, -inf
        %795 = vst.msk [vmem:[#allocation3 + $0x168] sm:$0xff] %vm290, -inf
        %796 = vst.msk [vmem:[#allocation3 + $0x170] sm:$0xff] %vm290, -inf
        %797 = vst.msk [vmem:[#allocation3 + $0x178] sm:$0xff] %vm290, -inf
        %798 = vst.msk [vmem:[#allocation3 + $0x180] sm:$0xff] %vm290, -inf
        %799 = vst.msk [vmem:[#allocation3 + $0x188] sm:$0xff] %vm290, -inf
        %800 = vst.msk [vmem:[#allocation3 + $0x190] sm:$0xff] %vm290, -inf
        %801 = vst.msk [vmem:[#allocation3 + $0x198] sm:$0xff] %vm290, -inf
        %802 = vst.msk [vmem:[#allocation3 + $0x1a0] sm:$0xff] %vm290, -inf
        %803 = vst.msk [vmem:[#allocation3 + $0x1a8] sm:$0xff] %vm290, -inf
        %804 = vst.msk [vmem:[#allocation3 + $0x1b0] sm:$0xff] %vm290, -inf
        %805 = vst.msk [vmem:[#allocation3 + $0x1b8] sm:$0xff] %vm290, -inf
        %806 = vst.msk [vmem:[#allocation3 + $0x1c0] sm:$0xff] %vm290, -inf
        %807 = vst.msk [vmem:[#allocation3 + $0x1c8] sm:$0xff] %vm290, -inf
        %808 = vst.msk [vmem:[#allocation3 + $0x1d0] sm:$0xff] %vm290, -inf
        %809 = vst.msk [vmem:[#allocation3 + $0x1d8] sm:$0xff] %vm290, -inf
        %810 = vst.msk [vmem:[#allocation3 + $0x1e0] sm:$0xff] %vm290, -inf
        %811 = vst.msk [vmem:[#allocation3 + $0x1e8] sm:$0xff] %vm290, -inf
        %812 = vst.msk [vmem:[#allocation3 + $0x1f0] sm:$0xff] %vm290, -inf
        %813 = vst.msk [vmem:[#allocation3 + $0x1f8] sm:$0xff] %vm290, -inf
        %814 = vst.msk [vmem:[#allocation3 + $0x200] sm:$0xff] %vm290, -inf
        %815 = vst.msk [vmem:[#allocation3 + $0x208] sm:$0xff] %vm290, -inf
        %816 = vst.msk [vmem:[#allocation3 + $0x210] sm:$0xff] %vm290, -inf
        %817 = vst.msk [vmem:[#allocation3 + $0x218] sm:$0xff] %vm290, -inf
        %818 = vst.msk [vmem:[#allocation3 + $0x220] sm:$0xff] %vm290, -inf
        %819 = vst.msk [vmem:[#allocation3 + $0x228] sm:$0xff] %vm290, -inf
        %820 = vst.msk [vmem:[#allocation3 + $0x230] sm:$0xff] %vm290, -inf
        %821 = vst.msk [vmem:[#allocation3 + $0x238] sm:$0xff] %vm290, -inf
        %v822 = vld [vmem:[%s249] sm:$0xff]
        %v823 = vld [vmem:[%s249 + $0x8] sm:$0xff]
        %v824 = vld [vmem:[%s249 + $0x10] sm:$0xff]
        %v825 = vld [vmem:[%s249 + $0x18] sm:$0xff]
        %v826 = vld [vmem:[%s249 + $0x20] sm:$0xff]
        %v827 = vld [vmem:[%s249 + $0x28] sm:$0xff]
        %v828 = vld [vmem:[%s249 + $0x30] sm:$0xff]
        %v829 = vld [vmem:[%s249 + $0x38] sm:$0xff]
        %v830 = vld [vmem:[%s249 + $0x40] sm:$0xff]
        %v831 = vld [vmem:[%s249 + $0x48] sm:$0xff]
        %v832 = vld [vmem:[%s249 + $0x50] sm:$0xff]
        %v833 = vld [vmem:[%s249 + $0x58] sm:$0xff]
        %v834 = vld [vmem:[%s249 + $0x60] sm:$0xff]
        %v835 = vld [vmem:[%s249 + $0x68] sm:$0xff]
        %v836 = vld [vmem:[%s249 + $0x70] sm:$0xff]
        %v837 = vld [vmem:[%s249 + $0x78] sm:$0xff]
        %v838 = vld [vmem:[%s249 + $0x80] sm:$0xff]
        %v839 = vld [vmem:[%s249 + $0x88] sm:$0xff]
        %v840 = vld [vmem:[%s249 + $0x90] sm:$0xff]
        %v841 = vld [vmem:[%s249 + $0x98] sm:$0xff]
        %v842 = vld [vmem:[%s249 + $0xa0] sm:$0xff]
        %v843 = vld [vmem:[%s249 + $0xa8] sm:$0xff]
        %v844 = vld [vmem:[%s249 + $0xb0] sm:$0xff]
        %v845 = vld [vmem:[%s249 + $0xb8] sm:$0xff]
        %v846 = vld [vmem:[%s249 + $0xc0] sm:$0xff]
        %v847 = vld [vmem:[%s249 + $0xc8] sm:$0xff]
        %v848 = vld [vmem:[%s249 + $0xd0] sm:$0xff]
        %v849 = vld [vmem:[%s249 + $0xd8] sm:$0xff]
        %v850 = vld [vmem:[%s249 + $0xe0] sm:$0xff]
        %v851 = vld [vmem:[%s249 + $0xe8] sm:$0xff]
        %v852 = vld [vmem:[%s249 + $0xf0] sm:$0xff]
        %v853 = vld [vmem:[%s249 + $0xf8] sm:$0xff]
        %s854 = scalar_lea.vmem [#allocation3], 32
        %855 = vst.msk [vmem:[%s854 + $0x8] sm:$0xff] %vm290, %v822
        %856 = vst.msk [vmem:[%s854 + $0x10] sm:$0xff] %vm290, %v823
        %857 = vst.msk [vmem:[%s854 + $0x28] sm:$0xff] %vm290, %v824
        %858 = vst.msk [vmem:[%s854 + $0x30] sm:$0xff] %vm290, %v825
        %859 = vst.msk [vmem:[%s854 + $0x48] sm:$0xff] %vm290, %v826
        %860 = vst.msk [vmem:[%s854 + $0x50] sm:$0xff] %vm290, %v827
        %861 = vst.msk [vmem:[%s854 + $0x68] sm:$0xff] %vm290, %v828
        %862 = vst.msk [vmem:[%s854 + $0x70] sm:$0xff] %vm290, %v829
        %863 = vst.msk [vmem:[%s854 + $0x88] sm:$0xff] %vm290, %v830
        %864 = vst.msk [vmem:[%s854 + $0x90] sm:$0xff] %vm290, %v831
        %865 = vst.msk [vmem:[%s854 + $0xa8] sm:$0xff] %vm290, %v832
        %866 = vst.msk [vmem:[%s854 + $0xb0] sm:$0xff] %vm290, %v833
        %867 = vst.msk [vmem:[%s854 + $0xc8] sm:$0xff] %vm290, %v834
        %868 = vst.msk [vmem:[%s854 + $0xd0] sm:$0xff] %vm290, %v835
        %869 = vst.msk [vmem:[%s854 + $0xe8] sm:$0xff] %vm290, %v836
        %870 = vst.msk [vmem:[%s854 + $0xf0] sm:$0xff] %vm290, %v837
        %871 = vst.msk [vmem:[%s854 + $0x108] sm:$0xff] %vm290, %v838
        %872 = vst.msk [vmem:[%s854 + $0x110] sm:$0xff] %vm290, %v839
        %873 = vst.msk [vmem:[%s854 + $0x128] sm:$0xff] %vm290, %v840
        %874 = vst.msk [vmem:[%s854 + $0x130] sm:$0xff] %vm290, %v841
        %875 = vst.msk [vmem:[%s854 + $0x148] sm:$0xff] %vm290, %v842
        %876 = vst.msk [vmem:[%s854 + $0x150] sm:$0xff] %vm290, %v843
        %877 = vst.msk [vmem:[%s854 + $0x168] sm:$0xff] %vm290, %v844
        %878 = vst.msk [vmem:[%s854 + $0x170] sm:$0xff] %vm290, %v845
        %879 = vst.msk [vmem:[%s854 + $0x188] sm:$0xff] %vm290, %v846
        %880 = vst.msk [vmem:[%s854 + $0x190] sm:$0xff] %vm290, %v847
        %881 = vst.msk [vmem:[%s854 + $0x1a8] sm:$0xff] %vm290, %v848
        %882 = vst.msk [vmem:[%s854 + $0x1b0] sm:$0xff] %vm290, %v849
        %883 = vst.msk [vmem:[%s854 + $0x1c8] sm:$0xff] %vm290, %v850
        %884 = vst.msk [vmem:[%s854 + $0x1d0] sm:$0xff] %vm290, %v851
        %885 = vst.msk [vmem:[%s854 + $0x1e8] sm:$0xff] %vm290, %v852
        %886 = vst.msk [vmem:[%s854 + $0x1f0] sm:$0xff] %vm290, %v853
        %v887 = vld [vmem:[#allocation2 + $0x7] sm:$0xff]
        %v888 = vld [vmem:[#allocation2 + $0xf] sm:$0xff]
        %v889 = vld [vmem:[#allocation2 + $0x27] sm:$0xff]
        %v890 = vld [vmem:[#allocation2 + $0x2f] sm:$0xff]
        %v891 = vld [vmem:[#allocation2 + $0x47] sm:$0xff]
        %v892 = vld [vmem:[#allocation2 + $0x4f] sm:$0xff]
        %v893 = vld [vmem:[#allocation2 + $0x67] sm:$0xff]
        %v894 = vld [vmem:[#allocation2 + $0x6f] sm:$0xff]
        %v895 = vld [vmem:[#allocation2 + $0x87] sm:$0xff]
        %v896 = vld [vmem:[#allocation2 + $0x8f] sm:$0xff]
        %v897 = vld [vmem:[#allocation2 + $0xa7] sm:$0xff]
        %v898 = vld [vmem:[#allocation2 + $0xaf] sm:$0xff]
        %v899 = vld [vmem:[#allocation2 + $0xc7] sm:$0xff]
        %v900 = vld [vmem:[#allocation2 + $0xcf] sm:$0xff]
        %v901 = vld [vmem:[#allocation2 + $0xe7] sm:$0xff]
        %v902 = vld [vmem:[#allocation2 + $0xef] sm:$0xff]
        %v903 = vld [vmem:[#allocation2 + $0x107] sm:$0xff]
        %v904 = vld [vmem:[#allocation2 + $0x10f] sm:$0xff]
        %v905 = vld [vmem:[#allocation2 + $0x127] sm:$0xff]
        %v906 = vld [vmem:[#allocation2 + $0x12f] sm:$0xff]
        %v907 = vld [vmem:[#allocation2 + $0x147] sm:$0xff]
        %v908 = vld [vmem:[#allocation2 + $0x14f] sm:$0xff]
        %v909 = vld [vmem:[#allocation2 + $0x167] sm:$0xff]
        %v910 = vld [vmem:[#allocation2 + $0x16f] sm:$0xff]
        %v911 = vld [vmem:[#allocation2 + $0x187] sm:$0xff]
        %v912 = vld [vmem:[#allocation2 + $0x18f] sm:$0xff]
        %v913 = vld [vmem:[#allocation2 + $0x1a7] sm:$0xff]
        %v914 = vld [vmem:[#allocation2 + $0x1af] sm:$0xff]
        %v915 = vld [vmem:[#allocation2 + $0x1c7] sm:$0xff]
        %v916 = vld [vmem:[#allocation2 + $0x1cf] sm:$0xff]
        %v917 = vld [vmem:[#allocation2 + $0x1e7] sm:$0xff]
        %v918 = vld [vmem:[#allocation2 + $0x1ef] sm:$0xff]
        %v919 = vld [vmem:[%s3] sm:$0xff]
        %v920 = vld [vmem:[%s3 + $0x8] sm:$0xff]
        %v921 = vld [vmem:[#allocation2 + $0x8] sm:$0xff]
        %v922 = vld [vmem:[#allocation2 + $0x10] sm:$0xff]
        %v923 = vld [vmem:[#allocation2 + $0x28] sm:$0xff]
        %v924 = vld [vmem:[#allocation2 + $0x30] sm:$0xff]
        %v925 = vld [vmem:[#allocation2 + $0x48] sm:$0xff]
        %v926 = vld [vmem:[#allocation2 + $0x50] sm:$0xff]
        %v927 = vld [vmem:[#allocation2 + $0x68] sm:$0xff]
        %v928 = vld [vmem:[#allocation2 + $0x70] sm:$0xff]
        %v929 = vld [vmem:[#allocation2 + $0x88] sm:$0xff]
        %v930 = vld [vmem:[#allocation2 + $0x90] sm:$0xff]
        %v931 = vld [vmem:[#allocation2 + $0xa8] sm:$0xff]
        %v932 = vld [vmem:[#allocation2 + $0xb0] sm:$0xff]
        %v933 = vld [vmem:[#allocation2 + $0xc8] sm:$0xff]
        %v934 = vld [vmem:[#allocation2 + $0xd0] sm:$0xff]
        %v935 = vld [vmem:[#allocation2 + $0xe8] sm:$0xff]
        %v936 = vld [vmem:[#allocation2 + $0xf0] sm:$0xff]
        %v937 = vld [vmem:[#allocation2 + $0x108] sm:$0xff]
        %v938 = vld [vmem:[#allocation2 + $0x110] sm:$0xff]
        %v939 = vld [vmem:[#allocation2 + $0x128] sm:$0xff]
        %v940 = vld [vmem:[#allocation2 + $0x130] sm:$0xff]
        %v941 = vld [vmem:[#allocation2 + $0x148] sm:$0xff]
        %v942 = vld [vmem:[#allocation2 + $0x150] sm:$0xff]
        %v943 = vld [vmem:[#allocation2 + $0x168] sm:$0xff]
        %v944 = vld [vmem:[#allocation2 + $0x170] sm:$0xff]
        %v945 = vld [vmem:[#allocation2 + $0x188] sm:$0xff]
        %v946 = vld [vmem:[#allocation2 + $0x190] sm:$0xff]
        %v947 = vld [vmem:[#allocation2 + $0x1a8] sm:$0xff]
        %v948 = vld [vmem:[#allocation2 + $0x1b0] sm:$0xff]
        %v949 = vld [vmem:[#allocation2 + $0x1c8] sm:$0xff]
        %v950 = vld [vmem:[#allocation2 + $0x1d0] sm:$0xff]
        %v951 = vld [vmem:[#allocation2 + $0x1e8] sm:$0xff]
        %v952 = vld [vmem:[#allocation2 + $0x1f0] sm:$0xff]
        %s953 = scalar_lea.vmem %s3, 16
        %v954 = vld [vmem:[%s953] sm:$0xff]
        %v955 = vld [vmem:[%s953 + $0x8] sm:$0xff]
        %v957 = vsel %vm644, %v921, 0
        %v960 = vsel %vm644, %v922, 0
        %v963 = vsel %vm644, %v923, 0
        %v966 = vsel %vm644, %v924, 0
        %v969 = vsel %vm644, %v925, 0
        %v972 = vsel %vm644, %v926, 0
        %v975 = vsel %vm644, %v927, 0
        %v978 = vsel %vm644, %v928, 0
        %v981 = vsel %vm644, %v929, 0
        %v984 = vsel %vm644, %v930, 0
        %v987 = vsel %vm644, %v931, 0
        %v990 = vsel %vm644, %v932, 0
        %v993 = vsel %vm644, %v933, 0
        %v996 = vsel %vm644, %v934, 0
        %v999 = vsel %vm644, %v935, 0
        %v1002 = vsel %vm644, %v936, 0
        %v1005 = vsel %vm644, %v937, 0
        %v1008 = vsel %vm644, %v938, 0
        %v1011 = vsel %vm644, %v939, 0
        %v1014 = vsel %vm644, %v940, 0
        %v1017 = vsel %vm644, %v941, 0
        %v1020 = vsel %vm644, %v942, 0
        %v1023 = vsel %vm644, %v943, 0
        %v1026 = vsel %vm644, %v944, 0
        %v1029 = vsel %vm644, %v945, 0
        %v1032 = vsel %vm644, %v946, 0
        %v1035 = vsel %vm644, %v947, 0
        %v1038 = vsel %vm644, %v948, 0
        %v1041 = vsel %vm644, %v949, 0
        %v1044 = vsel %vm644, %v950, 0
        %v1047 = vsel %vm644, %v951, 0
        %v1050 = vsel %vm644, %v952, 0
        %1052 = vmatprep.subr.mxu0 0.0
        %1053 = vmatpush1.msra.mxu0 %v954
        %1054 = vmatprep.subr.mxu0 0.0
        %1055 = vmatpush1.msra.mxu0 %v955
        %1056 = vmatprep.subr.mxu0 0.0
        %1057 = vmatpush1.msra.mxu0 0.0
        %1058 = vmatprep.subr.mxu0 0.0
        %1059 = vmatpush1.msra.mxu0 0.0
        %1060 = vmatprep.subr.mxu0 0.0
        %1061 = vmatpush1.msra.mxu0 0.0
        %1062 = vmatprep.subr.mxu0 0.0
        %1063 = vmatpush1.msra.mxu0 0.0
        %1064 = vmatprep.subr.mxu0 0.0
        %1065 = vmatpush1.msra.mxu0 0.0
        %1066 = vmatprep.subr.mxu0 0.0
        %1067 = vmatpush1.msra.mxu0 0.0
        %1068 = vmatprep.subr.mxu0 0.0
        %1069 = vmatpush1.msra.mxu0 0.0
        %1070 = vmatprep.subr.mxu0 0.0
        %1071 = vmatpush1.msra.mxu0 0.0
        %1072 = vmatprep.subr.mxu0 0.0
        %1073 = vmatpush1.msra.mxu0 0.0
        %1074 = vmatprep.subr.mxu0 0.0
        %1075 = vmatpush1.msra.mxu0 0.0
        %1076 = vmatprep.subr.mxu0 0.0
        %1077 = vmatpush1.msra.mxu0 0.0
        %1078 = vmatprep.subr.mxu0 0.0
        %1079 = vmatpush1.msra.mxu0 0.0
        %1080 = vmatprep.subr.mxu0 0.0
        %1081 = vmatpush1.msra.mxu0 0.0
        %1082 = vmatprep.subr.mxu0 0.0
        %1083 = vmatpush1.msra.mxu0 0.0
        %1084 = vmatprep.subr.mxu0 0.0
        %1085 = vmatpush1.msra.mxu0 0.0
        %1086 = vmatprep.subr.mxu0 0.0
        %1087 = vmatpush1.msra.mxu0 0.0
        %1088 = vmatprep.subr.mxu0 0.0
        %1089 = vmatpush1.msra.mxu0 0.0
        %1090 = vmatprep.subr.mxu0 0.0
        %1091 = vmatpush1.msra.mxu0 0.0
        %1092 = vmatprep.subr.mxu0 0.0
        %1093 = vmatpush1.msra.mxu0 0.0
        %1094 = vmatprep.subr.mxu0 0.0
        %1095 = vmatpush1.msra.mxu0 0.0
        %1096 = vmatprep.subr.mxu0 0.0
        %1097 = vmatpush1.msra.mxu0 0.0
        %1098 = vmatprep.subr.mxu0 0.0
        %1099 = vmatpush1.msra.mxu0 0.0
        %1100 = vmatprep.subr.mxu0 0.0
        %1101 = vmatpush1.msra.mxu0 0.0
        %1102 = vmatprep.subr.mxu0 0.0
        %1103 = vmatpush1.msra.mxu0 0.0
        %1104 = vmatprep.subr.mxu0 0.0
        %1105 = vmatpush1.msra.mxu0 0.0
        %1106 = vmatprep.subr.mxu0 0.0
        %1107 = vmatpush1.msra.mxu0 0.0
        %1108 = vmatprep.subr.mxu0 0.0
        %1109 = vmatpush1.msra.mxu0 0.0
        %1110 = vmatprep.subr.mxu0 0.0
        %1111 = vmatpush1.msra.mxu0 0.0
        %1112 = vmatprep.subr.mxu0 0.0
        %1113 = vmatpush1.msra.mxu0 0.0
        %1114 = vmatprep.subr.mxu0 0.0
        %1115 = vmatpush1.msra.mxu0 0.0
        %1116 = vmatprep.mubr.f32.mxu0 0.0
        %1117 = vmatmul.mubr.f32.gmra.mrb[0].mxu0 %v957
        %v1118 = vpop.f32.mrb[0].mxu0
        %v1119 = vadd.f32 0.0, %v1118
        %v1120 = vpop.f32.mrb[0].mxu0
        %1121 = vmatprep.mubr.f32.mxu0 0.0
        %1122 = vmatmul.mubr.f32.gmra.mrb[0].mxu0 %v960
        %v1123 = vpop.f32.mrb[0].mxu0
        %v1124 = vadd.f32 0.0, %v1123
        %v1125 = vpop.f32.mrb[0].mxu0
        %1126 = vmatprep.mubr.f32.mxu0 0.0
        %1127 = vmatmul.mubr.f32.gmra.mrb[0].mxu0 %v963
        %v1128 = vpop.f32.mrb[0].mxu0
        %v1129 = vadd.f32 0.0, %v1128
        %v1130 = vpop.f32.mrb[0].mxu0
        %1131 = vmatprep.mubr.f32.mxu0 0.0
        %1132 = vmatmul.mubr.f32.gmra.mrb[0].mxu0 %v966
        %v1133 = vpop.f32.mrb[0].mxu0
        %v1134 = vadd.f32 0.0, %v1133
        %v1135 = vpop.f32.mrb[0].mxu0
        %1136 = vmatprep.mubr.f32.mxu0 0.0
        %1137 = vmatmul.mubr.f32.gmra.mrb[0].mxu0 %v969
        %v1138 = vpop.f32.mrb[0].mxu0
        %v1139 = vadd.f32 0.0, %v1138
        %v1140 = vpop.f32.mrb[0].mxu0
        %1141 = vmatprep.mubr.f32.mxu0 0.0
        %1142 = vmatmul.mubr.f32.gmra.mrb[0].mxu0 %v972
        %v1143 = vpop.f32.mrb[0].mxu0
        %v1144 = vadd.f32 0.0, %v1143
        %v1145 = vpop.f32.mrb[0].mxu0
        %1146 = vmatprep.mubr.f32.mxu0 0.0
        %1147 = vmatmul.mubr.f32.gmra.mrb[0].mxu0 %v975
        %v1148 = vpop.f32.mrb[0].mxu0
        %v1149 = vadd.f32 0.0, %v1148
        %v1150 = vpop.f32.mrb[0].mxu0
        %1151 = vmatprep.mubr.f32.mxu0 0.0
        %1152 = vmatmul.mubr.f32.gmra.mrb[0].mxu0 %v978
        %v1153 = vpop.f32.mrb[0].mxu0
        %v1154 = vadd.f32 0.0, %v1153
        %v1155 = vpop.f32.mrb[0].mxu0
        %1156 = vmatprep.mubr.f32.mxu0 0.0
        %1157 = vmatmul.mubr.f32.gmra.mrb[0].mxu0 %v981
        %v1158 = vpop.f32.mrb[0].mxu0
        %v1159 = vadd.f32 0.0, %v1158
        %v1160 = vpop.f32.mrb[0].mxu0
        %1161 = vmatprep.mubr.f32.mxu0 0.0
        %1162 = vmatmul.mubr.f32.gmra.mrb[0].mxu0 %v984
        %v1163 = vpop.f32.mrb[0].mxu0
        %v1164 = vadd.f32 0.0, %v1163
        %v1165 = vpop.f32.mrb[0].mxu0
        %1166 = vmatprep.mubr.f32.mxu0 0.0
        %1167 = vmatmul.mubr.f32.gmra.mrb[0].mxu0 %v987
        %v1168 = vpop.f32.mrb[0].mxu0
        %v1169 = vadd.f32 0.0, %v1168
        %v1170 = vpop.f32.mrb[0].mxu0
        %1171 = vmatprep.mubr.f32.mxu0 0.0
        %1172 = vmatmul.mubr.f32.gmra.mrb[0].mxu0 %v990
        %v1173 = vpop.f32.mrb[0].mxu0
        %v1174 = vadd.f32 0.0, %v1173
        %v1175 = vpop.f32.mrb[0].mxu0
        %1176 = vmatprep.mubr.f32.mxu0 0.0
        %1177 = vmatmul.mubr.f32.gmra.mrb[0].mxu0 %v993
        %v1178 = vpop.f32.mrb[0].mxu0
        %v1179 = vadd.f32 0.0, %v1178
        %v1180 = vpop.f32.mrb[0].mxu0
        %1181 = vmatprep.mubr.f32.mxu0 0.0
        %1182 = vmatmul.mubr.f32.gmra.mrb[0].mxu0 %v996
        %v1183 = vpop.f32.mrb[0].mxu0
        %v1184 = vadd.f32 0.0, %v1183
        %v1185 = vpop.f32.mrb[0].mxu0
        %1186 = vmatprep.mubr.f32.mxu0 0.0
        %1187 = vmatmul.mubr.f32.gmra.mrb[0].mxu0 %v999
        %v1188 = vpop.f32.mrb[0].mxu0
        %v1189 = vadd.f32 0.0, %v1188
        %v1190 = vpop.f32.mrb[0].mxu0
        %1191 = vmatprep.mubr.f32.mxu0 0.0
        %1192 = vmatmul.mubr.f32.gmra.mrb[0].mxu0 %v1002
        %v1193 = vpop.f32.mrb[0].mxu0
        %v1194 = vadd.f32 0.0, %v1193
        %v1195 = vpop.f32.mrb[0].mxu0
        %1196 = vmatprep.mubr.f32.mxu0 0.0
        %1197 = vmatmul.mubr.f32.gmra.mrb[0].mxu0 %v1005
        %v1198 = vpop.f32.mrb[0].mxu0
        %v1199 = vadd.f32 0.0, %v1198
        %v1200 = vpop.f32.mrb[0].mxu0
        %1201 = vmatprep.mubr.f32.mxu0 0.0
        %1202 = vmatmul.mubr.f32.gmra.mrb[0].mxu0 %v1008
        %v1203 = vpop.f32.mrb[0].mxu0
        %v1204 = vadd.f32 0.0, %v1203
        %v1205 = vpop.f32.mrb[0].mxu0
        %1206 = vmatprep.mubr.f32.mxu0 0.0
        %1207 = vmatmul.mubr.f32.gmra.mrb[0].mxu0 %v1011
        %v1208 = vpop.f32.mrb[0].mxu0
        %v1209 = vadd.f32 0.0, %v1208
        %v1210 = vpop.f32.mrb[0].mxu0
        %1211 = vmatprep.mubr.f32.mxu0 0.0
        %1212 = vmatmul.mubr.f32.gmra.mrb[0].mxu0 %v1014
        %v1213 = vpop.f32.mrb[0].mxu0
        %v1214 = vadd.f32 0.0, %v1213
        %v1215 = vpop.f32.mrb[0].mxu0
        %1216 = vmatprep.mubr.f32.mxu0 0.0
        %1217 = vmatmul.mubr.f32.gmra.mrb[0].mxu0 %v1017
        %v1218 = vpop.f32.mrb[0].mxu0
        %v1219 = vadd.f32 0.0, %v1218
        %v1220 = vpop.f32.mrb[0].mxu0
        %1221 = vmatprep.mubr.f32.mxu0 0.0
        %1222 = vmatmul.mubr.f32.gmra.mrb[0].mxu0 %v1020
        %v1223 = vpop.f32.mrb[0].mxu0
        %v1224 = vadd.f32 0.0, %v1223
        %v1225 = vpop.f32.mrb[0].mxu0
        %1226 = vmatprep.mubr.f32.mxu0 0.0
        %1227 = vmatmul.mubr.f32.gmra.mrb[0].mxu0 %v1023
        %v1228 = vpop.f32.mrb[0].mxu0
        %v1229 = vadd.f32 0.0, %v1228
        %v1230 = vpop.f32.mrb[0].mxu0
        %1231 = vmatprep.mubr.f32.mxu0 0.0
        %1232 = vmatmul.mubr.f32.gmra.mrb[0].mxu0 %v1026
        %v1233 = vpop.f32.mrb[0].mxu0
        %v1234 = vadd.f32 0.0, %v1233
        %v1235 = vpop.f32.mrb[0].mxu0
        %1236 = vmatprep.mubr.f32.mxu0 0.0
        %1237 = vmatmul.mubr.f32.gmra.mrb[0].mxu0 %v1029
        %v1238 = vpop.f32.mrb[0].mxu0
        %v1239 = vadd.f32 0.0, %v1238
        %v1240 = vpop.f32.mrb[0].mxu0
        %1241 = vmatprep.mubr.f32.mxu0 0.0
        %1242 = vmatmul.mubr.f32.gmra.mrb[0].mxu0 %v1032
        %v1243 = vpop.f32.mrb[0].mxu0
        %v1244 = vadd.f32 0.0, %v1243
        %v1245 = vpop.f32.mrb[0].mxu0
        %1246 = vmatprep.mubr.f32.mxu0 0.0
        %1247 = vmatmul.mubr.f32.gmra.mrb[0].mxu0 %v1035
        %v1248 = vpop.f32.mrb[0].mxu0
        %v1249 = vadd.f32 0.0, %v1248
        %v1250 = vpop.f32.mrb[0].mxu0
        %1251 = vmatprep.mubr.f32.mxu0 0.0
        %1252 = vmatmul.mubr.f32.gmra.mrb[0].mxu0 %v1038
        %v1253 = vpop.f32.mrb[0].mxu0
        %v1254 = vadd.f32 0.0, %v1253
        %v1255 = vpop.f32.mrb[0].mxu0
        %1256 = vmatprep.mubr.f32.mxu0 0.0
        %1257 = vmatmul.mubr.f32.gmra.mrb[0].mxu0 %v1041
        %v1258 = vpop.f32.mrb[0].mxu0
        %v1259 = vadd.f32 0.0, %v1258
        %v1260 = vpop.f32.mrb[0].mxu0
        %1261 = vmatprep.mubr.f32.mxu0 0.0
        %1262 = vmatmul.mubr.f32.gmra.mrb[0].mxu0 %v1044
        %v1263 = vpop.f32.mrb[0].mxu0
        %v1264 = vadd.f32 0.0, %v1263
        %v1265 = vpop.f32.mrb[0].mxu0
        %1266 = vmatprep.mubr.f32.mxu0 0.0
        %1267 = vmatmul.mubr.f32.gmra.mrb[0].mxu0 %v1047
        %v1268 = vpop.f32.mrb[0].mxu0
        %v1269 = vadd.f32 0.0, %v1268
        %v1270 = vpop.f32.mrb[0].mxu0
        %1271 = vmatprep.mubr.f32.mxu0 0.0
        %1272 = vmatmul.mubr.f32.gmra.mrb[0].mxu0 %v1050
        %v1273 = vpop.f32.mrb[0].mxu0
        %v1274 = vadd.f32 0.0, %v1273
        %v1275 = vpop.f32.mrb[0].mxu0
        %1276 = vdwg.mxu0
        %v1278 = vsel %vm644, %v887, 0
        %v1281 = vsel %vm644, %v888, 0
        %v1284 = vsel %vm644, %v889, 0
        %v1287 = vsel %vm644, %v890, 0
        %v1290 = vsel %vm644, %v891, 0
        %v1293 = vsel %vm644, %v892, 0
        %v1296 = vsel %vm644, %v893, 0
        %v1299 = vsel %vm644, %v894, 0
        %v1302 = vsel %vm644, %v895, 0
        %v1305 = vsel %vm644, %v896, 0
        %v1308 = vsel %vm644, %v897, 0
        %v1311 = vsel %vm644, %v898, 0
        %v1314 = vsel %vm644, %v899, 0
        %v1317 = vsel %vm644, %v900, 0
        %v1320 = vsel %vm644, %v901, 0
        %v1323 = vsel %vm644, %v902, 0
        %v1326 = vsel %vm644, %v903, 0
        %v1329 = vsel %vm644, %v904, 0
        %v1332 = vsel %vm644, %v905, 0
        %v1335 = vsel %vm644, %v906, 0
        %v1338 = vsel %vm644, %v907, 0
        %v1341 = vsel %vm644, %v908, 0
        %v1344 = vsel %vm644, %v909, 0
        %v1347 = vsel %vm644, %v910, 0
        %v1350 = vsel %vm644, %v911, 0
        %v1353 = vsel %vm644, %v912, 0
        %v1356 = vsel %vm644, %v913, 0
        %v1359 = vsel %vm644, %v914, 0
        %v1362 = vsel %vm644, %v915, 0
        %v1365 = vsel %vm644, %v916, 0
        %v1368 = vsel %vm644, %v917, 0
        %v1371 = vsel %vm644, %v918, 0
        %1373 = vmatprep.subr.mxu0 0.0
        %1374 = vmatpush1.msra.mxu0 %v919
        %1375 = vmatprep.subr.mxu0 0.0
        %1376 = vmatpush1.msra.mxu0 %v920
        %1377 = vmatprep.subr.mxu0 0.0
        %1378 = vmatpush1.msra.mxu0 0.0
        %1379 = vmatprep.subr.mxu0 0.0
        %1380 = vmatpush1.msra.mxu0 0.0
        %1381 = vmatprep.subr.mxu0 0.0
        %1382 = vmatpush1.msra.mxu0 0.0
        %1383 = vmatprep.subr.mxu0 0.0
        %1384 = vmatpush1.msra.mxu0 0.0
        %1385 = vmatprep.subr.mxu0 0.0
        %1386 = vmatpush1.msra.mxu0 0.0
        %1387 = vmatprep.subr.mxu0 0.0
        %1388 = vmatpush1.msra.mxu0 0.0
        %1389 = vmatprep.subr.mxu0 0.0
        %1390 = vmatpush1.msra.mxu0 0.0
        %1391 = vmatprep.subr.mxu0 0.0
        %1392 = vmatpush1.msra.mxu0 0.0
        %1393 = vmatprep.subr.mxu0 0.0
        %1394 = vmatpush1.msra.mxu0 0.0
        %1395 = vmatprep.subr.mxu0 0.0
        %1396 = vmatpush1.msra.mxu0 0.0
        %1397 = vmatprep.subr.mxu0 0.0
        %1398 = vmatpush1.msra.mxu0 0.0
        %1399 = vmatprep.subr.mxu0 0.0
        %1400 = vmatpush1.msra.mxu0 0.0
        %1401 = vmatprep.subr.mxu0 0.0
        %1402 = vmatpush1.msra.mxu0 0.0
        %1403 = vmatprep.subr.mxu0 0.0
        %1404 = vmatpush1.msra.mxu0 0.0
        %1405 = vmatprep.subr.mxu0 0.0
        %1406 = vmatpush1.msra.mxu0 0.0
        %1407 = vmatprep.subr.mxu0 0.0
        %1408 = vmatpush1.msra.mxu0 0.0
        %1409 = vmatprep.subr.mxu0 0.0
        %1410 = vmatpush1.msra.mxu0 0.0
        %1411 = vmatprep.subr.mxu0 0.0
        %1412 = vmatpush1.msra.mxu0 0.0
        %1413 = vmatprep.subr.mxu0 0.0
        %1414 = vmatpush1.msra.mxu0 0.0
        %1415 = vmatprep.subr.mxu0 0.0
        %1416 = vmatpush1.msra.mxu0 0.0
        %1417 = vmatprep.subr.mxu0 0.0
        %1418 = vmatpush1.msra.mxu0 0.0
        %1419 = vmatprep.subr.mxu0 0.0
        %1420 = vmatpush1.msra.mxu0 0.0
        %1421 = vmatprep.subr.mxu0 0.0
        %1422 = vmatpush1.msra.mxu0 0.0
        %1423 = vmatprep.subr.mxu0 0.0
        %1424 = vmatpush1.msra.mxu0 0.0
        %1425 = vmatprep.subr.mxu0 0.0
        %1426 = vmatpush1.msra.mxu0 0.0
        %1427 = vmatprep.subr.mxu0 0.0
        %1428 = vmatpush1.msra.mxu0 0.0
        %1429 = vmatprep.subr.mxu0 0.0
        %1430 = vmatpush1.msra.mxu0 0.0
        %1431 = vmatprep.subr.mxu0 0.0
        %1432 = vmatpush1.msra.mxu0 0.0
        %1433 = vmatprep.subr.mxu0 0.0
        %1434 = vmatpush1.msra.mxu0 0.0
        %1435 = vmatprep.subr.mxu0 0.0
        %1436 = vmatpush1.msra.mxu0 0.0
        %1437 = vmatprep.mubr.f32.mxu0 0.0
        %1438 = vmatmul.mubr.f32.gmra.mrb[0].mxu0 %v1278
        %v1439 = vpop.f32.mrb[0].mxu0
        %v1440 = vadd.f32 %v1119, %v1439
        %v1441 = vpop.f32.mrb[0].mxu0
        %1442 = vmatprep.mubr.f32.mxu0 0.0
        %1443 = vmatmul.mubr.f32.gmra.mrb[0].mxu0 %v1281
        %v1444 = vpop.f32.mrb[0].mxu0
        %v1445 = vadd.f32 %v1124, %v1444
        %v1446 = vpop.f32.mrb[0].mxu0
        %1447 = vmatprep.mubr.f32.mxu0 0.0
        %1448 = vmatmul.mubr.f32.gmra.mrb[0].mxu0 %v1284
        %v1449 = vpop.f32.mrb[0].mxu0
        %v1450 = vadd.f32 %v1129, %v1449
        %v1451 = vpop.f32.mrb[0].mxu0
        %1452 = vmatprep.mubr.f32.mxu0 0.0
        %1453 = vmatmul.mubr.f32.gmra.mrb[0].mxu0 %v1287
        %v1454 = vpop.f32.mrb[0].mxu0
        %v1455 = vadd.f32 %v1134, %v1454
        %v1456 = vpop.f32.mrb[0].mxu0
        %1457 = vmatprep.mubr.f32.mxu0 0.0
        %1458 = vmatmul.mubr.f32.gmra.mrb[0].mxu0 %v1290
        %v1459 = vpop.f32.mrb[0].mxu0
        %v1460 = vadd.f32 %v1139, %v1459
        %v1461 = vpop.f32.mrb[0].mxu0
        %1462 = vmatprep.mubr.f32.mxu0 0.0
        %1463 = vmatmul.mubr.f32.gmra.mrb[0].mxu0 %v1293
        %v1464 = vpop.f32.mrb[0].mxu0
        %v1465 = vadd.f32 %v1144, %v1464
        %v1466 = vpop.f32.mrb[0].mxu0
        %1467 = vmatprep.mubr.f32.mxu0 0.0
        %1468 = vmatmul.mubr.f32.gmra.mrb[0].mxu0 %v1296
        %v1469 = vpop.f32.mrb[0].mxu0
        %v1470 = vadd.f32 %v1149, %v1469
        %v1471 = vpop.f32.mrb[0].mxu0
        %1472 = vmatprep.mubr.f32.mxu0 0.0
        %1473 = vmatmul.mubr.f32.gmra.mrb[0].mxu0 %v1299
        %v1474 = vpop.f32.mrb[0].mxu0
        %v1475 = vadd.f32 %v1154, %v1474
        %v1476 = vpop.f32.mrb[0].mxu0
        %1477 = vmatprep.mubr.f32.mxu0 0.0
        %1478 = vmatmul.mubr.f32.gmra.mrb[0].mxu0 %v1302
        %v1479 = vpop.f32.mrb[0].mxu0
        %v1480 = vadd.f32 %v1159, %v1479
        %v1481 = vpop.f32.mrb[0].mxu0
        %1482 = vmatprep.mubr.f32.mxu0 0.0
        %1483 = vmatmul.mubr.f32.gmra.mrb[0].mxu0 %v1305
        %v1484 = vpop.f32.mrb[0].mxu0
        %v1485 = vadd.f32 %v1164, %v1484
        %v1486 = vpop.f32.mrb[0].mxu0
        %1487 = vmatprep.mubr.f32.mxu0 0.0
        %1488 = vmatmul.mubr.f32.gmra.mrb[0].mxu0 %v1308
        %v1489 = vpop.f32.mrb[0].mxu0
        %v1490 = vadd.f32 %v1169, %v1489
        %v1491 = vpop.f32.mrb[0].mxu0
        %1492 = vmatprep.mubr.f32.mxu0 0.0
        %1493 = vmatmul.mubr.f32.gmra.mrb[0].mxu0 %v1311
        %v1494 = vpop.f32.mrb[0].mxu0
        %v1495 = vadd.f32 %v1174, %v1494
        %v1496 = vpop.f32.mrb[0].mxu0
        %1497 = vmatprep.mubr.f32.mxu0 0.0
        %1498 = vmatmul.mubr.f32.gmra.mrb[0].mxu0 %v1314
        %v1499 = vpop.f32.mrb[0].mxu0
        %v1500 = vadd.f32 %v1179, %v1499
        %v1501 = vpop.f32.mrb[0].mxu0
        %1502 = vmatprep.mubr.f32.mxu0 0.0
        %1503 = vmatmul.mubr.f32.gmra.mrb[0].mxu0 %v1317
        %v1504 = vpop.f32.mrb[0].mxu0
        %v1505 = vadd.f32 %v1184, %v1504
        %v1506 = vpop.f32.mrb[0].mxu0
        %1507 = vmatprep.mubr.f32.mxu0 0.0
        %1508 = vmatmul.mubr.f32.gmra.mrb[0].mxu0 %v1320
        %v1509 = vpop.f32.mrb[0].mxu0
        %v1510 = vadd.f32 %v1189, %v1509
        %v1511 = vpop.f32.mrb[0].mxu0
        %1512 = vmatprep.mubr.f32.mxu0 0.0
        %1513 = vmatmul.mubr.f32.gmra.mrb[0].mxu0 %v1323
        %v1514 = vpop.f32.mrb[0].mxu0
        %v1515 = vadd.f32 %v1194, %v1514
        %v1516 = vpop.f32.mrb[0].mxu0
        %1517 = vmatprep.mubr.f32.mxu0 0.0
        %1518 = vmatmul.mubr.f32.gmra.mrb[0].mxu0 %v1326
        %v1519 = vpop.f32.mrb[0].mxu0
        %v1520 = vadd.f32 %v1199, %v1519
        %v1521 = vpop.f32.mrb[0].mxu0
        %1522 = vmatprep.mubr.f32.mxu0 0.0
        %1523 = vmatmul.mubr.f32.gmra.mrb[0].mxu0 %v1329
        %v1524 = vpop.f32.mrb[0].mxu0
        %v1525 = vadd.f32 %v1204, %v1524
        %v1526 = vpop.f32.mrb[0].mxu0
        %1527 = vmatprep.mubr.f32.mxu0 0.0
        %1528 = vmatmul.mubr.f32.gmra.mrb[0].mxu0 %v1332
        %v1529 = vpop.f32.mrb[0].mxu0
        %v1530 = vadd.f32 %v1209, %v1529
        %v1531 = vpop.f32.mrb[0].mxu0
        %1532 = vmatprep.mubr.f32.mxu0 0.0
        %1533 = vmatmul.mubr.f32.gmra.mrb[0].mxu0 %v1335
        %v1534 = vpop.f32.mrb[0].mxu0
        %v1535 = vadd.f32 %v1214, %v1534
        %v1536 = vpop.f32.mrb[0].mxu0
        %1537 = vmatprep.mubr.f32.mxu0 0.0
        %1538 = vmatmul.mubr.f32.gmra.mrb[0].mxu0 %v1338
        %v1539 = vpop.f32.mrb[0].mxu0
        %v1540 = vadd.f32 %v1219, %v1539
        %v1541 = vpop.f32.mrb[0].mxu0
        %1542 = vmatprep.mubr.f32.mxu0 0.0
        %1543 = vmatmul.mubr.f32.gmra.mrb[0].mxu0 %v1341
        %v1544 = vpop.f32.mrb[0].mxu0
        %v1545 = vadd.f32 %v1224, %v1544
        %v1546 = vpop.f32.mrb[0].mxu0
        %1547 = vmatprep.mubr.f32.mxu0 0.0
        %1548 = vmatmul.mubr.f32.gmra.mrb[0].mxu0 %v1344
        %v1549 = vpop.f32.mrb[0].mxu0
        %v1550 = vadd.f32 %v1229, %v1549
        %v1551 = vpop.f32.mrb[0].mxu0
        %1552 = vmatprep.mubr.f32.mxu0 0.0
        %1553 = vmatmul.mubr.f32.gmra.mrb[0].mxu0 %v1347
        %v1554 = vpop.f32.mrb[0].mxu0
        %v1555 = vadd.f32 %v1234, %v1554
        %v1556 = vpop.f32.mrb[0].mxu0
        %1557 = vmatprep.mubr.f32.mxu0 0.0
        %1558 = vmatmul.mubr.f32.gmra.mrb[0].mxu0 %v1350
        %v1559 = vpop.f32.mrb[0].mxu0
        %v1560 = vadd.f32 %v1239, %v1559
        %v1561 = vpop.f32.mrb[0].mxu0
        %1562 = vmatprep.mubr.f32.mxu0 0.0
        %1563 = vmatmul.mubr.f32.gmra.mrb[0].mxu0 %v1353
        %v1564 = vpop.f32.mrb[0].mxu0
        %v1565 = vadd.f32 %v1244, %v1564
        %v1566 = vpop.f32.mrb[0].mxu0
        %1567 = vmatprep.mubr.f32.mxu0 0.0
        %1568 = vmatmul.mubr.f32.gmra.mrb[0].mxu0 %v1356
        %v1569 = vpop.f32.mrb[0].mxu0
        %v1570 = vadd.f32 %v1249, %v1569
        %v1571 = vpop.f32.mrb[0].mxu0
        %1572 = vmatprep.mubr.f32.mxu0 0.0
        %1573 = vmatmul.mubr.f32.gmra.mrb[0].mxu0 %v1359
        %v1574 = vpop.f32.mrb[0].mxu0
        %v1575 = vadd.f32 %v1254, %v1574
        %v1576 = vpop.f32.mrb[0].mxu0
        %1577 = vmatprep.mubr.f32.mxu0 0.0
        %1578 = vmatmul.mubr.f32.gmra.mrb[0].mxu0 %v1362
        %v1579 = vpop.f32.mrb[0].mxu0
        %v1580 = vadd.f32 %v1259, %v1579
        %v1581 = vpop.f32.mrb[0].mxu0
        %1582 = vmatprep.mubr.f32.mxu0 0.0
        %1583 = vmatmul.mubr.f32.gmra.mrb[0].mxu0 %v1365
        %v1584 = vpop.f32.mrb[0].mxu0
        %v1585 = vadd.f32 %v1264, %v1584
        %v1586 = vpop.f32.mrb[0].mxu0
        %1587 = vmatprep.mubr.f32.mxu0 0.0
        %1588 = vmatmul.mubr.f32.gmra.mrb[0].mxu0 %v1368
        %v1589 = vpop.f32.mrb[0].mxu0
        %v1590 = vadd.f32 %v1269, %v1589
        %v1591 = vpop.f32.mrb[0].mxu0
        %1592 = vmatprep.mubr.f32.mxu0 0.0
        %1593 = vmatmul.mubr.f32.gmra.mrb[0].mxu0 %v1371
        %v1594 = vpop.f32.mrb[0].mxu0
        %v1595 = vadd.f32 %v1274, %v1594
        %v1596 = vpop.f32.mrb[0].mxu0
        %1597 = vdwg.mxu0
        %v1598 = vld [vmem:[#allocation2 + $0x9] sm:$0xff]
        %v1599 = vld [vmem:[#allocation2 + $0x11] sm:$0xff]
        %v1600 = vld [vmem:[#allocation2 + $0x29] sm:$0xff]
        %v1601 = vld [vmem:[#allocation2 + $0x31] sm:$0xff]
        %v1602 = vld [vmem:[#allocation2 + $0x49] sm:$0xff]
        %v1603 = vld [vmem:[#allocation2 + $0x51] sm:$0xff]
        %v1604 = vld [vmem:[#allocation2 + $0x69] sm:$0xff]
        %v1605 = vld [vmem:[#allocation2 + $0x71] sm:$0xff]
        %v1606 = vld [vmem:[#allocation2 + $0x89] sm:$0xff]
        %v1607 = vld [vmem:[#allocation2 + $0x91] sm:$0xff]
        %v1608 = vld [vmem:[#allocation2 + $0xa9] sm:$0xff]
        %v1609 = vld [vmem:[#allocation2 + $0xb1] sm:$0xff]
        %v1610 = vld [vmem:[#allocation2 + $0xc9] sm:$0xff]
        %v1611 = vld [vmem:[#allocation2 + $0xd1] sm:$0xff]
        %v1612 = vld [vmem:[#allocation2 + $0xe9] sm:$0xff]
        %v1613 = vld [vmem:[#allocation2 + $0xf1] sm:$0xff]
        %v1614 = vld [vmem:[#allocation2 + $0x109] sm:$0xff]
        %v1615 = vld [vmem:[#allocation2 + $0x111] sm:$0xff]
        %v1616 = vld [vmem:[#allocation2 + $0x129] sm:$0xff]
        %v1617 = vld [vmem:[#allocation2 + $0x131] sm:$0xff]
        %v1618 = vld [vmem:[#allocation2 + $0x149] sm:$0xff]
        %v1619 = vld [vmem:[#allocation2 + $0x151] sm:$0xff]
        %v1620 = vld [vmem:[#allocation2 + $0x169] sm:$0xff]
        %v1621 = vld [vmem:[#allocation2 + $0x171] sm:$0xff]
        %v1622 = vld [vmem:[#allocation2 + $0x189] sm:$0xff]
        %v1623 = vld [vmem:[#allocation2 + $0x191] sm:$0xff]
        %v1624 = vld [vmem:[#allocation2 + $0x1a9] sm:$0xff]
        %v1625 = vld [vmem:[#allocation2 + $0x1b1] sm:$0xff]
        %v1626 = vld [vmem:[#allocation2 + $0x1c9] sm:$0xff]
        %v1627 = vld [vmem:[#allocation2 + $0x1d1] sm:$0xff]
        %v1628 = vld [vmem:[#allocation2 + $0x1e9] sm:$0xff]
        %v1629 = vld [vmem:[#allocation2 + $0x1f1] sm:$0xff]
        %s1630 = scalar_lea.vmem %s3, 32
        %v1631 = vld [vmem:[%s1630] sm:$0xff]
        %v1632 = vld [vmem:[%s1630 + $0x8] sm:$0xff]
        %v1634 = vsel %vm644, %v1598, 0
        %v1637 = vsel %vm644, %v1599, 0
        %v1640 = vsel %vm644, %v1600, 0
        %v1643 = vsel %vm644, %v1601, 0
        %v1646 = vsel %vm644, %v1602, 0
        %v1649 = vsel %vm644, %v1603, 0
        %v1652 = vsel %vm644, %v1604, 0
        %v1655 = vsel %vm644, %v1605, 0
        %v1658 = vsel %vm644, %v1606, 0
        %v1661 = vsel %vm644, %v1607, 0
        %v1664 = vsel %vm644, %v1608, 0
        %v1667 = vsel %vm644, %v1609, 0
        %v1670 = vsel %vm644, %v1610, 0
        %v1673 = vsel %vm644, %v1611, 0
        %v1676 = vsel %vm644, %v1612, 0
        %v1679 = vsel %vm644, %v1613, 0
        %v1682 = vsel %vm644, %v1614, 0
        %v1685 = vsel %vm644, %v1615, 0
        %v1688 = vsel %vm644, %v1616, 0
        %v1691 = vsel %vm644, %v1617, 0
        %v1694 = vsel %vm644, %v1618, 0
        %v1697 = vsel %vm644, %v1619, 0
        %v1700 = vsel %vm644, %v1620, 0
        %v1703 = vsel %vm644, %v1621, 0
        %v1706 = vsel %vm644, %v1622, 0
        %v1709 = vsel %vm644, %v1623, 0
        %v1712 = vsel %vm644, %v1624, 0
        %v1715 = vsel %vm644, %v1625, 0
        %v1718 = vsel %vm644, %v1626, 0
        %v1721 = vsel %vm644, %v1627, 0
        %v1724 = vsel %vm644, %v1628, 0
        %v1727 = vsel %vm644, %v1629, 0
        %1729 = vmatprep.subr.mxu0 0.0
        %1730 = vmatpush1.msra.mxu0 %v1631
        %1731 = vmatprep.subr.mxu0 0.0
        %1732 = vmatpush1.msra.mxu0 %v1632
        %1733 = vmatprep.subr.mxu0 0.0
        %1734 = vmatpush1.msra.mxu0 0.0
        %1735 = vmatprep.subr.mxu0 0.0
        %1736 = vmatpush1.msra.mxu0 0.0
        %1737 = vmatprep.subr.mxu0 0.0
        %1738 = vmatpush1.msra.mxu0 0.0
        %1739 = vmatprep.subr.mxu0 0.0
        %1740 = vmatpush1.msra.mxu0 0.0
        %1741 = vmatprep.subr.mxu0 0.0
        %1742 = vmatpush1.msra.mxu0 0.0
        %1743 = vmatprep.subr.mxu0 0.0
        %1744 = vmatpush1.msra.mxu0 0.0
        %1745 = vmatprep.subr.mxu0 0.0
        %1746 = vmatpush1.msra.mxu0 0.0
        %1747 = vmatprep.subr.mxu0 0.0
        %1748 = vmatpush1.msra.mxu0 0.0
        %1749 = vmatprep.subr.mxu0 0.0
        %1750 = vmatpush1.msra.mxu0 0.0
        %1751 = vmatprep.subr.mxu0 0.0
        %1752 = vmatpush1.msra.mxu0 0.0
        %1753 = vmatprep.subr.mxu0 0.0
        %1754 = vmatpush1.msra.mxu0 0.0
        %1755 = vmatprep.subr.mxu0 0.0
        %1756 = vmatpush1.msra.mxu0 0.0
        %1757 = vmatprep.subr.mxu0 0.0
        %1758 = vmatpush1.msra.mxu0 0.0
        %1759 = vmatprep.subr.mxu0 0.0
        %1760 = vmatpush1.msra.mxu0 0.0
        %1761 = vmatprep.subr.mxu0 0.0
        %1762 = vmatpush1.msra.mxu0 0.0
        %1763 = vmatprep.subr.mxu0 0.0
        %1764 = vmatpush1.msra.mxu0 0.0
        %1765 = vmatprep.subr.mxu0 0.0
        %1766 = vmatpush1.msra.mxu0 0.0
        %1767 = vmatprep.subr.mxu0 0.0
        %1768 = vmatpush1.msra.mxu0 0.0
        %1769 = vmatprep.subr.mxu0 0.0
        %1770 = vmatpush1.msra.mxu0 0.0
        %1771 = vmatprep.subr.mxu0 0.0
        %1772 = vmatpush1.msra.mxu0 0.0
        %1773 = vmatprep.subr.mxu0 0.0
        %1774 = vmatpush1.msra.mxu0 0.0
        %1775 = vmatprep.subr.mxu0 0.0
        %1776 = vmatpush1.msra.mxu0 0.0
        %1777 = vmatprep.subr.mxu0 0.0
        %1778 = vmatpush1.msra.mxu0 0.0
        %1779 = vmatprep.subr.mxu0 0.0
        %1780 = vmatpush1.msra.mxu0 0.0
        %1781 = vmatprep.subr.mxu0 0.0
        %1782 = vmatpush1.msra.mxu0 0.0
        %1783 = vmatprep.subr.mxu0 0.0
        %1784 = vmatpush1.msra.mxu0 0.0
        %1785 = vmatprep.subr.mxu0 0.0
        %1786 = vmatpush1.msra.mxu0 0.0
        %1787 = vmatprep.subr.mxu0 0.0
        %1788 = vmatpush1.msra.mxu0 0.0
        %1789 = vmatprep.subr.mxu0 0.0
        %1790 = vmatpush1.msra.mxu0 0.0
        %1791 = vmatprep.subr.mxu0 0.0
        %1792 = vmatpush1.msra.mxu0 0.0
        %1793 = vmatprep.mubr.f32.mxu0 0.0
        %1794 = vmatmul.mubr.f32.gmra.mrb[0].mxu0 %v1634
        %v1795 = vpop.f32.mrb[0].mxu0
        %v1796 = vadd.f32 0.0, %v1795
        %v1797 = vpop.f32.mrb[0].mxu0
        %1798 = vmatprep.mubr.f32.mxu0 0.0
        %1799 = vmatmul.mubr.f32.gmra.mrb[0].mxu0 %v1637
        %v1800 = vpop.f32.mrb[0].mxu0
        %v1801 = vadd.f32 0.0, %v1800
        %v1802 = vpop.f32.mrb[0].mxu0
        %1803 = vmatprep.mubr.f32.mxu0 0.0
        %1804 = vmatmul.mubr.f32.gmra.mrb[0].mxu0 %v1640
        %v1805 = vpop.f32.mrb[0].mxu0
        %v1806 = vadd.f32 0.0, %v1805
        %v1807 = vpop.f32.mrb[0].mxu0
        %1808 = vmatprep.mubr.f32.mxu0 0.0
        %1809 = vmatmul.mubr.f32.gmra.mrb[0].mxu0 %v1643
        %v1810 = vpop.f32.mrb[0].mxu0
        %v1811 = vadd.f32 0.0, %v1810
        %v1812 = vpop.f32.mrb[0].mxu0
        %1813 = vmatprep.mubr.f32.mxu0 0.0
        %1814 = vmatmul.mubr.f32.gmra.mrb[0].mxu0 %v1646
        %v1815 = vpop.f32.mrb[0].mxu0
        %v1816 = vadd.f32 0.0, %v1815
        %v1817 = vpop.f32.mrb[0].mxu0
        %1818 = vmatprep.mubr.f32.mxu0 0.0
        %1819 = vmatmul.mubr.f32.gmra.mrb[0].mxu0 %v1649
        %v1820 = vpop.f32.mrb[0].mxu0
        %v1821 = vadd.f32 0.0, %v1820
        %v1822 = vpop.f32.mrb[0].mxu0
        %1823 = vmatprep.mubr.f32.mxu0 0.0
        %1824 = vmatmul.mubr.f32.gmra.mrb[0].mxu0 %v1652
        %v1825 = vpop.f32.mrb[0].mxu0
        %v1826 = vadd.f32 0.0, %v1825
        %v1827 = vpop.f32.mrb[0].mxu0
        %1828 = vmatprep.mubr.f32.mxu0 0.0
        %1829 = vmatmul.mubr.f32.gmra.mrb[0].mxu0 %v1655
        %v1830 = vpop.f32.mrb[0].mxu0
        %v1831 = vadd.f32 0.0, %v1830
        %v1832 = vpop.f32.mrb[0].mxu0
        %1833 = vmatprep.mubr.f32.mxu0 0.0
        %1834 = vmatmul.mubr.f32.gmra.mrb[0].mxu0 %v1658
        %v1835 = vpop.f32.mrb[0].mxu0
        %v1836 = vadd.f32 0.0, %v1835
        %v1837 = vpop.f32.mrb[0].mxu0
        %1838 = vmatprep.mubr.f32.mxu0 0.0
        %1839 = vmatmul.mubr.f32.gmra.mrb[0].mxu0 %v1661
        %v1840 = vpop.f32.mrb[0].mxu0
        %v1841 = vadd.f32 0.0, %v1840
        %v1842 = vpop.f32.mrb[0].mxu0
        %1843 = vmatprep.mubr.f32.mxu0 0.0
        %1844 = vmatmul.mubr.f32.gmra.mrb[0].mxu0 %v1664
        %v1845 = vpop.f32.mrb[0].mxu0
        %v1846 = vadd.f32 0.0, %v1845
        %v1847 = vpop.f32.mrb[0].mxu0
        %1848 = vmatprep.mubr.f32.mxu0 0.0
        %1849 = vmatmul.mubr.f32.gmra.mrb[0].mxu0 %v1667
        %v1850 = vpop.f32.mrb[0].mxu0
        %v1851 = vadd.f32 0.0, %v1850
        %v1852 = vpop.f32.mrb[0].mxu0
        %1853 = vmatprep.mubr.f32.mxu0 0.0
        %1854 = vmatmul.mubr.f32.gmra.mrb[0].mxu0 %v1670
        %v1855 = vpop.f32.mrb[0].mxu0
        %v1856 = vadd.f32 0.0, %v1855
        %v1857 = vpop.f32.mrb[0].mxu0
        %1858 = vmatprep.mubr.f32.mxu0 0.0
        %1859 = vmatmul.mubr.f32.gmra.mrb[0].mxu0 %v1673
        %v1860 = vpop.f32.mrb[0].mxu0
        %v1861 = vadd.f32 0.0, %v1860
        %v1862 = vpop.f32.mrb[0].mxu0
        %1863 = vmatprep.mubr.f32.mxu0 0.0
        %1864 = vmatmul.mubr.f32.gmra.mrb[0].mxu0 %v1676
        %v1865 = vpop.f32.mrb[0].mxu0
        %v1866 = vadd.f32 0.0, %v1865
        %v1867 = vpop.f32.mrb[0].mxu0
        %1868 = vmatprep.mubr.f32.mxu0 0.0
        %1869 = vmatmul.mubr.f32.gmra.mrb[0].mxu0 %v1679
        %v1870 = vpop.f32.mrb[0].mxu0
        %v1871 = vadd.f32 0.0, %v1870
        %v1872 = vpop.f32.mrb[0].mxu0
        %1873 = vmatprep.mubr.f32.mxu0 0.0
        %1874 = vmatmul.mubr.f32.gmra.mrb[0].mxu0 %v1682
        %v1875 = vpop.f32.mrb[0].mxu0
        %v1876 = vadd.f32 0.0, %v1875
        %v1877 = vpop.f32.mrb[0].mxu0
        %1878 = vmatprep.mubr.f32.mxu0 0.0
        %1879 = vmatmul.mubr.f32.gmra.mrb[0].mxu0 %v1685
        %v1880 = vpop.f32.mrb[0].mxu0
        %v1881 = vadd.f32 0.0, %v1880
        %v1882 = vpop.f32.mrb[0].mxu0
        %1883 = vmatprep.mubr.f32.mxu0 0.0
        %1884 = vmatmul.mubr.f32.gmra.mrb[0].mxu0 %v1688
        %v1885 = vpop.f32.mrb[0].mxu0
        %v1886 = vadd.f32 0.0, %v1885
        %v1887 = vpop.f32.mrb[0].mxu0
        %1888 = vmatprep.mubr.f32.mxu0 0.0
        %1889 = vmatmul.mubr.f32.gmra.mrb[0].mxu0 %v1691
        %v1890 = vpop.f32.mrb[0].mxu0
        %v1891 = vadd.f32 0.0, %v1890
        %v1892 = vpop.f32.mrb[0].mxu0
        %1893 = vmatprep.mubr.f32.mxu0 0.0
        %1894 = vmatmul.mubr.f32.gmra.mrb[0].mxu0 %v1694
        %v1895 = vpop.f32.mrb[0].mxu0
        %v1896 = vadd.f32 0.0, %v1895
        %v1897 = vpop.f32.mrb[0].mxu0
        %1898 = vmatprep.mubr.f32.mxu0 0.0
        %1899 = vmatmul.mubr.f32.gmra.mrb[0].mxu0 %v1697
        %v1900 = vpop.f32.mrb[0].mxu0
        %v1901 = vadd.f32 0.0, %v1900
        %v1902 = vpop.f32.mrb[0].mxu0
        %1903 = vmatprep.mubr.f32.mxu0 0.0
        %1904 = vmatmul.mubr.f32.gmra.mrb[0].mxu0 %v1700
        %v1905 = vpop.f32.mrb[0].mxu0
        %v1906 = vadd.f32 0.0, %v1905
        %v1907 = vpop.f32.mrb[0].mxu0
        %1908 = vmatprep.mubr.f32.mxu0 0.0
        %1909 = vmatmul.mubr.f32.gmra.mrb[0].mxu0 %v1703
        %v1910 = vpop.f32.mrb[0].mxu0
        %v1911 = vadd.f32 0.0, %v1910
        %v1912 = vpop.f32.mrb[0].mxu0
        %1913 = vmatprep.mubr.f32.mxu0 0.0
        %1914 = vmatmul.mubr.f32.gmra.mrb[0].mxu0 %v1706
        %v1915 = vpop.f32.mrb[0].mxu0
        %v1916 = vadd.f32 0.0, %v1915
        %v1917 = vpop.f32.mrb[0].mxu0
        %1918 = vmatprep.mubr.f32.mxu0 0.0
        %1919 = vmatmul.mubr.f32.gmra.mrb[0].mxu0 %v1709
        %v1920 = vpop.f32.mrb[0].mxu0
        %v1921 = vadd.f32 0.0, %v1920
        %v1922 = vpop.f32.mrb[0].mxu0
        %1923 = vmatprep.mubr.f32.mxu0 0.0
        %1924 = vmatmul.mubr.f32.gmra.mrb[0].mxu0 %v1712
        %v1925 = vpop.f32.mrb[0].mxu0
        %v1926 = vadd.f32 0.0, %v1925
        %v1927 = vpop.f32.mrb[0].mxu0
        %1928 = vmatprep.mubr.f32.mxu0 0.0
        %1929 = vmatmul.mubr.f32.gmra.mrb[0].mxu0 %v1715
        %v1930 = vpop.f32.mrb[0].mxu0
        %v1931 = vadd.f32 0.0, %v1930
        %v1932 = vpop.f32.mrb[0].mxu0
        %1933 = vmatprep.mubr.f32.mxu0 0.0
        %1934 = vmatmul.mubr.f32.gmra.mrb[0].mxu0 %v1718
        %v1935 = vpop.f32.mrb[0].mxu0
        %v1936 = vadd.f32 0.0, %v1935
        %v1937 = vpop.f32.mrb[0].mxu0
        %1938 = vmatprep.mubr.f32.mxu0 0.0
        %1939 = vmatmul.mubr.f32.gmra.mrb[0].mxu0 %v1721
        %v1940 = vpop.f32.mrb[0].mxu0
        %v1941 = vadd.f32 0.0, %v1940
        %v1942 = vpop.f32.mrb[0].mxu0
        %1943 = vmatprep.mubr.f32.mxu0 0.0
        %1944 = vmatmul.mubr.f32.gmra.mrb[0].mxu0 %v1724
        %v1945 = vpop.f32.mrb[0].mxu0
        %v1946 = vadd.f32 0.0, %v1945
        %v1947 = vpop.f32.mrb[0].mxu0
        %1948 = vmatprep.mubr.f32.mxu0 0.0
        %1949 = vmatmul.mubr.f32.gmra.mrb[0].mxu0 %v1727
        %v1950 = vpop.f32.mrb[0].mxu0
        %v1951 = vadd.f32 0.0, %v1950
        %v1952 = vpop.f32.mrb[0].mxu0
        %1953 = vdwg.mxu0
        %v1954 = vadd.f32 %v1440, %v1796
        %v1955 = vadd.f32 %v1445, %v1801
        %v1956 = vadd.f32 %v1450, %v1806
        %v1957 = vadd.f32 %v1455, %v1811
        %v1958 = vadd.f32 %v1460, %v1816
        %v1959 = vadd.f32 %v1465, %v1821
        %v1960 = vadd.f32 %v1470, %v1826
        %v1961 = vadd.f32 %v1475, %v1831
        %v1962 = vadd.f32 %v1480, %v1836
        %v1963 = vadd.f32 %v1485, %v1841
        %v1964 = vadd.f32 %v1490, %v1846
        %v1965 = vadd.f32 %v1495, %v1851
        %v1966 = vadd.f32 %v1500, %v1856
        %v1967 = vadd.f32 %v1505, %v1861
        %v1968 = vadd.f32 %v1510, %v1866
        %v1969 = vadd.f32 %v1515, %v1871
        %v1970 = vadd.f32 %v1520, %v1876
        %v1971 = vadd.f32 %v1525, %v1881
        %v1972 = vadd.f32 %v1530, %v1886
        %v1973 = vadd.f32 %v1535, %v1891
        %v1974 = vadd.f32 %v1540, %v1896
        %v1975 = vadd.f32 %v1545, %v1901
        %v1976 = vadd.f32 %v1550, %v1906
        %v1977 = vadd.f32 %v1555, %v1911
        %v1978 = vadd.f32 %v1560, %v1916
        %v1979 = vadd.f32 %v1565, %v1921
        %v1980 = vadd.f32 %v1570, %v1926
        %v1981 = vadd.f32 %v1575, %v1931
        %v1982 = vadd.f32 %v1580, %v1936
        %v1983 = vadd.f32 %v1585, %v1941
        %v1984 = vadd.f32 %v1590, %v1946
        %v1985 = vadd.f32 %v1595, %v1951
        %v1986 = vld [vmem:[%s717 + $0x7] sm:$0xff]
        %v1987 = vld [vmem:[%s717 + $0xf] sm:$0xff]
        %v1988 = vld [vmem:[%s717 + $0x27] sm:$0xff]
        %v1989 = vld [vmem:[%s717 + $0x2f] sm:$0xff]
        %v1990 = vld [vmem:[%s717 + $0x47] sm:$0xff]
        %v1991 = vld [vmem:[%s717 + $0x4f] sm:$0xff]
        %v1992 = vld [vmem:[%s717 + $0x67] sm:$0xff]
        %v1993 = vld [vmem:[%s717 + $0x6f] sm:$0xff]
        %v1994 = vld [vmem:[%s717 + $0x87] sm:$0xff]
        %v1995 = vld [vmem:[%s717 + $0x8f] sm:$0xff]
        %v1996 = vld [vmem:[%s717 + $0xa7] sm:$0xff]
        %v1997 = vld [vmem:[%s717 + $0xaf] sm:$0xff]
        %v1998 = vld [vmem:[%s717 + $0xc7] sm:$0xff]
        %v1999 = vld [vmem:[%s717 + $0xcf] sm:$0xff]
        %v2000 = vld [vmem:[%s717 + $0xe7] sm:$0xff]
        %v2001 = vld [vmem:[%s717 + $0xef] sm:$0xff]
        %v2002 = vld [vmem:[%s717 + $0x107] sm:$0xff]
        %v2003 = vld [vmem:[%s717 + $0x10f] sm:$0xff]
        %v2004 = vld [vmem:[%s717 + $0x127] sm:$0xff]
        %v2005 = vld [vmem:[%s717 + $0x12f] sm:$0xff]
        %v2006 = vld [vmem:[%s717 + $0x147] sm:$0xff]
        %v2007 = vld [vmem:[%s717 + $0x14f] sm:$0xff]
        %v2008 = vld [vmem:[%s717 + $0x167] sm:$0xff]
        %v2009 = vld [vmem:[%s717 + $0x16f] sm:$0xff]
        %v2010 = vld [vmem:[%s717 + $0x187] sm:$0xff]
        %v2011 = vld [vmem:[%s717 + $0x18f] sm:$0xff]
        %v2012 = vld [vmem:[%s717 + $0x1a7] sm:$0xff]
        %v2013 = vld [vmem:[%s717 + $0x1af] sm:$0xff]
        %v2014 = vld [vmem:[%s717 + $0x1c7] sm:$0xff]
        %v2015 = vld [vmem:[%s717 + $0x1cf] sm:$0xff]
        %v2016 = vld [vmem:[%s717 + $0x1e7] sm:$0xff]
        %v2017 = vld [vmem:[%s717 + $0x1ef] sm:$0xff]
        %s2018 = scalar_lea.vmem %s3, 48
        %v2019 = vld [vmem:[%s2018] sm:$0xff]
        %v2020 = vld [vmem:[%s2018 + $0x8] sm:$0xff]
        %v2022 = vsel %vm644, %v1986, 0
        %v2025 = vsel %vm644, %v1987, 0
        %v2028 = vsel %vm644, %v1988, 0
        %v2031 = vsel %vm644, %v1989, 0
        %v2034 = vsel %vm644, %v1990, 0
        %v2037 = vsel %vm644, %v1991, 0
        %v2040 = vsel %vm644, %v1992, 0
        %v2043 = vsel %vm644, %v1993, 0
        %v2046 = vsel %vm644, %v1994, 0
        %v2049 = vsel %vm644, %v1995, 0
        %v2052 = vsel %vm644, %v1996, 0
        %v2055 = vsel %vm644, %v1997, 0
        %v2058 = vsel %vm644, %v1998, 0
        %v2061 = vsel %vm644, %v1999, 0
        %v2064 = vsel %vm644, %v2000, 0
        %v2067 = vsel %vm644, %v2001, 0
        %v2070 = vsel %vm644, %v2002, 0
        %v2073 = vsel %vm644, %v2003, 0
        %v2076 = vsel %vm644, %v2004, 0
        %v2079 = vsel %vm644, %v2005, 0
        %v2082 = vsel %vm644, %v2006, 0
        %v2085 = vsel %vm644, %v2007, 0
        %v2088 = vsel %vm644, %v2008, 0
        %v2091 = vsel %vm644, %v2009, 0
        %v2094 = vsel %vm644, %v2010, 0
        %v2097 = vsel %vm644, %v2011, 0
        %v2100 = vsel %vm644, %v2012, 0
        %v2103 = vsel %vm644, %v2013, 0
        %v2106 = vsel %vm644, %v2014, 0
        %v2109 = vsel %vm644, %v2015, 0
        %v2112 = vsel %vm644, %v2016, 0
        %v2115 = vsel %vm644, %v2017, 0
        %2117 = vmatprep.subr.mxu0 0.0
        %2118 = vmatpush1.msra.mxu0 %v2019
        %2119 = vmatprep.subr.mxu0 0.0
        %2120 = vmatpush1.msra.mxu0 %v2020
        %2121 = vmatprep.subr.mxu0 0.0
        %2122 = vmatpush1.msra.mxu0 0.0
        %2123 = vmatprep.subr.mxu0 0.0
        %2124 = vmatpush1.msra.mxu0 0.0
        %2125 = vmatprep.subr.mxu0 0.0
        %2126 = vmatpush1.msra.mxu0 0.0
        %2127 = vmatprep.subr.mxu0 0.0
        %2128 = vmatpush1.msra.mxu0 0.0
        %2129 = vmatprep.subr.mxu0 0.0
        %2130 = vmatpush1.msra.mxu0 0.0
        %2131 = vmatprep.subr.mxu0 0.0
        %2132 = vmatpush1.msra.mxu0 0.0
        %2133 = vmatprep.subr.mxu0 0.0
        %2134 = vmatpush1.msra.mxu0 0.0
        %2135 = vmatprep.subr.mxu0 0.0
        %2136 = vmatpush1.msra.mxu0 0.0
        %2137 = vmatprep.subr.mxu0 0.0
        %2138 = vmatpush1.msra.mxu0 0.0
        %2139 = vmatprep.subr.mxu0 0.0
        %2140 = vmatpush1.msra.mxu0 0.0
        %2141 = vmatprep.subr.mxu0 0.0
        %2142 = vmatpush1.msra.mxu0 0.0
        %2143 = vmatprep.subr.mxu0 0.0
        %2144 = vmatpush1.msra.mxu0 0.0
        %2145 = vmatprep.subr.mxu0 0.0
        %2146 = vmatpush1.msra.mxu0 0.0
        %2147 = vmatprep.subr.mxu0 0.0
        %2148 = vmatpush1.msra.mxu0 0.0
        %2149 = vmatprep.subr.mxu0 0.0
        %2150 = vmatpush1.msra.mxu0 0.0
        %2151 = vmatprep.subr.mxu0 0.0
        %2152 = vmatpush1.msra.mxu0 0.0
        %2153 = vmatprep.subr.mxu0 0.0
        %2154 = vmatpush1.msra.mxu0 0.0
        %2155 = vmatprep.subr.mxu0 0.0
        %2156 = vmatpush1.msra.mxu0 0.0
        %2157 = vmatprep.subr.mxu0 0.0
        %2158 = vmatpush1.msra.mxu0 0.0
        %2159 = vmatprep.subr.mxu0 0.0
        %2160 = vmatpush1.msra.mxu0 0.0
        %2161 = vmatprep.subr.mxu0 0.0
        %2162 = vmatpush1.msra.mxu0 0.0
        %2163 = vmatprep.subr.mxu0 0.0
        %2164 = vmatpush1.msra.mxu0 0.0
        %2165 = vmatprep.subr.mxu0 0.0
        %2166 = vmatpush1.msra.mxu0 0.0
        %2167 = vmatprep.subr.mxu0 0.0
        %2168 = vmatpush1.msra.mxu0 0.0
        %2169 = vmatprep.subr.mxu0 0.0
        %2170 = vmatpush1.msra.mxu0 0.0
        %2171 = vmatprep.subr.mxu0 0.0
        %2172 = vmatpush1.msra.mxu0 0.0
        %2173 = vmatprep.subr.mxu0 0.0
        %2174 = vmatpush1.msra.mxu0 0.0
        %2175 = vmatprep.subr.mxu0 0.0
        %2176 = vmatpush1.msra.mxu0 0.0
        %2177 = vmatprep.subr.mxu0 0.0
        %2178 = vmatpush1.msra.mxu0 0.0
        %2179 = vmatprep.subr.mxu0 0.0
        %2180 = vmatpush1.msra.mxu0 0.0
        %2181 = vmatprep.mubr.f32.mxu0 0.0
        %2182 = vmatmul.mubr.f32.gmra.mrb[0].mxu0 %v2022
        %v2183 = vpop.f32.mrb[0].mxu0
        %v2184 = vadd.f32 0.0, %v2183
        %v2185 = vpop.f32.mrb[0].mxu0
        %2186 = vmatprep.mubr.f32.mxu0 0.0
        %2187 = vmatmul.mubr.f32.gmra.mrb[0].mxu0 %v2025
        %v2188 = vpop.f32.mrb[0].mxu0
        %v2189 = vadd.f32 0.0, %v2188
        %v2190 = vpop.f32.mrb[0].mxu0
        %2191 = vmatprep.mubr.f32.mxu0 0.0
        %2192 = vmatmul.mubr.f32.gmra.mrb[0].mxu0 %v2028
        %v2193 = vpop.f32.mrb[0].mxu0
        %v2194 = vadd.f32 0.0, %v2193
        %v2195 = vpop.f32.mrb[0].mxu0
        %2196 = vmatprep.mubr.f32.mxu0 0.0
        %2197 = vmatmul.mubr.f32.gmra.mrb[0].mxu0 %v2031
        %v2198 = vpop.f32.mrb[0].mxu0
        %v2199 = vadd.f32 0.0, %v2198
        %v2200 = vpop.f32.mrb[0].mxu0
        %2201 = vmatprep.mubr.f32.mxu0 0.0
        %2202 = vmatmul.mubr.f32.gmra.mrb[0].mxu0 %v2034
        %v2203 = vpop.f32.mrb[0].mxu0
        %v2204 = vadd.f32 0.0, %v2203
        %v2205 = vpop.f32.mrb[0].mxu0
        %2206 = vmatprep.mubr.f32.mxu0 0.0
        %2207 = vmatmul.mubr.f32.gmra.mrb[0].mxu0 %v2037
        %v2208 = vpop.f32.mrb[0].mxu0
        %v2209 = vadd.f32 0.0, %v2208
        %v2210 = vpop.f32.mrb[0].mxu0
        %2211 = vmatprep.mubr.f32.mxu0 0.0
        %2212 = vmatmul.mubr.f32.gmra.mrb[0].mxu0 %v2040
        %v2213 = vpop.f32.mrb[0].mxu0
        %v2214 = vadd.f32 0.0, %v2213
        %v2215 = vpop.f32.mrb[0].mxu0
        %2216 = vmatprep.mubr.f32.mxu0 0.0
        %2217 = vmatmul.mubr.f32.gmra.mrb[0].mxu0 %v2043
        %v2218 = vpop.f32.mrb[0].mxu0
        %v2219 = vadd.f32 0.0, %v2218
        %v2220 = vpop.f32.mrb[0].mxu0
        %2221 = vmatprep.mubr.f32.mxu0 0.0
        %2222 = vmatmul.mubr.f32.gmra.mrb[0].mxu0 %v2046
        %v2223 = vpop.f32.mrb[0].mxu0
        %v2224 = vadd.f32 0.0, %v2223
        %v2225 = vpop.f32.mrb[0].mxu0
        %2226 = vmatprep.mubr.f32.mxu0 0.0
        %2227 = vmatmul.mubr.f32.gmra.mrb[0].mxu0 %v2049
        %v2228 = vpop.f32.mrb[0].mxu0
        %v2229 = vadd.f32 0.0, %v2228
        %v2230 = vpop.f32.mrb[0].mxu0
        %2231 = vmatprep.mubr.f32.mxu0 0.0
        %2232 = vmatmul.mubr.f32.gmra.mrb[0].mxu0 %v2052
        %v2233 = vpop.f32.mrb[0].mxu0
        %v2234 = vadd.f32 0.0, %v2233
        %v2235 = vpop.f32.mrb[0].mxu0
        %2236 = vmatprep.mubr.f32.mxu0 0.0
        %2237 = vmatmul.mubr.f32.gmra.mrb[0].mxu0 %v2055
        %v2238 = vpop.f32.mrb[0].mxu0
        %v2239 = vadd.f32 0.0, %v2238
        %v2240 = vpop.f32.mrb[0].mxu0
        %2241 = vmatprep.mubr.f32.mxu0 0.0
        %2242 = vmatmul.mubr.f32.gmra.mrb[0].mxu0 %v2058
        %v2243 = vpop.f32.mrb[0].mxu0
        %v2244 = vadd.f32 0.0, %v2243
        %v2245 = vpop.f32.mrb[0].mxu0
        %2246 = vmatprep.mubr.f32.mxu0 0.0
        %2247 = vmatmul.mubr.f32.gmra.mrb[0].mxu0 %v2061
        %v2248 = vpop.f32.mrb[0].mxu0
        %v2249 = vadd.f32 0.0, %v2248
        %v2250 = vpop.f32.mrb[0].mxu0
        %2251 = vmatprep.mubr.f32.mxu0 0.0
        %2252 = vmatmul.mubr.f32.gmra.mrb[0].mxu0 %v2064
        %v2253 = vpop.f32.mrb[0].mxu0
        %v2254 = vadd.f32 0.0, %v2253
        %v2255 = vpop.f32.mrb[0].mxu0
        %2256 = vmatprep.mubr.f32.mxu0 0.0
        %2257 = vmatmul.mubr.f32.gmra.mrb[0].mxu0 %v2067
        %v2258 = vpop.f32.mrb[0].mxu0
        %v2259 = vadd.f32 0.0, %v2258
        %v2260 = vpop.f32.mrb[0].mxu0
        %2261 = vmatprep.mubr.f32.mxu0 0.0
        %2262 = vmatmul.mubr.f32.gmra.mrb[0].mxu0 %v2070
        %v2263 = vpop.f32.mrb[0].mxu0
        %v2264 = vadd.f32 0.0, %v2263
        %v2265 = vpop.f32.mrb[0].mxu0
        %2266 = vmatprep.mubr.f32.mxu0 0.0
        %2267 = vmatmul.mubr.f32.gmra.mrb[0].mxu0 %v2073
        %v2268 = vpop.f32.mrb[0].mxu0
        %v2269 = vadd.f32 0.0, %v2268
        %v2270 = vpop.f32.mrb[0].mxu0
        %2271 = vmatprep.mubr.f32.mxu0 0.0
        %2272 = vmatmul.mubr.f32.gmra.mrb[0].mxu0 %v2076
        %v2273 = vpop.f32.mrb[0].mxu0
        %v2274 = vadd.f32 0.0, %v2273
        %v2275 = vpop.f32.mrb[0].mxu0
        %2276 = vmatprep.mubr.f32.mxu0 0.0
        %2277 = vmatmul.mubr.f32.gmra.mrb[0].mxu0 %v2079
        %v2278 = vpop.f32.mrb[0].mxu0
        %v2279 = vadd.f32 0.0, %v2278
        %v2280 = vpop.f32.mrb[0].mxu0
        %2281 = vmatprep.mubr.f32.mxu0 0.0
        %2282 = vmatmul.mubr.f32.gmra.mrb[0].mxu0 %v2082
        %v2283 = vpop.f32.mrb[0].mxu0
        %v2284 = vadd.f32 0.0, %v2283
        %v2285 = vpop.f32.mrb[0].mxu0
        %2286 = vmatprep.mubr.f32.mxu0 0.0
        %2287 = vmatmul.mubr.f32.gmra.mrb[0].mxu0 %v2085
        %v2288 = vpop.f32.mrb[0].mxu0
        %v2289 = vadd.f32 0.0, %v2288
        %v2290 = vpop.f32.mrb[0].mxu0
        %2291 = vmatprep.mubr.f32.mxu0 0.0
        %2292 = vmatmul.mubr.f32.gmra.mrb[0].mxu0 %v2088
        %v2293 = vpop.f32.mrb[0].mxu0
        %v2294 = vadd.f32 0.0, %v2293
        %v2295 = vpop.f32.mrb[0].mxu0
        %2296 = vmatprep.mubr.f32.mxu0 0.0
        %2297 = vmatmul.mubr.f32.gmra.mrb[0].mxu0 %v2091
        %v2298 = vpop.f32.mrb[0].mxu0
        %v2299 = vadd.f32 0.0, %v2298
        %v2300 = vpop.f32.mrb[0].mxu0
        %2301 = vmatprep.mubr.f32.mxu0 0.0
        %2302 = vmatmul.mubr.f32.gmra.mrb[0].mxu0 %v2094
        %v2303 = vpop.f32.mrb[0].mxu0
        %v2304 = vadd.f32 0.0, %v2303
        %v2305 = vpop.f32.mrb[0].mxu0
        %2306 = vmatprep.mubr.f32.mxu0 0.0
        %2307 = vmatmul.mubr.f32.gmra.mrb[0].mxu0 %v2097
        %v2308 = vpop.f32.mrb[0].mxu0
        %v2309 = vadd.f32 0.0, %v2308
        %v2310 = vpop.f32.mrb[0].mxu0
        %2311 = vmatprep.mubr.f32.mxu0 0.0
        %2312 = vmatmul.mubr.f32.gmra.mrb[0].mxu0 %v2100
        %v2313 = vpop.f32.mrb[0].mxu0
        %v2314 = vadd.f32 0.0, %v2313
        %v2315 = vpop.f32.mrb[0].mxu0
        %2316 = vmatprep.mubr.f32.mxu0 0.0
        %2317 = vmatmul.mubr.f32.gmra.mrb[0].mxu0 %v2103
        %v2318 = vpop.f32.mrb[0].mxu0
        %v2319 = vadd.f32 0.0, %v2318
        %v2320 = vpop.f32.mrb[0].mxu0
        %2321 = vmatprep.mubr.f32.mxu0 0.0
        %2322 = vmatmul.mubr.f32.gmra.mrb[0].mxu0 %v2106
        %v2323 = vpop.f32.mrb[0].mxu0
        %v2324 = vadd.f32 0.0, %v2323
        %v2325 = vpop.f32.mrb[0].mxu0
        %2326 = vmatprep.mubr.f32.mxu0 0.0
        %2327 = vmatmul.mubr.f32.gmra.mrb[0].mxu0 %v2109
        %v2328 = vpop.f32.mrb[0].mxu0
        %v2329 = vadd.f32 0.0, %v2328
        %v2330 = vpop.f32.mrb[0].mxu0
        %2331 = vmatprep.mubr.f32.mxu0 0.0
        %2332 = vmatmul.mubr.f32.gmra.mrb[0].mxu0 %v2112
        %v2333 = vpop.f32.mrb[0].mxu0
        %v2334 = vadd.f32 0.0, %v2333
        %v2335 = vpop.f32.mrb[0].mxu0
        %2336 = vmatprep.mubr.f32.mxu0 0.0
        %2337 = vmatmul.mubr.f32.gmra.mrb[0].mxu0 %v2115
        %v2338 = vpop.f32.mrb[0].mxu0
        %v2339 = vadd.f32 0.0, %v2338
        %v2340 = vpop.f32.mrb[0].mxu0
        %2341 = vdwg.mxu0
        %v2342 = vadd.f32 %v1954, %v2184
        %v2343 = vadd.f32 %v1955, %v2189
        %v2344 = vadd.f32 %v1956, %v2194
        %v2345 = vadd.f32 %v1957, %v2199
        %v2346 = vadd.f32 %v1958, %v2204
        %v2347 = vadd.f32 %v1959, %v2209
        %v2348 = vadd.f32 %v1960, %v2214
        %v2349 = vadd.f32 %v1961, %v2219
        %v2350 = vadd.f32 %v1962, %v2224
        %v2351 = vadd.f32 %v1963, %v2229
        %v2352 = vadd.f32 %v1964, %v2234
        %v2353 = vadd.f32 %v1965, %v2239
        %v2354 = vadd.f32 %v1966, %v2244
        %v2355 = vadd.f32 %v1967, %v2249
        %v2356 = vadd.f32 %v1968, %v2254
        %v2357 = vadd.f32 %v1969, %v2259
        %v2358 = vadd.f32 %v1970, %v2264
        %v2359 = vadd.f32 %v1971, %v2269
        %v2360 = vadd.f32 %v1972, %v2274
        %v2361 = vadd.f32 %v1973, %v2279
        %v2362 = vadd.f32 %v1974, %v2284
        %v2363 = vadd.f32 %v1975, %v2289
        %v2364 = vadd.f32 %v1976, %v2294
        %v2365 = vadd.f32 %v1977, %v2299
        %v2366 = vadd.f32 %v1978, %v2304
        %v2367 = vadd.f32 %v1979, %v2309
        %v2368 = vadd.f32 %v1980, %v2314
        %v2369 = vadd.f32 %v1981, %v2319
        %v2370 = vadd.f32 %v1982, %v2324
        %v2371 = vadd.f32 %v1983, %v2329
        %v2372 = vadd.f32 %v1984, %v2334
        %v2373 = vadd.f32 %v1985, %v2339
        %v2374 = vld [vmem:[%s717 + $0x8] sm:$0xff]
        %v2375 = vld [vmem:[%s717 + $0x10] sm:$0xff]
        %v2376 = vld [vmem:[%s717 + $0x28] sm:$0xff]
        %v2377 = vld [vmem:[%s717 + $0x30] sm:$0xff]
        %v2378 = vld [vmem:[%s717 + $0x48] sm:$0xff]
        %v2379 = vld [vmem:[%s717 + $0x50] sm:$0xff]
        %v2380 = vld [vmem:[%s717 + $0x68] sm:$0xff]
        %v2381 = vld [vmem:[%s717 + $0x70] sm:$0xff]
        %v2382 = vld [vmem:[%s717 + $0x88] sm:$0xff]
        %v2383 = vld [vmem:[%s717 + $0x90] sm:$0xff]
        %v2384 = vld [vmem:[%s717 + $0xa8] sm:$0xff]
        %v2385 = vld [vmem:[%s717 + $0xb0] sm:$0xff]
        %v2386 = vld [vmem:[%s717 + $0xc8] sm:$0xff]
        %v2387 = vld [vmem:[%s717 + $0xd0] sm:$0xff]
        %v2388 = vld [vmem:[%s717 + $0xe8] sm:$0xff]
        %v2389 = vld [vmem:[%s717 + $0xf0] sm:$0xff]
        %v2390 = vld [vmem:[%s717 + $0x108] sm:$0xff]
        %v2391 = vld [vmem:[%s717 + $0x110] sm:$0xff]
        %v2392 = vld [vmem:[%s717 + $0x128] sm:$0xff]
        %v2393 = vld [vmem:[%s717 + $0x130] sm:$0xff]
        %v2394 = vld [vmem:[%s717 + $0x148] sm:$0xff]
        %v2395 = vld [vmem:[%s717 + $0x150] sm:$0xff]
        %v2396 = vld [vmem:[%s717 + $0x168] sm:$0xff]
        %v2397 = vld [vmem:[%s717 + $0x170] sm:$0xff]
        %v2398 = vld [vmem:[%s717 + $0x188] sm:$0xff]
        %v2399 = vld [vmem:[%s717 + $0x190] sm:$0xff]
        %v2400 = vld [vmem:[%s717 + $0x1a8] sm:$0xff]
        %v2401 = vld [vmem:[%s717 + $0x1b0] sm:$0xff]
        %v2402 = vld [vmem:[%s717 + $0x1c8] sm:$0xff]
        %v2403 = vld [vmem:[%s717 + $0x1d0] sm:$0xff]
        %v2404 = vld [vmem:[%s717 + $0x1e8] sm:$0xff]
        %v2405 = vld [vmem:[%s717 + $0x1f0] sm:$0xff]
        %s2406 = scalar_lea.vmem %s3, 64
        %v2407 = vld [vmem:[%s2406] sm:$0xff]
        %v2408 = vld [vmem:[%s2406 + $0x8] sm:$0xff]
        %v2410 = vsel %vm644, %v2374, 0
        %v2413 = vsel %vm644, %v2375, 0
        %v2416 = vsel %vm644, %v2376, 0
        %v2419 = vsel %vm644, %v2377, 0
        %v2422 = vsel %vm644, %v2378, 0
        %v2425 = vsel %vm644, %v2379, 0
        %v2428 = vsel %vm644, %v2380, 0
        %v2431 = vsel %vm644, %v2381, 0
        %v2434 = vsel %vm644, %v2382, 0
        %v2437 = vsel %vm644, %v2383, 0
        %v2440 = vsel %vm644, %v2384, 0
        %v2443 = vsel %vm644, %v2385, 0
        %v2446 = vsel %vm644, %v2386, 0
        %v2449 = vsel %vm644, %v2387, 0
        %v2452 = vsel %vm644, %v2388, 0
        %v2455 = vsel %vm644, %v2389, 0
        %v2458 = vsel %vm644, %v2390, 0
        %v2461 = vsel %vm644, %v2391, 0
        %v2464 = vsel %vm644, %v2392, 0
        %v2467 = vsel %vm644, %v2393, 0
        %v2470 = vsel %vm644, %v2394, 0
        %v2473 = vsel %vm644, %v2395, 0
        %v2476 = vsel %vm644, %v2396, 0
        %v2479 = vsel %vm644, %v2397, 0
        %v2482 = vsel %vm644, %v2398, 0
        %v2485 = vsel %vm644, %v2399, 0
        %v2488 = vsel %vm644, %v2400, 0
        %v2491 = vsel %vm644, %v2401, 0
        %v2494 = vsel %vm644, %v2402, 0
        %v2497 = vsel %vm644, %v2403, 0
        %v2500 = vsel %vm644, %v2404, 0
        %v2503 = vsel %vm644, %v2405, 0
        %2505 = vmatprep.subr.mxu0 0.0
        %2506 = vmatpush1.msra.mxu0 %v2407
        %2507 = vmatprep.subr.mxu0 0.0
        %2508 = vmatpush1.msra.mxu0 %v2408
        %2509 = vmatprep.subr.mxu0 0.0
        %2510 = vmatpush1.msra.mxu0 0.0
        %2511 = vmatprep.subr.mxu0 0.0
        %2512 = vmatpush1.msra.mxu0 0.0
        %2513 = vmatprep.subr.mxu0 0.0
        %2514 = vmatpush1.msra.mxu0 0.0
        %2515 = vmatprep.subr.mxu0 0.0
        %2516 = vmatpush1.msra.mxu0 0.0
        %2517 = vmatprep.subr.mxu0 0.0
        %2518 = vmatpush1.msra.mxu0 0.0
        %2519 = vmatprep.subr.mxu0 0.0
        %2520 = vmatpush1.msra.mxu0 0.0
        %2521 = vmatprep.subr.mxu0 0.0
        %2522 = vmatpush1.msra.mxu0 0.0
        %2523 = vmatprep.subr.mxu0 0.0
        %2524 = vmatpush1.msra.mxu0 0.0
        %2525 = vmatprep.subr.mxu0 0.0
        %2526 = vmatpush1.msra.mxu0 0.0
        %2527 = vmatprep.subr.mxu0 0.0
        %2528 = vmatpush1.msra.mxu0 0.0
        %2529 = vmatprep.subr.mxu0 0.0
        %2530 = vmatpush1.msra.mxu0 0.0
        %2531 = vmatprep.subr.mxu0 0.0
        %2532 = vmatpush1.msra.mxu0 0.0
        %2533 = vmatprep.subr.mxu0 0.0
        %2534 = vmatpush1.msra.mxu0 0.0
        %2535 = vmatprep.subr.mxu0 0.0
        %2536 = vmatpush1.msra.mxu0 0.0
        %2537 = vmatprep.subr.mxu0 0.0
        %2538 = vmatpush1.msra.mxu0 0.0
        %2539 = vmatprep.subr.mxu0 0.0
        %2540 = vmatpush1.msra.mxu0 0.0
        %2541 = vmatprep.subr.mxu0 0.0
        %2542 = vmatpush1.msra.mxu0 0.0
        %2543 = vmatprep.subr.mxu0 0.0
        %2544 = vmatpush1.msra.mxu0 0.0
        %2545 = vmatprep.subr.mxu0 0.0
        %2546 = vmatpush1.msra.mxu0 0.0
        %2547 = vmatprep.subr.mxu0 0.0
        %2548 = vmatpush1.msra.mxu0 0.0
        %2549 = vmatprep.subr.mxu0 0.0
        %2550 = vmatpush1.msra.mxu0 0.0
        %2551 = vmatprep.subr.mxu0 0.0
        %2552 = vmatpush1.msra.mxu0 0.0
        %2553 = vmatprep.subr.mxu0 0.0
        %2554 = vmatpush1.msra.mxu0 0.0
        %2555 = vmatprep.subr.mxu0 0.0
        %2556 = vmatpush1.msra.mxu0 0.0
        %2557 = vmatprep.subr.mxu0 0.0
        %2558 = vmatpush1.msra.mxu0 0.0
        %2559 = vmatprep.subr.mxu0 0.0
        %2560 = vmatpush1.msra.mxu0 0.0
        %2561 = vmatprep.subr.mxu0 0.0
        %2562 = vmatpush1.msra.mxu0 0.0
        %2563 = vmatprep.subr.mxu0 0.0
        %2564 = vmatpush1.msra.mxu0 0.0
        %2565 = vmatprep.subr.mxu0 0.0
        %2566 = vmatpush1.msra.mxu0 0.0
        %2567 = vmatprep.subr.mxu0 0.0
        %2568 = vmatpush1.msra.mxu0 0.0
        %2569 = vmatprep.mubr.f32.mxu0 0.0
        %2570 = vmatmul.mubr.f32.gmra.mrb[0].mxu0 %v2410
        %v2571 = vpop.f32.mrb[0].mxu0
        %v2572 = vadd.f32 0.0, %v2571
        %v2573 = vpop.f32.mrb[0].mxu0
        %2574 = vmatprep.mubr.f32.mxu0 0.0
        %2575 = vmatmul.mubr.f32.gmra.mrb[0].mxu0 %v2413
        %v2576 = vpop.f32.mrb[0].mxu0
        %v2577 = vadd.f32 0.0, %v2576
        %v2578 = vpop.f32.mrb[0].mxu0
        %2579 = vmatprep.mubr.f32.mxu0 0.0
        %2580 = vmatmul.mubr.f32.gmra.mrb[0].mxu0 %v2416
        %v2581 = vpop.f32.mrb[0].mxu0
        %v2582 = vadd.f32 0.0, %v2581
        %v2583 = vpop.f32.mrb[0].mxu0
        %2584 = vmatprep.mubr.f32.mxu0 0.0
        %2585 = vmatmul.mubr.f32.gmra.mrb[0].mxu0 %v2419
        %v2586 = vpop.f32.mrb[0].mxu0
        %v2587 = vadd.f32 0.0, %v2586
        %v2588 = vpop.f32.mrb[0].mxu0
        %2589 = vmatprep.mubr.f32.mxu0 0.0
        %2590 = vmatmul.mubr.f32.gmra.mrb[0].mxu0 %v2422
        %v2591 = vpop.f32.mrb[0].mxu0
        %v2592 = vadd.f32 0.0, %v2591
        %v2593 = vpop.f32.mrb[0].mxu0
        %2594 = vmatprep.mubr.f32.mxu0 0.0
        %2595 = vmatmul.mubr.f32.gmra.mrb[0].mxu0 %v2425
        %v2596 = vpop.f32.mrb[0].mxu0
        %v2597 = vadd.f32 0.0, %v2596
        %v2598 = vpop.f32.mrb[0].mxu0
        %2599 = vmatprep.mubr.f32.mxu0 0.0
        %2600 = vmatmul.mubr.f32.gmra.mrb[0].mxu0 %v2428
        %v2601 = vpop.f32.mrb[0].mxu0
        %v2602 = vadd.f32 0.0, %v2601
        %v2603 = vpop.f32.mrb[0].mxu0
        %2604 = vmatprep.mubr.f32.mxu0 0.0
        %2605 = vmatmul.mubr.f32.gmra.mrb[0].mxu0 %v2431
        %v2606 = vpop.f32.mrb[0].mxu0
        %v2607 = vadd.f32 0.0, %v2606
        %v2608 = vpop.f32.mrb[0].mxu0
        %2609 = vmatprep.mubr.f32.mxu0 0.0
        %2610 = vmatmul.mubr.f32.gmra.mrb[0].mxu0 %v2434
        %v2611 = vpop.f32.mrb[0].mxu0
        %v2612 = vadd.f32 0.0, %v2611
        %v2613 = vpop.f32.mrb[0].mxu0
        %2614 = vmatprep.mubr.f32.mxu0 0.0
        %2615 = vmatmul.mubr.f32.gmra.mrb[0].mxu0 %v2437
        %v2616 = vpop.f32.mrb[0].mxu0
        %v2617 = vadd.f32 0.0, %v2616
        %v2618 = vpop.f32.mrb[0].mxu0
        %2619 = vmatprep.mubr.f32.mxu0 0.0
        %2620 = vmatmul.mubr.f32.gmra.mrb[0].mxu0 %v2440
        %v2621 = vpop.f32.mrb[0].mxu0
        %v2622 = vadd.f32 0.0, %v2621
        %v2623 = vpop.f32.mrb[0].mxu0
        %2624 = vmatprep.mubr.f32.mxu0 0.0
        %2625 = vmatmul.mubr.f32.gmra.mrb[0].mxu0 %v2443
        %v2626 = vpop.f32.mrb[0].mxu0
        %v2627 = vadd.f32 0.0, %v2626
        %v2628 = vpop.f32.mrb[0].mxu0
        %2629 = vmatprep.mubr.f32.mxu0 0.0
        %2630 = vmatmul.mubr.f32.gmra.mrb[0].mxu0 %v2446
        %v2631 = vpop.f32.mrb[0].mxu0
        %v2632 = vadd.f32 0.0, %v2631
        %v2633 = vpop.f32.mrb[0].mxu0
        %2634 = vmatprep.mubr.f32.mxu0 0.0
        %2635 = vmatmul.mubr.f32.gmra.mrb[0].mxu0 %v2449
        %v2636 = vpop.f32.mrb[0].mxu0
        %v2637 = vadd.f32 0.0, %v2636
        %v2638 = vpop.f32.mrb[0].mxu0
        %2639 = vmatprep.mubr.f32.mxu0 0.0
        %2640 = vmatmul.mubr.f32.gmra.mrb[0].mxu0 %v2452
        %v2641 = vpop.f32.mrb[0].mxu0
        %v2642 = vadd.f32 0.0, %v2641
        %v2643 = vpop.f32.mrb[0].mxu0
        %2644 = vmatprep.mubr.f32.mxu0 0.0
        %2645 = vmatmul.mubr.f32.gmra.mrb[0].mxu0 %v2455
        %v2646 = vpop.f32.mrb[0].mxu0
        %v2647 = vadd.f32 0.0, %v2646
        %v2648 = vpop.f32.mrb[0].mxu0
        %2649 = vmatprep.mubr.f32.mxu0 0.0
        %2650 = vmatmul.mubr.f32.gmra.mrb[0].mxu0 %v2458
        %v2651 = vpop.f32.mrb[0].mxu0
        %v2652 = vadd.f32 0.0, %v2651
        %v2653 = vpop.f32.mrb[0].mxu0
        %2654 = vmatprep.mubr.f32.mxu0 0.0
        %2655 = vmatmul.mubr.f32.gmra.mrb[0].mxu0 %v2461
        %v2656 = vpop.f32.mrb[0].mxu0
        %v2657 = vadd.f32 0.0, %v2656
        %v2658 = vpop.f32.mrb[0].mxu0
        %2659 = vmatprep.mubr.f32.mxu0 0.0
        %2660 = vmatmul.mubr.f32.gmra.mrb[0].mxu0 %v2464
        %v2661 = vpop.f32.mrb[0].mxu0
        %v2662 = vadd.f32 0.0, %v2661
        %v2663 = vpop.f32.mrb[0].mxu0
        %2664 = vmatprep.mubr.f32.mxu0 0.0
        %2665 = vmatmul.mubr.f32.gmra.mrb[0].mxu0 %v2467
        %v2666 = vpop.f32.mrb[0].mxu0
        %v2667 = vadd.f32 0.0, %v2666
        %v2668 = vpop.f32.mrb[0].mxu0
        %2669 = vmatprep.mubr.f32.mxu0 0.0
        %2670 = vmatmul.mubr.f32.gmra.mrb[0].mxu0 %v2470
        %v2671 = vpop.f32.mrb[0].mxu0
        %v2672 = vadd.f32 0.0, %v2671
        %v2673 = vpop.f32.mrb[0].mxu0
        %2674 = vmatprep.mubr.f32.mxu0 0.0
        %2675 = vmatmul.mubr.f32.gmra.mrb[0].mxu0 %v2473
        %v2676 = vpop.f32.mrb[0].mxu0
        %v2677 = vadd.f32 0.0, %v2676
        %v2678 = vpop.f32.mrb[0].mxu0
        %2679 = vmatprep.mubr.f32.mxu0 0.0
        %2680 = vmatmul.mubr.f32.gmra.mrb[0].mxu0 %v2476
        %v2681 = vpop.f32.mrb[0].mxu0
        %v2682 = vadd.f32 0.0, %v2681
        %v2683 = vpop.f32.mrb[0].mxu0
        %2684 = vmatprep.mubr.f32.mxu0 0.0
        %2685 = vmatmul.mubr.f32.gmra.mrb[0].mxu0 %v2479
        %v2686 = vpop.f32.mrb[0].mxu0
        %v2687 = vadd.f32 0.0, %v2686
        %v2688 = vpop.f32.mrb[0].mxu0
        %2689 = vmatprep.mubr.f32.mxu0 0.0
        %2690 = vmatmul.mubr.f32.gmra.mrb[0].mxu0 %v2482
        %v2691 = vpop.f32.mrb[0].mxu0
        %v2692 = vadd.f32 0.0, %v2691
        %v2693 = vpop.f32.mrb[0].mxu0
        %2694 = vmatprep.mubr.f32.mxu0 0.0
        %2695 = vmatmul.mubr.f32.gmra.mrb[0].mxu0 %v2485
        %v2696 = vpop.f32.mrb[0].mxu0
        %v2697 = vadd.f32 0.0, %v2696
        %v2698 = vpop.f32.mrb[0].mxu0
        %2699 = vmatprep.mubr.f32.mxu0 0.0
        %2700 = vmatmul.mubr.f32.gmra.mrb[0].mxu0 %v2488
        %v2701 = vpop.f32.mrb[0].mxu0
        %v2702 = vadd.f32 0.0, %v2701
        %v2703 = vpop.f32.mrb[0].mxu0
        %2704 = vmatprep.mubr.f32.mxu0 0.0
        %2705 = vmatmul.mubr.f32.gmra.mrb[0].mxu0 %v2491
        %v2706 = vpop.f32.mrb[0].mxu0
        %v2707 = vadd.f32 0.0, %v2706
        %v2708 = vpop.f32.mrb[0].mxu0
        %2709 = vmatprep.mubr.f32.mxu0 0.0
        %2710 = vmatmul.mubr.f32.gmra.mrb[0].mxu0 %v2494
        %v2711 = vpop.f32.mrb[0].mxu0
        %v2712 = vadd.f32 0.0, %v2711
        %v2713 = vpop.f32.mrb[0].mxu0
        %2714 = vmatprep.mubr.f32.mxu0 0.0
        %2715 = vmatmul.mubr.f32.gmra.mrb[0].mxu0 %v2497
        %v2716 = vpop.f32.mrb[0].mxu0
        %v2717 = vadd.f32 0.0, %v2716
        %v2718 = vpop.f32.mrb[0].mxu0
        %2719 = vmatprep.mubr.f32.mxu0 0.0
        %2720 = vmatmul.mubr.f32.gmra.mrb[0].mxu0 %v2500
        %v2721 = vpop.f32.mrb[0].mxu0
        %v2722 = vadd.f32 0.0, %v2721
        %v2723 = vpop.f32.mrb[0].mxu0
        %2724 = vmatprep.mubr.f32.mxu0 0.0
        %2725 = vmatmul.mubr.f32.gmra.mrb[0].mxu0 %v2503
        %v2726 = vpop.f32.mrb[0].mxu0
        %v2727 = vadd.f32 0.0, %v2726
        %v2728 = vpop.f32.mrb[0].mxu0
        %2729 = vdwg.mxu0
        %v2730 = vadd.f32 %v2342, %v2572
        %v2731 = vadd.f32 %v2343, %v2577
        %v2732 = vadd.f32 %v2344, %v2582
        %v2733 = vadd.f32 %v2345, %v2587
        %v2734 = vadd.f32 %v2346, %v2592
        %v2735 = vadd.f32 %v2347, %v2597
        %v2736 = vadd.f32 %v2348, %v2602
        %v2737 = vadd.f32 %v2349, %v2607
        %v2738 = vadd.f32 %v2350, %v2612
        %v2739 = vadd.f32 %v2351, %v2617
        %v2740 = vadd.f32 %v2352, %v2622
        %v2741 = vadd.f32 %v2353, %v2627
        %v2742 = vadd.f32 %v2354, %v2632
        %v2743 = vadd.f32 %v2355, %v2637
        %v2744 = vadd.f32 %v2356, %v2642
        %v2745 = vadd.f32 %v2357, %v2647
        %v2746 = vadd.f32 %v2358, %v2652
        %v2747 = vadd.f32 %v2359, %v2657
        %v2748 = vadd.f32 %v2360, %v2662
        %v2749 = vadd.f32 %v2361, %v2667
        %v2750 = vadd.f32 %v2362, %v2672
        %v2751 = vadd.f32 %v2363, %v2677
        %v2752 = vadd.f32 %v2364, %v2682
        %v2753 = vadd.f32 %v2365, %v2687
        %v2754 = vadd.f32 %v2366, %v2692
        %v2755 = vadd.f32 %v2367, %v2697
        %v2756 = vadd.f32 %v2368, %v2702
        %v2757 = vadd.f32 %v2369, %v2707
        %v2758 = vadd.f32 %v2370, %v2712
        %v2759 = vadd.f32 %v2371, %v2717
        %v2760 = vadd.f32 %v2372, %v2722
        %v2761 = vadd.f32 %v2373, %v2727
        %v2762 = vld [vmem:[%s717 + $0x9] sm:$0xff]
        %v2763 = vld [vmem:[%s717 + $0x11] sm:$0xff]
        %v2764 = vld [vmem:[%s717 + $0x29] sm:$0xff]
        %v2765 = vld [vmem:[%s717 + $0x31] sm:$0xff]
        %v2766 = vld [vmem:[%s717 + $0x49] sm:$0xff]
        %v2767 = vld [vmem:[%s717 + $0x51] sm:$0xff]
        %v2768 = vld [vmem:[%s717 + $0x69] sm:$0xff]
        %v2769 = vld [vmem:[%s717 + $0x71] sm:$0xff]
        %v2770 = vld [vmem:[%s717 + $0x89] sm:$0xff]
        %v2771 = vld [vmem:[%s717 + $0x91] sm:$0xff]
        %v2772 = vld [vmem:[%s717 + $0xa9] sm:$0xff]
        %v2773 = vld [vmem:[%s717 + $0xb1] sm:$0xff]
        %v2774 = vld [vmem:[%s717 + $0xc9] sm:$0xff]
        %v2775 = vld [vmem:[%s717 + $0xd1] sm:$0xff]
        %v2776 = vld [vmem:[%s717 + $0xe9] sm:$0xff]
        %v2777 = vld [vmem:[%s717 + $0xf1] sm:$0xff]
        %v2778 = vld [vmem:[%s717 + $0x109] sm:$0xff]
        %v2779 = vld [vmem:[%s717 + $0x111] sm:$0xff]
        %v2780 = vld [vmem:[%s717 + $0x129] sm:$0xff]
        %v2781 = vld [vmem:[%s717 + $0x131] sm:$0xff]
        %v2782 = vld [vmem:[%s717 + $0x149] sm:$0xff]
        %v2783 = vld [vmem:[%s717 + $0x151] sm:$0xff]
        %v2784 = vld [vmem:[%s717 + $0x169] sm:$0xff]
        %v2785 = vld [vmem:[%s717 + $0x171] sm:$0xff]
        %v2786 = vld [vmem:[%s717 + $0x189] sm:$0xff]
        %v2787 = vld [vmem:[%s717 + $0x191] sm:$0xff]
        %v2788 = vld [vmem:[%s717 + $0x1a9] sm:$0xff]
        %v2789 = vld [vmem:[%s717 + $0x1b1] sm:$0xff]
        %v2790 = vld [vmem:[%s717 + $0x1c9] sm:$0xff]
        %v2791 = vld [vmem:[%s717 + $0x1d1] sm:$0xff]
        %v2792 = vld [vmem:[%s717 + $0x1e9] sm:$0xff]
        %v2793 = vld [vmem:[%s717 + $0x1f1] sm:$0xff]
        %s2794 = scalar_lea.vmem %s3, 80
        %v2795 = vld [vmem:[%s2794] sm:$0xff]
        %v2796 = vld [vmem:[%s2794 + $0x8] sm:$0xff]
        %v2798 = vsel %vm644, %v2762, 0
        %v2801 = vsel %vm644, %v2763, 0
        %v2804 = vsel %vm644, %v2764, 0
        %v2807 = vsel %vm644, %v2765, 0
        %v2810 = vsel %vm644, %v2766, 0
        %v2813 = vsel %vm644, %v2767, 0
        %v2816 = vsel %vm644, %v2768, 0
        %v2819 = vsel %vm644, %v2769, 0
        %v2822 = vsel %vm644, %v2770, 0
        %v2825 = vsel %vm644, %v2771, 0
        %v2828 = vsel %vm644, %v2772, 0
        %v2831 = vsel %vm644, %v2773, 0
        %v2834 = vsel %vm644, %v2774, 0
        %v2837 = vsel %vm644, %v2775, 0
        %v2840 = vsel %vm644, %v2776, 0
        %v2843 = vsel %vm644, %v2777, 0
        %v2846 = vsel %vm644, %v2778, 0
        %v2849 = vsel %vm644, %v2779, 0
        %v2852 = vsel %vm644, %v2780, 0
        %v2855 = vsel %vm644, %v2781, 0
        %v2858 = vsel %vm644, %v2782, 0
        %v2861 = vsel %vm644, %v2783, 0
        %v2864 = vsel %vm644, %v2784, 0
        %v2867 = vsel %vm644, %v2785, 0
        %v2870 = vsel %vm644, %v2786, 0
        %v2873 = vsel %vm644, %v2787, 0
        %v2876 = vsel %vm644, %v2788, 0
        %v2879 = vsel %vm644, %v2789, 0
        %v2882 = vsel %vm644, %v2790, 0
        %v2885 = vsel %vm644, %v2791, 0
        %v2888 = vsel %vm644, %v2792, 0
        %v2891 = vsel %vm644, %v2793, 0
        %2893 = vmatprep.subr.mxu0 0.0
        %2894 = vmatpush1.msra.mxu0 %v2795
        %2895 = vmatprep.subr.mxu0 0.0
        %2896 = vmatpush1.msra.mxu0 %v2796
        %2897 = vmatprep.subr.mxu0 0.0
        %2898 = vmatpush1.msra.mxu0 0.0
        %2899 = vmatprep.subr.mxu0 0.0
        %2900 = vmatpush1.msra.mxu0 0.0
        %2901 = vmatprep.subr.mxu0 0.0
        %2902 = vmatpush1.msra.mxu0 0.0
        %2903 = vmatprep.subr.mxu0 0.0
        %2904 = vmatpush1.msra.mxu0 0.0
        %2905 = vmatprep.subr.mxu0 0.0
        %2906 = vmatpush1.msra.mxu0 0.0
        %2907 = vmatprep.subr.mxu0 0.0
        %2908 = vmatpush1.msra.mxu0 0.0
        %2909 = vmatprep.subr.mxu0 0.0
        %2910 = vmatpush1.msra.mxu0 0.0
        %2911 = vmatprep.subr.mxu0 0.0
        %2912 = vmatpush1.msra.mxu0 0.0
        %2913 = vmatprep.subr.mxu0 0.0
        %2914 = vmatpush1.msra.mxu0 0.0
        %2915 = vmatprep.subr.mxu0 0.0
        %2916 = vmatpush1.msra.mxu0 0.0
        %2917 = vmatprep.subr.mxu0 0.0
        %2918 = vmatpush1.msra.mxu0 0.0
        %2919 = vmatprep.subr.mxu0 0.0
        %2920 = vmatpush1.msra.mxu0 0.0
        %2921 = vmatprep.subr.mxu0 0.0
        %2922 = vmatpush1.msra.mxu0 0.0
        %2923 = vmatprep.subr.mxu0 0.0
        %2924 = vmatpush1.msra.mxu0 0.0
        %2925 = vmatprep.subr.mxu0 0.0
        %2926 = vmatpush1.msra.mxu0 0.0
        %2927 = vmatprep.subr.mxu0 0.0
        %2928 = vmatpush1.msra.mxu0 0.0
        %2929 = vmatprep.subr.mxu0 0.0
        %2930 = vmatpush1.msra.mxu0 0.0
        %2931 = vmatprep.subr.mxu0 0.0
        %2932 = vmatpush1.msra.mxu0 0.0
        %2933 = vmatprep.subr.mxu0 0.0
        %2934 = vmatpush1.msra.mxu0 0.0
        %2935 = vmatprep.subr.mxu0 0.0
        %2936 = vmatpush1.msra.mxu0 0.0
        %2937 = vmatprep.subr.mxu0 0.0
        %2938 = vmatpush1.msra.mxu0 0.0
        %2939 = vmatprep.subr.mxu0 0.0
        %2940 = vmatpush1.msra.mxu0 0.0
        %2941 = vmatprep.subr.mxu0 0.0
        %2942 = vmatpush1.msra.mxu0 0.0
        %2943 = vmatprep.subr.mxu0 0.0
        %2944 = vmatpush1.msra.mxu0 0.0
        %2945 = vmatprep.subr.mxu0 0.0
        %2946 = vmatpush1.msra.mxu0 0.0
        %2947 = vmatprep.subr.mxu0 0.0
        %2948 = vmatpush1.msra.mxu0 0.0
        %2949 = vmatprep.subr.mxu0 0.0
        %2950 = vmatpush1.msra.mxu0 0.0
        %2951 = vmatprep.subr.mxu0 0.0
        %2952 = vmatpush1.msra.mxu0 0.0
        %2953 = vmatprep.subr.mxu0 0.0
        %2954 = vmatpush1.msra.mxu0 0.0
        %2955 = vmatprep.subr.mxu0 0.0
        %2956 = vmatpush1.msra.mxu0 0.0
        %2957 = vmatprep.mubr.f32.mxu0 0.0
        %2958 = vmatmul.mubr.f32.gmra.mrb[0].mxu0 %v2798
        %v2959 = vpop.f32.mrb[0].mxu0
        %v2960 = vadd.f32 0.0, %v2959
        %v2961 = vpop.f32.mrb[0].mxu0
        %2962 = vmatprep.mubr.f32.mxu0 0.0
        %2963 = vmatmul.mubr.f32.gmra.mrb[0].mxu0 %v2801
        %v2964 = vpop.f32.mrb[0].mxu0
        %v2965 = vadd.f32 0.0, %v2964
        %v2966 = vpop.f32.mrb[0].mxu0
        %2967 = vmatprep.mubr.f32.mxu0 0.0
        %2968 = vmatmul.mubr.f32.gmra.mrb[0].mxu0 %v2804
        %v2969 = vpop.f32.mrb[0].mxu0
        %v2970 = vadd.f32 0.0, %v2969
        %v2971 = vpop.f32.mrb[0].mxu0
        %2972 = vmatprep.mubr.f32.mxu0 0.0
        %2973 = vmatmul.mubr.f32.gmra.mrb[0].mxu0 %v2807
        %v2974 = vpop.f32.mrb[0].mxu0
        %v2975 = vadd.f32 0.0, %v2974
        %v2976 = vpop.f32.mrb[0].mxu0
        %2977 = vmatprep.mubr.f32.mxu0 0.0
        %2978 = vmatmul.mubr.f32.gmra.mrb[0].mxu0 %v2810
        %v2979 = vpop.f32.mrb[0].mxu0
        %v2980 = vadd.f32 0.0, %v2979
        %v2981 = vpop.f32.mrb[0].mxu0
        %2982 = vmatprep.mubr.f32.mxu0 0.0
        %2983 = vmatmul.mubr.f32.gmra.mrb[0].mxu0 %v2813
        %v2984 = vpop.f32.mrb[0].mxu0
        %v2985 = vadd.f32 0.0, %v2984
        %v2986 = vpop.f32.mrb[0].mxu0
        %2987 = vmatprep.mubr.f32.mxu0 0.0
        %2988 = vmatmul.mubr.f32.gmra.mrb[0].mxu0 %v2816
        %v2989 = vpop.f32.mrb[0].mxu0
        %v2990 = vadd.f32 0.0, %v2989
        %v2991 = vpop.f32.mrb[0].mxu0
        %2992 = vmatprep.mubr.f32.mxu0 0.0
        %2993 = vmatmul.mubr.f32.gmra.mrb[0].mxu0 %v2819
        %v2994 = vpop.f32.mrb[0].mxu0
        %v2995 = vadd.f32 0.0, %v2994
        %v2996 = vpop.f32.mrb[0].mxu0
        %2997 = vmatprep.mubr.f32.mxu0 0.0
        %2998 = vmatmul.mubr.f32.gmra.mrb[0].mxu0 %v2822
        %v2999 = vpop.f32.mrb[0].mxu0
        %v3000 = vadd.f32 0.0, %v2999
        %v3001 = vpop.f32.mrb[0].mxu0
        %3002 = vmatprep.mubr.f32.mxu0 0.0
        %3003 = vmatmul.mubr.f32.gmra.mrb[0].mxu0 %v2825
        %v3004 = vpop.f32.mrb[0].mxu0
        %v3005 = vadd.f32 0.0, %v3004
        %v3006 = vpop.f32.mrb[0].mxu0
        %3007 = vmatprep.mubr.f32.mxu0 0.0
        %3008 = vmatmul.mubr.f32.gmra.mrb[0].mxu0 %v2828
        %v3009 = vpop.f32.mrb[0].mxu0
        %v3010 = vadd.f32 0.0, %v3009
        %v3011 = vpop.f32.mrb[0].mxu0
        %3012 = vmatprep.mubr.f32.mxu0 0.0
        %3013 = vmatmul.mubr.f32.gmra.mrb[0].mxu0 %v2831
        %v3014 = vpop.f32.mrb[0].mxu0
        %v3015 = vadd.f32 0.0, %v3014
        %v3016 = vpop.f32.mrb[0].mxu0
        %3017 = vmatprep.mubr.f32.mxu0 0.0
        %3018 = vmatmul.mubr.f32.gmra.mrb[0].mxu0 %v2834
        %v3019 = vpop.f32.mrb[0].mxu0
        %v3020 = vadd.f32 0.0, %v3019
        %v3021 = vpop.f32.mrb[0].mxu0
        %3022 = vmatprep.mubr.f32.mxu0 0.0
        %3023 = vmatmul.mubr.f32.gmra.mrb[0].mxu0 %v2837
        %v3024 = vpop.f32.mrb[0].mxu0
        %v3025 = vadd.f32 0.0, %v3024
        %v3026 = vpop.f32.mrb[0].mxu0
        %3027 = vmatprep.mubr.f32.mxu0 0.0
        %3028 = vmatmul.mubr.f32.gmra.mrb[0].mxu0 %v2840
        %v3029 = vpop.f32.mrb[0].mxu0
        %v3030 = vadd.f32 0.0, %v3029
        %v3031 = vpop.f32.mrb[0].mxu0
        %3032 = vmatprep.mubr.f32.mxu0 0.0
        %3033 = vmatmul.mubr.f32.gmra.mrb[0].mxu0 %v2843
        %v3034 = vpop.f32.mrb[0].mxu0
        %v3035 = vadd.f32 0.0, %v3034
        %v3036 = vpop.f32.mrb[0].mxu0
        %3037 = vmatprep.mubr.f32.mxu0 0.0
        %3038 = vmatmul.mubr.f32.gmra.mrb[0].mxu0 %v2846
        %v3039 = vpop.f32.mrb[0].mxu0
        %v3040 = vadd.f32 0.0, %v3039
        %v3041 = vpop.f32.mrb[0].mxu0
        %3042 = vmatprep.mubr.f32.mxu0 0.0
        %3043 = vmatmul.mubr.f32.gmra.mrb[0].mxu0 %v2849
        %v3044 = vpop.f32.mrb[0].mxu0
        %v3045 = vadd.f32 0.0, %v3044
        %v3046 = vpop.f32.mrb[0].mxu0
        %3047 = vmatprep.mubr.f32.mxu0 0.0
        %3048 = vmatmul.mubr.f32.gmra.mrb[0].mxu0 %v2852
        %v3049 = vpop.f32.mrb[0].mxu0
        %v3050 = vadd.f32 0.0, %v3049
        %v3051 = vpop.f32.mrb[0].mxu0
        %3052 = vmatprep.mubr.f32.mxu0 0.0
        %3053 = vmatmul.mubr.f32.gmra.mrb[0].mxu0 %v2855
        %v3054 = vpop.f32.mrb[0].mxu0
        %v3055 = vadd.f32 0.0, %v3054
        %v3056 = vpop.f32.mrb[0].mxu0
        %3057 = vmatprep.mubr.f32.mxu0 0.0
        %3058 = vmatmul.mubr.f32.gmra.mrb[0].mxu0 %v2858
        %v3059 = vpop.f32.mrb[0].mxu0
        %v3060 = vadd.f32 0.0, %v3059
        %v3061 = vpop.f32.mrb[0].mxu0
        %3062 = vmatprep.mubr.f32.mxu0 0.0
        %3063 = vmatmul.mubr.f32.gmra.mrb[0].mxu0 %v2861
        %v3064 = vpop.f32.mrb[0].mxu0
        %v3065 = vadd.f32 0.0, %v3064
        %v3066 = vpop.f32.mrb[0].mxu0
        %3067 = vmatprep.mubr.f32.mxu0 0.0
        %3068 = vmatmul.mubr.f32.gmra.mrb[0].mxu0 %v2864
        %v3069 = vpop.f32.mrb[0].mxu0
        %v3070 = vadd.f32 0.0, %v3069
        %v3071 = vpop.f32.mrb[0].mxu0
        %3072 = vmatprep.mubr.f32.mxu0 0.0
        %3073 = vmatmul.mubr.f32.gmra.mrb[0].mxu0 %v2867
        %v3074 = vpop.f32.mrb[0].mxu0
        %v3075 = vadd.f32 0.0, %v3074
        %v3076 = vpop.f32.mrb[0].mxu0
        %3077 = vmatprep.mubr.f32.mxu0 0.0
        %3078 = vmatmul.mubr.f32.gmra.mrb[0].mxu0 %v2870
        %v3079 = vpop.f32.mrb[0].mxu0
        %v3080 = vadd.f32 0.0, %v3079
        %v3081 = vpop.f32.mrb[0].mxu0
        %3082 = vmatprep.mubr.f32.mxu0 0.0
        %3083 = vmatmul.mubr.f32.gmra.mrb[0].mxu0 %v2873
        %v3084 = vpop.f32.mrb[0].mxu0
        %v3085 = vadd.f32 0.0, %v3084
        %v3086 = vpop.f32.mrb[0].mxu0
        %3087 = vmatprep.mubr.f32.mxu0 0.0
        %3088 = vmatmul.mubr.f32.gmra.mrb[0].mxu0 %v2876
        %v3089 = vpop.f32.mrb[0].mxu0
        %v3090 = vadd.f32 0.0, %v3089
        %v3091 = vpop.f32.mrb[0].mxu0
        %3092 = vmatprep.mubr.f32.mxu0 0.0
        %3093 = vmatmul.mubr.f32.gmra.mrb[0].mxu0 %v2879
        %v3094 = vpop.f32.mrb[0].mxu0
        %v3095 = vadd.f32 0.0, %v3094
        %v3096 = vpop.f32.mrb[0].mxu0
        %3097 = vmatprep.mubr.f32.mxu0 0.0
        %3098 = vmatmul.mubr.f32.gmra.mrb[0].mxu0 %v2882
        %v3099 = vpop.f32.mrb[0].mxu0
        %v3100 = vadd.f32 0.0, %v3099
        %v3101 = vpop.f32.mrb[0].mxu0
        %3102 = vmatprep.mubr.f32.mxu0 0.0
        %3103 = vmatmul.mubr.f32.gmra.mrb[0].mxu0 %v2885
        %v3104 = vpop.f32.mrb[0].mxu0
        %v3105 = vadd.f32 0.0, %v3104
        %v3106 = vpop.f32.mrb[0].mxu0
        %3107 = vmatprep.mubr.f32.mxu0 0.0
        %3108 = vmatmul.mubr.f32.gmra.mrb[0].mxu0 %v2888
        %v3109 = vpop.f32.mrb[0].mxu0
        %v3110 = vadd.f32 0.0, %v3109
        %v3111 = vpop.f32.mrb[0].mxu0
        %3112 = vmatprep.mubr.f32.mxu0 0.0
        %3113 = vmatmul.mubr.f32.gmra.mrb[0].mxu0 %v2891
        %v3114 = vpop.f32.mrb[0].mxu0
        %v3115 = vadd.f32 0.0, %v3114
        %v3116 = vpop.f32.mrb[0].mxu0
        %3117 = vdwg.mxu0
        %v3118 = vadd.f32 %v2730, %v2960
        %v3119 = vadd.f32 %v2731, %v2965
        %v3120 = vadd.f32 %v2732, %v2970
        %v3121 = vadd.f32 %v2733, %v2975
        %v3122 = vadd.f32 %v2734, %v2980
        %v3123 = vadd.f32 %v2735, %v2985
        %v3124 = vadd.f32 %v2736, %v2990
        %v3125 = vadd.f32 %v2737, %v2995
        %v3126 = vadd.f32 %v2738, %v3000
        %v3127 = vadd.f32 %v2739, %v3005
        %v3128 = vadd.f32 %v2740, %v3010
        %v3129 = vadd.f32 %v2741, %v3015
        %v3130 = vadd.f32 %v2742, %v3020
        %v3131 = vadd.f32 %v2743, %v3025
        %v3132 = vadd.f32 %v2744, %v3030
        %v3133 = vadd.f32 %v2745, %v3035
        %v3134 = vadd.f32 %v2746, %v3040
        %v3135 = vadd.f32 %v2747, %v3045
        %v3136 = vadd.f32 %v2748, %v3050
        %v3137 = vadd.f32 %v2749, %v3055
        %v3138 = vadd.f32 %v2750, %v3060
        %v3139 = vadd.f32 %v2751, %v3065
        %v3140 = vadd.f32 %v2752, %v3070
        %v3141 = vadd.f32 %v2753, %v3075
        %v3142 = vadd.f32 %v2754, %v3080
        %v3143 = vadd.f32 %v2755, %v3085
        %v3144 = vadd.f32 %v2756, %v3090
        %v3145 = vadd.f32 %v2757, %v3095
        %v3146 = vadd.f32 %v2758, %v3100
        %v3147 = vadd.f32 %v2759, %v3105
        %v3148 = vadd.f32 %v2760, %v3110
        %v3149 = vadd.f32 %v2761, %v3115
        %s3150 = scalar_lea.vmem [#allocation2], 64
        %v3151 = vld [vmem:[%s3150 + $0x7] sm:$0xff]
        %v3152 = vld [vmem:[%s3150 + $0xf] sm:$0xff]
        %v3153 = vld [vmem:[%s3150 + $0x27] sm:$0xff]
        %v3154 = vld [vmem:[%s3150 + $0x2f] sm:$0xff]
        %v3155 = vld [vmem:[%s3150 + $0x47] sm:$0xff]
        %v3156 = vld [vmem:[%s3150 + $0x4f] sm:$0xff]
        %v3157 = vld [vmem:[%s3150 + $0x67] sm:$0xff]
        %v3158 = vld [vmem:[%s3150 + $0x6f] sm:$0xff]
        %v3159 = vld [vmem:[%s3150 + $0x87] sm:$0xff]
        %v3160 = vld [vmem:[%s3150 + $0x8f] sm:$0xff]
        %v3161 = vld [vmem:[%s3150 + $0xa7] sm:$0xff]
        %v3162 = vld [vmem:[%s3150 + $0xaf] sm:$0xff]
        %v3163 = vld [vmem:[%s3150 + $0xc7] sm:$0xff]
        %v3164 = vld [vmem:[%s3150 + $0xcf] sm:$0xff]
        %v3165 = vld [vmem:[%s3150 + $0xe7] sm:$0xff]
        %v3166 = vld [vmem:[%s3150 + $0xef] sm:$0xff]
        %v3167 = vld [vmem:[%s3150 + $0x107] sm:$0xff]
        %v3168 = vld [vmem:[%s3150 + $0x10f] sm:$0xff]
        %v3169 = vld [vmem:[%s3150 + $0x127] sm:$0xff]
        %v3170 = vld [vmem:[%s3150 + $0x12f] sm:$0xff]
        %v3171 = vld [vmem:[%s3150 + $0x147] sm:$0xff]
        %v3172 = vld [vmem:[%s3150 + $0x14f] sm:$0xff]
        %v3173 = vld [vmem:[%s3150 + $0x167] sm:$0xff]
        %v3174 = vld [vmem:[%s3150 + $0x16f] sm:$0xff]
        %v3175 = vld [vmem:[%s3150 + $0x187] sm:$0xff]
        %v3176 = vld [vmem:[%s3150 + $0x18f] sm:$0xff]
        %v3177 = vld [vmem:[%s3150 + $0x1a7] sm:$0xff]
        %v3178 = vld [vmem:[%s3150 + $0x1af] sm:$0xff]
        %v3179 = vld [vmem:[%s3150 + $0x1c7] sm:$0xff]
        %v3180 = vld [vmem:[%s3150 + $0x1cf] sm:$0xff]
        %v3181 = vld [vmem:[%s3150 + $0x1e7] sm:$0xff]
        %v3182 = vld [vmem:[%s3150 + $0x1ef] sm:$0xff]
        %s3183 = scalar_lea.vmem %s3, 96
        %v3184 = vld [vmem:[%s3183] sm:$0xff]
        %v3185 = vld [vmem:[%s3183 + $0x8] sm:$0xff]
        %v3187 = vsel %vm644, %v3151, 0
        %v3190 = vsel %vm644, %v3152, 0
        %v3193 = vsel %vm644, %v3153, 0
        %v3196 = vsel %vm644, %v3154, 0
        %v3199 = vsel %vm644, %v3155, 0
        %v3202 = vsel %vm644, %v3156, 0
        %v3205 = vsel %vm644, %v3157, 0
        %v3208 = vsel %vm644, %v3158, 0
        %v3211 = vsel %vm644, %v3159, 0
        %v3214 = vsel %vm644, %v3160, 0
        %v3217 = vsel %vm644, %v3161, 0
        %v3220 = vsel %vm644, %v3162, 0
        %v3223 = vsel %vm644, %v3163, 0
        %v3226 = vsel %vm644, %v3164, 0
        %v3229 = vsel %vm644, %v3165, 0
        %v3232 = vsel %vm644, %v3166, 0
        %v3235 = vsel %vm644, %v3167, 0
        %v3238 = vsel %vm644, %v3168, 0
        %v3241 = vsel %vm644, %v3169, 0
        %v3244 = vsel %vm644, %v3170, 0
        %v3247 = vsel %vm644, %v3171, 0
        %v3250 = vsel %vm644, %v3172, 0
        %v3253 = vsel %vm644, %v3173, 0
        %v3256 = vsel %vm644, %v3174, 0
        %v3259 = vsel %vm644, %v3175, 0
        %v3262 = vsel %vm644, %v3176, 0
        %v3265 = vsel %vm644, %v3177, 0
        %v3268 = vsel %vm644, %v3178, 0
        %v3271 = vsel %vm644, %v3179, 0
        %v3274 = vsel %vm644, %v3180, 0
        %v3277 = vsel %vm644, %v3181, 0
        %v3280 = vsel %vm644, %v3182, 0
        %3282 = vmatprep.subr.mxu0 0.0
        %3283 = vmatpush1.msra.mxu0 %v3184
        %3284 = vmatprep.subr.mxu0 0.0
        %3285 = vmatpush1.msra.mxu0 %v3185
        %3286 = vmatprep.subr.mxu0 0.0
        %3287 = vmatpush1.msra.mxu0 0.0
        %3288 = vmatprep.subr.mxu0 0.0
        %3289 = vmatpush1.msra.mxu0 0.0
        %3290 = vmatprep.subr.mxu0 0.0
        %3291 = vmatpush1.msra.mxu0 0.0
        %3292 = vmatprep.subr.mxu0 0.0
        %3293 = vmatpush1.msra.mxu0 0.0
        %3294 = vmatprep.subr.mxu0 0.0
        %3295 = vmatpush1.msra.mxu0 0.0
        %3296 = vmatprep.subr.mxu0 0.0
        %3297 = vmatpush1.msra.mxu0 0.0
        %3298 = vmatprep.subr.mxu0 0.0
        %3299 = vmatpush1.msra.mxu0 0.0
        %3300 = vmatprep.subr.mxu0 0.0
        %3301 = vmatpush1.msra.mxu0 0.0
        %3302 = vmatprep.subr.mxu0 0.0
        %3303 = vmatpush1.msra.mxu0 0.0
        %3304 = vmatprep.subr.mxu0 0.0
        %3305 = vmatpush1.msra.mxu0 0.0
        %3306 = vmatprep.subr.mxu0 0.0
        %3307 = vmatpush1.msra.mxu0 0.0
        %3308 = vmatprep.subr.mxu0 0.0
        %3309 = vmatpush1.msra.mxu0 0.0
        %3310 = vmatprep.subr.mxu0 0.0
        %3311 = vmatpush1.msra.mxu0 0.0
        %3312 = vmatprep.subr.mxu0 0.0
        %3313 = vmatpush1.msra.mxu0 0.0
        %3314 = vmatprep.subr.mxu0 0.0
        %3315 = vmatpush1.msra.mxu0 0.0
        %3316 = vmatprep.subr.mxu0 0.0
        %3317 = vmatpush1.msra.mxu0 0.0
        %3318 = vmatprep.subr.mxu0 0.0
        %3319 = vmatpush1.msra.mxu0 0.0
        %3320 = vmatprep.subr.mxu0 0.0
        %3321 = vmatpush1.msra.mxu0 0.0
        %3322 = vmatprep.subr.mxu0 0.0
        %3323 = vmatpush1.msra.mxu0 0.0
        %3324 = vmatprep.subr.mxu0 0.0
        %3325 = vmatpush1.msra.mxu0 0.0
        %3326 = vmatprep.subr.mxu0 0.0
        %3327 = vmatpush1.msra.mxu0 0.0
        %3328 = vmatprep.subr.mxu0 0.0
        %3329 = vmatpush1.msra.mxu0 0.0
        %3330 = vmatprep.subr.mxu0 0.0
        %3331 = vmatpush1.msra.mxu0 0.0
        %3332 = vmatprep.subr.mxu0 0.0
        %3333 = vmatpush1.msra.mxu0 0.0
        %3334 = vmatprep.subr.mxu0 0.0
        %3335 = vmatpush1.msra.mxu0 0.0
        %3336 = vmatprep.subr.mxu0 0.0
        %3337 = vmatpush1.msra.mxu0 0.0
        %3338 = vmatprep.subr.mxu0 0.0
        %3339 = vmatpush1.msra.mxu0 0.0
        %3340 = vmatprep.subr.mxu0 0.0
        %3341 = vmatpush1.msra.mxu0 0.0
        %3342 = vmatprep.subr.mxu0 0.0
        %3343 = vmatpush1.msra.mxu0 0.0
        %3344 = vmatprep.subr.mxu0 0.0
        %3345 = vmatpush1.msra.mxu0 0.0
        %3346 = vmatprep.mubr.f32.mxu0 0.0
        %3347 = vmatmul.mubr.f32.gmra.mrb[0].mxu0 %v3187
        %v3348 = vpop.f32.mrb[0].mxu0
        %v3349 = vadd.f32 0.0, %v3348
        %v3350 = vpop.f32.mrb[0].mxu0
        %3351 = vmatprep.mubr.f32.mxu0 0.0
        %3352 = vmatmul.mubr.f32.gmra.mrb[0].mxu0 %v3190
        %v3353 = vpop.f32.mrb[0].mxu0
        %v3354 = vadd.f32 0.0, %v3353
        %v3355 = vpop.f32.mrb[0].mxu0
        %3356 = vmatprep.mubr.f32.mxu0 0.0
        %3357 = vmatmul.mubr.f32.gmra.mrb[0].mxu0 %v3193
        %v3358 = vpop.f32.mrb[0].mxu0
        %v3359 = vadd.f32 0.0, %v3358
        %v3360 = vpop.f32.mrb[0].mxu0
        %3361 = vmatprep.mubr.f32.mxu0 0.0
        %3362 = vmatmul.mubr.f32.gmra.mrb[0].mxu0 %v3196
        %v3363 = vpop.f32.mrb[0].mxu0
        %v3364 = vadd.f32 0.0, %v3363
        %v3365 = vpop.f32.mrb[0].mxu0
        %3366 = vmatprep.mubr.f32.mxu0 0.0
        %3367 = vmatmul.mubr.f32.gmra.mrb[0].mxu0 %v3199
        %v3368 = vpop.f32.mrb[0].mxu0
        %v3369 = vadd.f32 0.0, %v3368
        %v3370 = vpop.f32.mrb[0].mxu0
        %3371 = vmatprep.mubr.f32.mxu0 0.0
        %3372 = vmatmul.mubr.f32.gmra.mrb[0].mxu0 %v3202
        %v3373 = vpop.f32.mrb[0].mxu0
        %v3374 = vadd.f32 0.0, %v3373
        %v3375 = vpop.f32.mrb[0].mxu0
        %3376 = vmatprep.mubr.f32.mxu0 0.0
        %3377 = vmatmul.mubr.f32.gmra.mrb[0].mxu0 %v3205
        %v3378 = vpop.f32.mrb[0].mxu0
        %v3379 = vadd.f32 0.0, %v3378
        %v3380 = vpop.f32.mrb[0].mxu0
        %3381 = vmatprep.mubr.f32.mxu0 0.0
        %3382 = vmatmul.mubr.f32.gmra.mrb[0].mxu0 %v3208
        %v3383 = vpop.f32.mrb[0].mxu0
        %v3384 = vadd.f32 0.0, %v3383
        %v3385 = vpop.f32.mrb[0].mxu0
        %3386 = vmatprep.mubr.f32.mxu0 0.0
        %3387 = vmatmul.mubr.f32.gmra.mrb[0].mxu0 %v3211
        %v3388 = vpop.f32.mrb[0].mxu0
        %v3389 = vadd.f32 0.0, %v3388
        %v3390 = vpop.f32.mrb[0].mxu0
        %3391 = vmatprep.mubr.f32.mxu0 0.0
        %3392 = vmatmul.mubr.f32.gmra.mrb[0].mxu0 %v3214
        %v3393 = vpop.f32.mrb[0].mxu0
        %v3394 = vadd.f32 0.0, %v3393
        %v3395 = vpop.f32.mrb[0].mxu0
        %3396 = vmatprep.mubr.f32.mxu0 0.0
        %3397 = vmatmul.mubr.f32.gmra.mrb[0].mxu0 %v3217
        %v3398 = vpop.f32.mrb[0].mxu0
        %v3399 = vadd.f32 0.0, %v3398
        %v3400 = vpop.f32.mrb[0].mxu0
        %3401 = vmatprep.mubr.f32.mxu0 0.0
        %3402 = vmatmul.mubr.f32.gmra.mrb[0].mxu0 %v3220
        %v3403 = vpop.f32.mrb[0].mxu0
        %v3404 = vadd.f32 0.0, %v3403
        %v3405 = vpop.f32.mrb[0].mxu0
        %3406 = vmatprep.mubr.f32.mxu0 0.0
        %3407 = vmatmul.mubr.f32.gmra.mrb[0].mxu0 %v3223
        %v3408 = vpop.f32.mrb[0].mxu0
        %v3409 = vadd.f32 0.0, %v3408
        %v3410 = vpop.f32.mrb[0].mxu0
        %3411 = vmatprep.mubr.f32.mxu0 0.0
        %3412 = vmatmul.mubr.f32.gmra.mrb[0].mxu0 %v3226
        %v3413 = vpop.f32.mrb[0].mxu0
        %v3414 = vadd.f32 0.0, %v3413
        %v3415 = vpop.f32.mrb[0].mxu0
        %3416 = vmatprep.mubr.f32.mxu0 0.0
        %3417 = vmatmul.mubr.f32.gmra.mrb[0].mxu0 %v3229
        %v3418 = vpop.f32.mrb[0].mxu0
        %v3419 = vadd.f32 0.0, %v3418
        %v3420 = vpop.f32.mrb[0].mxu0
        %3421 = vmatprep.mubr.f32.mxu0 0.0
        %3422 = vmatmul.mubr.f32.gmra.mrb[0].mxu0 %v3232
        %v3423 = vpop.f32.mrb[0].mxu0
        %v3424 = vadd.f32 0.0, %v3423
        %v3425 = vpop.f32.mrb[0].mxu0
        %3426 = vmatprep.mubr.f32.mxu0 0.0
        %3427 = vmatmul.mubr.f32.gmra.mrb[0].mxu0 %v3235
        %v3428 = vpop.f32.mrb[0].mxu0
        %v3429 = vadd.f32 0.0, %v3428
        %v3430 = vpop.f32.mrb[0].mxu0
        %3431 = vmatprep.mubr.f32.mxu0 0.0
        %3432 = vmatmul.mubr.f32.gmra.mrb[0].mxu0 %v3238
        %v3433 = vpop.f32.mrb[0].mxu0
        %v3434 = vadd.f32 0.0, %v3433
        %v3435 = vpop.f32.mrb[0].mxu0
        %3436 = vmatprep.mubr.f32.mxu0 0.0
        %3437 = vmatmul.mubr.f32.gmra.mrb[0].mxu0 %v3241
        %v3438 = vpop.f32.mrb[0].mxu0
        %v3439 = vadd.f32 0.0, %v3438
        %v3440 = vpop.f32.mrb[0].mxu0
        %3441 = vmatprep.mubr.f32.mxu0 0.0
        %3442 = vmatmul.mubr.f32.gmra.mrb[0].mxu0 %v3244
        %v3443 = vpop.f32.mrb[0].mxu0
        %v3444 = vadd.f32 0.0, %v3443
        %v3445 = vpop.f32.mrb[0].mxu0
        %3446 = vmatprep.mubr.f32.mxu0 0.0
        %3447 = vmatmul.mubr.f32.gmra.mrb[0].mxu0 %v3247
        %v3448 = vpop.f32.mrb[0].mxu0
        %v3449 = vadd.f32 0.0, %v3448
        %v3450 = vpop.f32.mrb[0].mxu0
        %3451 = vmatprep.mubr.f32.mxu0 0.0
        %3452 = vmatmul.mubr.f32.gmra.mrb[0].mxu0 %v3250
        %v3453 = vpop.f32.mrb[0].mxu0
        %v3454 = vadd.f32 0.0, %v3453
        %v3455 = vpop.f32.mrb[0].mxu0
        %3456 = vmatprep.mubr.f32.mxu0 0.0
        %3457 = vmatmul.mubr.f32.gmra.mrb[0].mxu0 %v3253
        %v3458 = vpop.f32.mrb[0].mxu0
        %v3459 = vadd.f32 0.0, %v3458
        %v3460 = vpop.f32.mrb[0].mxu0
        %3461 = vmatprep.mubr.f32.mxu0 0.0
        %3462 = vmatmul.mubr.f32.gmra.mrb[0].mxu0 %v3256
        %v3463 = vpop.f32.mrb[0].mxu0
        %v3464 = vadd.f32 0.0, %v3463
        %v3465 = vpop.f32.mrb[0].mxu0
        %3466 = vmatprep.mubr.f32.mxu0 0.0
        %3467 = vmatmul.mubr.f32.gmra.mrb[0].mxu0 %v3259
        %v3468 = vpop.f32.mrb[0].mxu0
        %v3469 = vadd.f32 0.0, %v3468
        %v3470 = vpop.f32.mrb[0].mxu0
        %3471 = vmatprep.mubr.f32.mxu0 0.0
        %3472 = vmatmul.mubr.f32.gmra.mrb[0].mxu0 %v3262
        %v3473 = vpop.f32.mrb[0].mxu0
        %v3474 = vadd.f32 0.0, %v3473
        %v3475 = vpop.f32.mrb[0].mxu0
        %3476 = vmatprep.mubr.f32.mxu0 0.0
        %3477 = vmatmul.mubr.f32.gmra.mrb[0].mxu0 %v3265
        %v3478 = vpop.f32.mrb[0].mxu0
        %v3479 = vadd.f32 0.0, %v3478
        %v3480 = vpop.f32.mrb[0].mxu0
        %3481 = vmatprep.mubr.f32.mxu0 0.0
        %3482 = vmatmul.mubr.f32.gmra.mrb[0].mxu0 %v3268
        %v3483 = vpop.f32.mrb[0].mxu0
        %v3484 = vadd.f32 0.0, %v3483
        %v3485 = vpop.f32.mrb[0].mxu0
        %3486 = vmatprep.mubr.f32.mxu0 0.0
        %3487 = vmatmul.mubr.f32.gmra.mrb[0].mxu0 %v3271
        %v3488 = vpop.f32.mrb[0].mxu0
        %v3489 = vadd.f32 0.0, %v3488
        %v3490 = vpop.f32.mrb[0].mxu0
        %3491 = vmatprep.mubr.f32.mxu0 0.0
        %3492 = vmatmul.mubr.f32.gmra.mrb[0].mxu0 %v3274
        %v3493 = vpop.f32.mrb[0].mxu0
        %v3494 = vadd.f32 0.0, %v3493
        %v3495 = vpop.f32.mrb[0].mxu0
        %3496 = vmatprep.mubr.f32.mxu0 0.0
        %3497 = vmatmul.mubr.f32.gmra.mrb[0].mxu0 %v3277
        %v3498 = vpop.f32.mrb[0].mxu0
        %v3499 = vadd.f32 0.0, %v3498
        %v3500 = vpop.f32.mrb[0].mxu0
        %3501 = vmatprep.mubr.f32.mxu0 0.0
        %3502 = vmatmul.mubr.f32.gmra.mrb[0].mxu0 %v3280
        %v3503 = vpop.f32.mrb[0].mxu0
        %v3504 = vadd.f32 0.0, %v3503
        %v3505 = vpop.f32.mrb[0].mxu0
        %3506 = vdwg.mxu0
        %v3507 = vadd.f32 %v3118, %v3349
        %v3508 = vadd.f32 %v3119, %v3354
        %v3509 = vadd.f32 %v3120, %v3359
        %v3510 = vadd.f32 %v3121, %v3364
        %v3511 = vadd.f32 %v3122, %v3369
        %v3512 = vadd.f32 %v3123, %v3374
        %v3513 = vadd.f32 %v3124, %v3379
        %v3514 = vadd.f32 %v3125, %v3384
        %v3515 = vadd.f32 %v3126, %v3389
        %v3516 = vadd.f32 %v3127, %v3394
        %v3517 = vadd.f32 %v3128, %v3399
        %v3518 = vadd.f32 %v3129, %v3404
        %v3519 = vadd.f32 %v3130, %v3409
        %v3520 = vadd.f32 %v3131, %v3414
        %v3521 = vadd.f32 %v3132, %v3419
        %v3522 = vadd.f32 %v3133, %v3424
        %v3523 = vadd.f32 %v3134, %v3429
        %v3524 = vadd.f32 %v3135, %v3434
        %v3525 = vadd.f32 %v3136, %v3439
        %v3526 = vadd.f32 %v3137, %v3444
        %v3527 = vadd.f32 %v3138, %v3449
        %v3528 = vadd.f32 %v3139, %v3454
        %v3529 = vadd.f32 %v3140, %v3459
        %v3530 = vadd.f32 %v3141, %v3464
        %v3531 = vadd.f32 %v3142, %v3469
        %v3532 = vadd.f32 %v3143, %v3474
        %v3533 = vadd.f32 %v3144, %v3479
        %v3534 = vadd.f32 %v3145, %v3484
        %v3535 = vadd.f32 %v3146, %v3489
        %v3536 = vadd.f32 %v3147, %v3494
        %v3537 = vadd.f32 %v3148, %v3499
        %v3538 = vadd.f32 %v3149, %v3504
        %v3539 = vld [vmem:[%s3150 + $0x8] sm:$0xff]
        %v3540 = vld [vmem:[%s3150 + $0x10] sm:$0xff]
        %v3541 = vld [vmem:[%s3150 + $0x28] sm:$0xff]
        %v3542 = vld [vmem:[%s3150 + $0x30] sm:$0xff]
        %v3543 = vld [vmem:[%s3150 + $0x48] sm:$0xff]
        %v3544 = vld [vmem:[%s3150 + $0x50] sm:$0xff]
        %v3545 = vld [vmem:[%s3150 + $0x68] sm:$0xff]
        %v3546 = vld [vmem:[%s3150 + $0x70] sm:$0xff]
        %v3547 = vld [vmem:[%s3150 + $0x88] sm:$0xff]
        %v3548 = vld [vmem:[%s3150 + $0x90] sm:$0xff]
        %v3549 = vld [vmem:[%s3150 + $0xa8] sm:$0xff]
        %v3550 = vld [vmem:[%s3150 + $0xb0] sm:$0xff]
        %v3551 = vld [vmem:[%s3150 + $0xc8] sm:$0xff]
        %v3552 = vld [vmem:[%s3150 + $0xd0] sm:$0xff]
        %v3553 = vld [vmem:[%s3150 + $0xe8] sm:$0xff]
        %v3554 = vld [vmem:[%s3150 + $0xf0] sm:$0xff]
        %v3555 = vld [vmem:[%s3150 + $0x108] sm:$0xff]
        %v3556 = vld [vmem:[%s3150 + $0x110] sm:$0xff]
        %v3557 = vld [vmem:[%s3150 + $0x128] sm:$0xff]
        %v3558 = vld [vmem:[%s3150 + $0x130] sm:$0xff]
        %v3559 = vld [vmem:[%s3150 + $0x148] sm:$0xff]
        %v3560 = vld [vmem:[%s3150 + $0x150] sm:$0xff]
        %v3561 = vld [vmem:[%s3150 + $0x168] sm:$0xff]
        %v3562 = vld [vmem:[%s3150 + $0x170] sm:$0xff]
        %v3563 = vld [vmem:[%s3150 + $0x188] sm:$0xff]
        %v3564 = vld [vmem:[%s3150 + $0x190] sm:$0xff]
        %v3565 = vld [vmem:[%s3150 + $0x1a8] sm:$0xff]
        %v3566 = vld [vmem:[%s3150 + $0x1b0] sm:$0xff]
        %v3567 = vld [vmem:[%s3150 + $0x1c8] sm:$0xff]
        %v3568 = vld [vmem:[%s3150 + $0x1d0] sm:$0xff]
        %v3569 = vld [vmem:[%s3150 + $0x1e8] sm:$0xff]
        %v3570 = vld [vmem:[%s3150 + $0x1f0] sm:$0xff]
        %s3571 = scalar_lea.vmem %s3, 112
        %v3572 = vld [vmem:[%s3571] sm:$0xff]
        %v3573 = vld [vmem:[%s3571 + $0x8] sm:$0xff]
        %v3575 = vsel %vm644, %v3539, 0
        %v3578 = vsel %vm644, %v3540, 0
        %v3581 = vsel %vm644, %v3541, 0
        %v3584 = vsel %vm644, %v3542, 0
        %v3587 = vsel %vm644, %v3543, 0
        %v3590 = vsel %vm644, %v3544, 0
        %v3593 = vsel %vm644, %v3545, 0
        %v3596 = vsel %vm644, %v3546, 0
        %v3599 = vsel %vm644, %v3547, 0
        %v3602 = vsel %vm644, %v3548, 0
        %v3605 = vsel %vm644, %v3549, 0
        %v3608 = vsel %vm644, %v3550, 0
        %v3611 = vsel %vm644, %v3551, 0
        %v3614 = vsel %vm644, %v3552, 0
        %v3617 = vsel %vm644, %v3553, 0
        %v3620 = vsel %vm644, %v3554, 0
        %v3623 = vsel %vm644, %v3555, 0
        %v3626 = vsel %vm644, %v3556, 0
        %v3629 = vsel %vm644, %v3557, 0
        %v3632 = vsel %vm644, %v3558, 0
        %v3635 = vsel %vm644, %v3559, 0
        %v3638 = vsel %vm644, %v3560, 0
        %v3641 = vsel %vm644, %v3561, 0
        %v3644 = vsel %vm644, %v3562, 0
        %v3647 = vsel %vm644, %v3563, 0
        %v3650 = vsel %vm644, %v3564, 0
        %v3653 = vsel %vm644, %v3565, 0
        %v3656 = vsel %vm644, %v3566, 0
        %v3659 = vsel %vm644, %v3567, 0
        %v3662 = vsel %vm644, %v3568, 0
        %v3665 = vsel %vm644, %v3569, 0
        %v3668 = vsel %vm644, %v3570, 0
        %3670 = vmatprep.subr.mxu0 0.0
        %3671 = vmatpush1.msra.mxu0 %v3572
        %3672 = vmatprep.subr.mxu0 0.0
        %3673 = vmatpush1.msra.mxu0 %v3573
        %3674 = vmatprep.subr.mxu0 0.0
        %3675 = vmatpush1.msra.mxu0 0.0
        %3676 = vmatprep.subr.mxu0 0.0
        %3677 = vmatpush1.msra.mxu0 0.0
        %3678 = vmatprep.subr.mxu0 0.0
        %3679 = vmatpush1.msra.mxu0 0.0
        %3680 = vmatprep.subr.mxu0 0.0
        %3681 = vmatpush1.msra.mxu0 0.0
        %3682 = vmatprep.subr.mxu0 0.0
        %3683 = vmatpush1.msra.mxu0 0.0
        %3684 = vmatprep.subr.mxu0 0.0
        %3685 = vmatpush1.msra.mxu0 0.0
        %3686 = vmatprep.subr.mxu0 0.0
        %3687 = vmatpush1.msra.mxu0 0.0
        %3688 = vmatprep.subr.mxu0 0.0
        %3689 = vmatpush1.msra.mxu0 0.0
        %3690 = vmatprep.subr.mxu0 0.0
        %3691 = vmatpush1.msra.mxu0 0.0
        %3692 = vmatprep.subr.mxu0 0.0
        %3693 = vmatpush1.msra.mxu0 0.0
        %3694 = vmatprep.subr.mxu0 0.0
        %3695 = vmatpush1.msra.mxu0 0.0
        %3696 = vmatprep.subr.mxu0 0.0
        %3697 = vmatpush1.msra.mxu0 0.0
        %3698 = vmatprep.subr.mxu0 0.0
        %3699 = vmatpush1.msra.mxu0 0.0
        %3700 = vmatprep.subr.mxu0 0.0
        %3701 = vmatpush1.msra.mxu0 0.0
        %3702 = vmatprep.subr.mxu0 0.0
        %3703 = vmatpush1.msra.mxu0 0.0
        %3704 = vmatprep.subr.mxu0 0.0
        %3705 = vmatpush1.msra.mxu0 0.0
        %3706 = vmatprep.subr.mxu0 0.0
        %3707 = vmatpush1.msra.mxu0 0.0
        %3708 = vmatprep.subr.mxu0 0.0
        %3709 = vmatpush1.msra.mxu0 0.0
        %3710 = vmatprep.subr.mxu0 0.0
        %3711 = vmatpush1.msra.mxu0 0.0
        %3712 = vmatprep.subr.mxu0 0.0
        %3713 = vmatpush1.msra.mxu0 0.0
        %3714 = vmatprep.subr.mxu0 0.0
        %3715 = vmatpush1.msra.mxu0 0.0
        %3716 = vmatprep.subr.mxu0 0.0
        %3717 = vmatpush1.msra.mxu0 0.0
        %3718 = vmatprep.subr.mxu0 0.0
        %3719 = vmatpush1.msra.mxu0 0.0
        %3720 = vmatprep.subr.mxu0 0.0
        %3721 = vmatpush1.msra.mxu0 0.0
        %3722 = vmatprep.subr.mxu0 0.0
        %3723 = vmatpush1.msra.mxu0 0.0
        %3724 = vmatprep.subr.mxu0 0.0
        %3725 = vmatpush1.msra.mxu0 0.0
        %3726 = vmatprep.subr.mxu0 0.0
        %3727 = vmatpush1.msra.mxu0 0.0
        %3728 = vmatprep.subr.mxu0 0.0
        %3729 = vmatpush1.msra.mxu0 0.0
        %3730 = vmatprep.subr.mxu0 0.0
        %3731 = vmatpush1.msra.mxu0 0.0
        %3732 = vmatprep.subr.mxu0 0.0
        %3733 = vmatpush1.msra.mxu0 0.0
        %3734 = vmatprep.mubr.f32.mxu0 0.0
        %3735 = vmatmul.mubr.f32.gmra.mrb[0].mxu0 %v3575
        %v3736 = vpop.f32.mrb[0].mxu0
        %v3737 = vadd.f32 0.0, %v3736
        %v3738 = vpop.f32.mrb[0].mxu0
        %3739 = vmatprep.mubr.f32.mxu0 0.0
        %3740 = vmatmul.mubr.f32.gmra.mrb[0].mxu0 %v3578
        %v3741 = vpop.f32.mrb[0].mxu0
        %v3742 = vadd.f32 0.0, %v3741
        %v3743 = vpop.f32.mrb[0].mxu0
        %3744 = vmatprep.mubr.f32.mxu0 0.0
        %3745 = vmatmul.mubr.f32.gmra.mrb[0].mxu0 %v3581
        %v3746 = vpop.f32.mrb[0].mxu0
        %v3747 = vadd.f32 0.0, %v3746
        %v3748 = vpop.f32.mrb[0].mxu0
        %3749 = vmatprep.mubr.f32.mxu0 0.0
        %3750 = vmatmul.mubr.f32.gmra.mrb[0].mxu0 %v3584
        %v3751 = vpop.f32.mrb[0].mxu0
        %v3752 = vadd.f32 0.0, %v3751
        %v3753 = vpop.f32.mrb[0].mxu0
        %3754 = vmatprep.mubr.f32.mxu0 0.0
        %3755 = vmatmul.mubr.f32.gmra.mrb[0].mxu0 %v3587
        %v3756 = vpop.f32.mrb[0].mxu0
        %v3757 = vadd.f32 0.0, %v3756
        %v3758 = vpop.f32.mrb[0].mxu0
        %3759 = vmatprep.mubr.f32.mxu0 0.0
        %3760 = vmatmul.mubr.f32.gmra.mrb[0].mxu0 %v3590
        %v3761 = vpop.f32.mrb[0].mxu0
        %v3762 = vadd.f32 0.0, %v3761
        %v3763 = vpop.f32.mrb[0].mxu0
        %3764 = vmatprep.mubr.f32.mxu0 0.0
        %3765 = vmatmul.mubr.f32.gmra.mrb[0].mxu0 %v3593
        %v3766 = vpop.f32.mrb[0].mxu0
        %v3767 = vadd.f32 0.0, %v3766
        %v3768 = vpop.f32.mrb[0].mxu0
        %3769 = vmatprep.mubr.f32.mxu0 0.0
        %3770 = vmatmul.mubr.f32.gmra.mrb[0].mxu0 %v3596
        %v3771 = vpop.f32.mrb[0].mxu0
        %v3772 = vadd.f32 0.0, %v3771
        %v3773 = vpop.f32.mrb[0].mxu0
        %3774 = vmatprep.mubr.f32.mxu0 0.0
        %3775 = vmatmul.mubr.f32.gmra.mrb[0].mxu0 %v3599
        %v3776 = vpop.f32.mrb[0].mxu0
        %v3777 = vadd.f32 0.0, %v3776
        %v3778 = vpop.f32.mrb[0].mxu0
        %3779 = vmatprep.mubr.f32.mxu0 0.0
        %3780 = vmatmul.mubr.f32.gmra.mrb[0].mxu0 %v3602
        %v3781 = vpop.f32.mrb[0].mxu0
        %v3782 = vadd.f32 0.0, %v3781
        %v3783 = vpop.f32.mrb[0].mxu0
        %3784 = vmatprep.mubr.f32.mxu0 0.0
        %3785 = vmatmul.mubr.f32.gmra.mrb[0].mxu0 %v3605
        %v3786 = vpop.f32.mrb[0].mxu0
        %v3787 = vadd.f32 0.0, %v3786
        %v3788 = vpop.f32.mrb[0].mxu0
        %3789 = vmatprep.mubr.f32.mxu0 0.0
        %3790 = vmatmul.mubr.f32.gmra.mrb[0].mxu0 %v3608
        %v3791 = vpop.f32.mrb[0].mxu0
        %v3792 = vadd.f32 0.0, %v3791
        %v3793 = vpop.f32.mrb[0].mxu0
        %3794 = vmatprep.mubr.f32.mxu0 0.0
        %3795 = vmatmul.mubr.f32.gmra.mrb[0].mxu0 %v3611
        %v3796 = vpop.f32.mrb[0].mxu0
        %v3797 = vadd.f32 0.0, %v3796
        %v3798 = vpop.f32.mrb[0].mxu0
        %3799 = vmatprep.mubr.f32.mxu0 0.0
        %3800 = vmatmul.mubr.f32.gmra.mrb[0].mxu0 %v3614
        %v3801 = vpop.f32.mrb[0].mxu0
        %v3802 = vadd.f32 0.0, %v3801
        %v3803 = vpop.f32.mrb[0].mxu0
        %3804 = vmatprep.mubr.f32.mxu0 0.0
        %3805 = vmatmul.mubr.f32.gmra.mrb[0].mxu0 %v3617
        %v3806 = vpop.f32.mrb[0].mxu0
        %v3807 = vadd.f32 0.0, %v3806
        %v3808 = vpop.f32.mrb[0].mxu0
        %3809 = vmatprep.mubr.f32.mxu0 0.0
        %3810 = vmatmul.mubr.f32.gmra.mrb[0].mxu0 %v3620
        %v3811 = vpop.f32.mrb[0].mxu0
        %v3812 = vadd.f32 0.0, %v3811
        %v3813 = vpop.f32.mrb[0].mxu0
        %3814 = vmatprep.mubr.f32.mxu0 0.0
        %3815 = vmatmul.mubr.f32.gmra.mrb[0].mxu0 %v3623
        %v3816 = vpop.f32.mrb[0].mxu0
        %v3817 = vadd.f32 0.0, %v3816
        %v3818 = vpop.f32.mrb[0].mxu0
        %3819 = vmatprep.mubr.f32.mxu0 0.0
        %3820 = vmatmul.mubr.f32.gmra.mrb[0].mxu0 %v3626
        %v3821 = vpop.f32.mrb[0].mxu0
        %v3822 = vadd.f32 0.0, %v3821
        %v3823 = vpop.f32.mrb[0].mxu0
        %3824 = vmatprep.mubr.f32.mxu0 0.0
        %3825 = vmatmul.mubr.f32.gmra.mrb[0].mxu0 %v3629
        %v3826 = vpop.f32.mrb[0].mxu0
        %v3827 = vadd.f32 0.0, %v3826
        %v3828 = vpop.f32.mrb[0].mxu0
        %3829 = vmatprep.mubr.f32.mxu0 0.0
        %3830 = vmatmul.mubr.f32.gmra.mrb[0].mxu0 %v3632
        %v3831 = vpop.f32.mrb[0].mxu0
        %v3832 = vadd.f32 0.0, %v3831
        %v3833 = vpop.f32.mrb[0].mxu0
        %3834 = vmatprep.mubr.f32.mxu0 0.0
        %3835 = vmatmul.mubr.f32.gmra.mrb[0].mxu0 %v3635
        %v3836 = vpop.f32.mrb[0].mxu0
        %v3837 = vadd.f32 0.0, %v3836
        %v3838 = vpop.f32.mrb[0].mxu0
        %3839 = vmatprep.mubr.f32.mxu0 0.0
        %3840 = vmatmul.mubr.f32.gmra.mrb[0].mxu0 %v3638
        %v3841 = vpop.f32.mrb[0].mxu0
        %v3842 = vadd.f32 0.0, %v3841
        %v3843 = vpop.f32.mrb[0].mxu0
        %3844 = vmatprep.mubr.f32.mxu0 0.0
        %3845 = vmatmul.mubr.f32.gmra.mrb[0].mxu0 %v3641
        %v3846 = vpop.f32.mrb[0].mxu0
        %v3847 = vadd.f32 0.0, %v3846
        %v3848 = vpop.f32.mrb[0].mxu0
        %3849 = vmatprep.mubr.f32.mxu0 0.0
        %3850 = vmatmul.mubr.f32.gmra.mrb[0].mxu0 %v3644
        %v3851 = vpop.f32.mrb[0].mxu0
        %v3852 = vadd.f32 0.0, %v3851
        %v3853 = vpop.f32.mrb[0].mxu0
        %3854 = vmatprep.mubr.f32.mxu0 0.0
        %3855 = vmatmul.mubr.f32.gmra.mrb[0].mxu0 %v3647
        %v3856 = vpop.f32.mrb[0].mxu0
        %v3857 = vadd.f32 0.0, %v3856
        %v3858 = vpop.f32.mrb[0].mxu0
        %3859 = vmatprep.mubr.f32.mxu0 0.0
        %3860 = vmatmul.mubr.f32.gmra.mrb[0].mxu0 %v3650
        %v3861 = vpop.f32.mrb[0].mxu0
        %v3862 = vadd.f32 0.0, %v3861
        %v3863 = vpop.f32.mrb[0].mxu0
        %3864 = vmatprep.mubr.f32.mxu0 0.0
        %3865 = vmatmul.mubr.f32.gmra.mrb[0].mxu0 %v3653
        %v3866 = vpop.f32.mrb[0].mxu0
        %v3867 = vadd.f32 0.0, %v3866
        %v3868 = vpop.f32.mrb[0].mxu0
        %3869 = vmatprep.mubr.f32.mxu0 0.0
        %3870 = vmatmul.mubr.f32.gmra.mrb[0].mxu0 %v3656
        %v3871 = vpop.f32.mrb[0].mxu0
        %v3872 = vadd.f32 0.0, %v3871
        %v3873 = vpop.f32.mrb[0].mxu0
        %3874 = vmatprep.mubr.f32.mxu0 0.0
        %3875 = vmatmul.mubr.f32.gmra.mrb[0].mxu0 %v3659
        %v3876 = vpop.f32.mrb[0].mxu0
        %v3877 = vadd.f32 0.0, %v3876
        %v3878 = vpop.f32.mrb[0].mxu0
        %3879 = vmatprep.mubr.f32.mxu0 0.0
        %3880 = vmatmul.mubr.f32.gmra.mrb[0].mxu0 %v3662
        %v3881 = vpop.f32.mrb[0].mxu0
        %v3882 = vadd.f32 0.0, %v3881
        %v3883 = vpop.f32.mrb[0].mxu0
        %3884 = vmatprep.mubr.f32.mxu0 0.0
        %3885 = vmatmul.mubr.f32.gmra.mrb[0].mxu0 %v3665
        %v3886 = vpop.f32.mrb[0].mxu0
        %v3887 = vadd.f32 0.0, %v3886
        %v3888 = vpop.f32.mrb[0].mxu0
        %3889 = vmatprep.mubr.f32.mxu0 0.0
        %3890 = vmatmul.mubr.f32.gmra.mrb[0].mxu0 %v3668
        %v3891 = vpop.f32.mrb[0].mxu0
        %v3892 = vadd.f32 0.0, %v3891
        %v3893 = vpop.f32.mrb[0].mxu0
        %3894 = vdwg.mxu0
        %v3895 = vadd.f32 %v3507, %v3737
        %v3896 = vadd.f32 %v3508, %v3742
        %v3897 = vadd.f32 %v3509, %v3747
        %v3898 = vadd.f32 %v3510, %v3752
        %v3899 = vadd.f32 %v3511, %v3757
        %v3900 = vadd.f32 %v3512, %v3762
        %v3901 = vadd.f32 %v3513, %v3767
        %v3902 = vadd.f32 %v3514, %v3772
        %v3903 = vadd.f32 %v3515, %v3777
        %v3904 = vadd.f32 %v3516, %v3782
        %v3905 = vadd.f32 %v3517, %v3787
        %v3906 = vadd.f32 %v3518, %v3792
        %v3907 = vadd.f32 %v3519, %v3797
        %v3908 = vadd.f32 %v3520, %v3802
        %v3909 = vadd.f32 %v3521, %v3807
        %v3910 = vadd.f32 %v3522, %v3812
        %v3911 = vadd.f32 %v3523, %v3817
        %v3912 = vadd.f32 %v3524, %v3822
        %v3913 = vadd.f32 %v3525, %v3827
        %v3914 = vadd.f32 %v3526, %v3832
        %v3915 = vadd.f32 %v3527, %v3837
        %v3916 = vadd.f32 %v3528, %v3842
        %v3917 = vadd.f32 %v3529, %v3847
        %v3918 = vadd.f32 %v3530, %v3852
        %v3919 = vadd.f32 %v3531, %v3857
        %v3920 = vadd.f32 %v3532, %v3862
        %v3921 = vadd.f32 %v3533, %v3867
        %v3922 = vadd.f32 %v3534, %v3872
        %v3923 = vadd.f32 %v3535, %v3877
        %v3924 = vadd.f32 %v3536, %v3882
        %v3925 = vadd.f32 %v3537, %v3887
        %v3926 = vadd.f32 %v3538, %v3892
        %v3927 = vld [vmem:[%s3150 + $0x9] sm:$0xff]
        %v3928 = vld [vmem:[%s3150 + $0x11] sm:$0xff]
        %v3929 = vld [vmem:[%s3150 + $0x29] sm:$0xff]
        %v3930 = vld [vmem:[%s3150 + $0x31] sm:$0xff]
        %v3931 = vld [vmem:[%s3150 + $0x49] sm:$0xff]
        %v3932 = vld [vmem:[%s3150 + $0x51] sm:$0xff]
        %v3933 = vld [vmem:[%s3150 + $0x69] sm:$0xff]
        %v3934 = vld [vmem:[%s3150 + $0x71] sm:$0xff]
        %v3935 = vld [vmem:[%s3150 + $0x89] sm:$0xff]
        %v3936 = vld [vmem:[%s3150 + $0x91] sm:$0xff]
        %v3937 = vld [vmem:[%s3150 + $0xa9] sm:$0xff]
        %v3938 = vld [vmem:[%s3150 + $0xb1] sm:$0xff]
        %v3939 = vld [vmem:[%s3150 + $0xc9] sm:$0xff]
        %v3940 = vld [vmem:[%s3150 + $0xd1] sm:$0xff]
        %v3941 = vld [vmem:[%s3150 + $0xe9] sm:$0xff]
        %v3942 = vld [vmem:[%s3150 + $0xf1] sm:$0xff]
        %v3943 = vld [vmem:[%s3150 + $0x109] sm:$0xff]
        %v3944 = vld [vmem:[%s3150 + $0x111] sm:$0xff]
        %v3945 = vld [vmem:[%s3150 + $0x129] sm:$0xff]
        %v3946 = vld [vmem:[%s3150 + $0x131] sm:$0xff]
        %v3947 = vld [vmem:[%s3150 + $0x149] sm:$0xff]
        %v3948 = vld [vmem:[%s3150 + $0x151] sm:$0xff]
        %v3949 = vld [vmem:[%s3150 + $0x169] sm:$0xff]
        %v3950 = vld [vmem:[%s3150 + $0x171] sm:$0xff]
        %v3951 = vld [vmem:[%s3150 + $0x189] sm:$0xff]
        %v3952 = vld [vmem:[%s3150 + $0x191] sm:$0xff]
        %v3953 = vld [vmem:[%s3150 + $0x1a9] sm:$0xff]
        %v3954 = vld [vmem:[%s3150 + $0x1b1] sm:$0xff]
        %v3955 = vld [vmem:[%s3150 + $0x1c9] sm:$0xff]
        %v3956 = vld [vmem:[%s3150 + $0x1d1] sm:$0xff]
        %v3957 = vld [vmem:[%s3150 + $0x1e9] sm:$0xff]
        %v3958 = vld [vmem:[%s3150 + $0x1f1] sm:$0xff]
        %s3959 = scalar_lea.vmem %s3, 128
        %v3960 = vld [vmem:[%s3959] sm:$0xff]
        %v3961 = vld [vmem:[%s3959 + $0x8] sm:$0xff]
        %v3963 = vsel %vm644, %v3927, 0
        %v3966 = vsel %vm644, %v3928, 0
        %v3969 = vsel %vm644, %v3929, 0
        %v3972 = vsel %vm644, %v3930, 0
        %v3975 = vsel %vm644, %v3931, 0
        %v3978 = vsel %vm644, %v3932, 0
        %v3981 = vsel %vm644, %v3933, 0
        %v3984 = vsel %vm644, %v3934, 0
        %v3987 = vsel %vm644, %v3935, 0
        %v3990 = vsel %vm644, %v3936, 0
        %v3993 = vsel %vm644, %v3937, 0
        %v3996 = vsel %vm644, %v3938, 0
        %v3999 = vsel %vm644, %v3939, 0
        %v4002 = vsel %vm644, %v3940, 0
        %v4005 = vsel %vm644, %v3941, 0
        %v4008 = vsel %vm644, %v3942, 0
        %v4011 = vsel %vm644, %v3943, 0
        %v4014 = vsel %vm644, %v3944, 0
        %v4017 = vsel %vm644, %v3945, 0
        %v4020 = vsel %vm644, %v3946, 0
        %v4023 = vsel %vm644, %v3947, 0
        %v4026 = vsel %vm644, %v3948, 0
        %v4029 = vsel %vm644, %v3949, 0
        %v4032 = vsel %vm644, %v3950, 0
        %v4035 = vsel %vm644, %v3951, 0
        %v4038 = vsel %vm644, %v3952, 0
        %v4041 = vsel %vm644, %v3953, 0
        %v4044 = vsel %vm644, %v3954, 0
        %v4047 = vsel %vm644, %v3955, 0
        %v4050 = vsel %vm644, %v3956, 0
        %v4053 = vsel %vm644, %v3957, 0
        %v4056 = vsel %vm644, %v3958, 0
        %4058 = vmatprep.subr.mxu0 0.0
        %4059 = vmatpush1.msra.mxu0 %v3960
        %4060 = vmatprep.subr.mxu0 0.0
        %4061 = vmatpush1.msra.mxu0 %v3961
        %4062 = vmatprep.subr.mxu0 0.0
        %4063 = vmatpush1.msra.mxu0 0.0
        %4064 = vmatprep.subr.mxu0 0.0
        %4065 = vmatpush1.msra.mxu0 0.0
        %4066 = vmatprep.subr.mxu0 0.0
        %4067 = vmatpush1.msra.mxu0 0.0
        %4068 = vmatprep.subr.mxu0 0.0
        %4069 = vmatpush1.msra.mxu0 0.0
        %4070 = vmatprep.subr.mxu0 0.0
        %4071 = vmatpush1.msra.mxu0 0.0
        %4072 = vmatprep.subr.mxu0 0.0
        %4073 = vmatpush1.msra.mxu0 0.0
        %4074 = vmatprep.subr.mxu0 0.0
        %4075 = vmatpush1.msra.mxu0 0.0
        %4076 = vmatprep.subr.mxu0 0.0
        %4077 = vmatpush1.msra.mxu0 0.0
        %4078 = vmatprep.subr.mxu0 0.0
        %4079 = vmatpush1.msra.mxu0 0.0
        %4080 = vmatprep.subr.mxu0 0.0
        %4081 = vmatpush1.msra.mxu0 0.0
        %4082 = vmatprep.subr.mxu0 0.0
        %4083 = vmatpush1.msra.mxu0 0.0
        %4084 = vmatprep.subr.mxu0 0.0
        %4085 = vmatpush1.msra.mxu0 0.0
        %4086 = vmatprep.subr.mxu0 0.0
        %4087 = vmatpush1.msra.mxu0 0.0
        %4088 = vmatprep.subr.mxu0 0.0
        %4089 = vmatpush1.msra.mxu0 0.0
        %4090 = vmatprep.subr.mxu0 0.0
        %4091 = vmatpush1.msra.mxu0 0.0
        %4092 = vmatprep.subr.mxu0 0.0
        %4093 = vmatpush1.msra.mxu0 0.0
        %4094 = vmatprep.subr.mxu0 0.0
        %4095 = vmatpush1.msra.mxu0 0.0
        %4096 = vmatprep.subr.mxu0 0.0
        %4097 = vmatpush1.msra.mxu0 0.0
        %4098 = vmatprep.subr.mxu0 0.0
        %4099 = vmatpush1.msra.mxu0 0.0
        %4100 = vmatprep.subr.mxu0 0.0
        %4101 = vmatpush1.msra.mxu0 0.0
        %4102 = vmatprep.subr.mxu0 0.0
        %4103 = vmatpush1.msra.mxu0 0.0
        %4104 = vmatprep.subr.mxu0 0.0
        %4105 = vmatpush1.msra.mxu0 0.0
        %4106 = vmatprep.subr.mxu0 0.0
        %4107 = vmatpush1.msra.mxu0 0.0
        %4108 = vmatprep.subr.mxu0 0.0
        %4109 = vmatpush1.msra.mxu0 0.0
        %4110 = vmatprep.subr.mxu0 0.0
        %4111 = vmatpush1.msra.mxu0 0.0
        %4112 = vmatprep.subr.mxu0 0.0
        %4113 = vmatpush1.msra.mxu0 0.0
        %4114 = vmatprep.subr.mxu0 0.0
        %4115 = vmatpush1.msra.mxu0 0.0
        %4116 = vmatprep.subr.mxu0 0.0
        %4117 = vmatpush1.msra.mxu0 0.0
        %4118 = vmatprep.subr.mxu0 0.0
        %4119 = vmatpush1.msra.mxu0 0.0
        %4120 = vmatprep.subr.mxu0 0.0
        %4121 = vmatpush1.msra.mxu0 0.0
        %4122 = vmatprep.mubr.f32.mxu0 0.0
        %4123 = vmatmul.mubr.f32.gmra.mrb[0].mxu0 %v3963
        %v4124 = vpop.f32.mrb[0].mxu0
        %v4125 = vadd.f32 0.0, %v4124
        %v4126 = vpop.f32.mrb[0].mxu0
        %4127 = vmatprep.mubr.f32.mxu0 0.0
        %4128 = vmatmul.mubr.f32.gmra.mrb[0].mxu0 %v3966
        %v4129 = vpop.f32.mrb[0].mxu0
        %v4130 = vadd.f32 0.0, %v4129
        %v4131 = vpop.f32.mrb[0].mxu0
        %4132 = vmatprep.mubr.f32.mxu0 0.0
        %4133 = vmatmul.mubr.f32.gmra.mrb[0].mxu0 %v3969
        %v4134 = vpop.f32.mrb[0].mxu0
        %v4135 = vadd.f32 0.0, %v4134
        %v4136 = vpop.f32.mrb[0].mxu0
        %4137 = vmatprep.mubr.f32.mxu0 0.0
        %4138 = vmatmul.mubr.f32.gmra.mrb[0].mxu0 %v3972
        %v4139 = vpop.f32.mrb[0].mxu0
        %v4140 = vadd.f32 0.0, %v4139
        %v4141 = vpop.f32.mrb[0].mxu0
        %4142 = vmatprep.mubr.f32.mxu0 0.0
        %4143 = vmatmul.mubr.f32.gmra.mrb[0].mxu0 %v3975
        %v4144 = vpop.f32.mrb[0].mxu0
        %v4145 = vadd.f32 0.0, %v4144
        %v4146 = vpop.f32.mrb[0].mxu0
        %4147 = vmatprep.mubr.f32.mxu0 0.0
        %4148 = vmatmul.mubr.f32.gmra.mrb[0].mxu0 %v3978
        %v4149 = vpop.f32.mrb[0].mxu0
        %v4150 = vadd.f32 0.0, %v4149
        %v4151 = vpop.f32.mrb[0].mxu0
        %4152 = vmatprep.mubr.f32.mxu0 0.0
        %4153 = vmatmul.mubr.f32.gmra.mrb[0].mxu0 %v3981
        %v4154 = vpop.f32.mrb[0].mxu0
        %v4155 = vadd.f32 0.0, %v4154
        %v4156 = vpop.f32.mrb[0].mxu0
        %4157 = vmatprep.mubr.f32.mxu0 0.0
        %4158 = vmatmul.mubr.f32.gmra.mrb[0].mxu0 %v3984
        %v4159 = vpop.f32.mrb[0].mxu0
        %v4160 = vadd.f32 0.0, %v4159
        %v4161 = vpop.f32.mrb[0].mxu0
        %4162 = vmatprep.mubr.f32.mxu0 0.0
        %4163 = vmatmul.mubr.f32.gmra.mrb[0].mxu0 %v3987
        %v4164 = vpop.f32.mrb[0].mxu0
        %v4165 = vadd.f32 0.0, %v4164
        %v4166 = vpop.f32.mrb[0].mxu0
        %4167 = vmatprep.mubr.f32.mxu0 0.0
        %4168 = vmatmul.mubr.f32.gmra.mrb[0].mxu0 %v3990
        %v4169 = vpop.f32.mrb[0].mxu0
        %v4170 = vadd.f32 0.0, %v4169
        %v4171 = vpop.f32.mrb[0].mxu0
        %4172 = vmatprep.mubr.f32.mxu0 0.0
        %4173 = vmatmul.mubr.f32.gmra.mrb[0].mxu0 %v3993
        %v4174 = vpop.f32.mrb[0].mxu0
        %v4175 = vadd.f32 0.0, %v4174
        %v4176 = vpop.f32.mrb[0].mxu0
        %4177 = vmatprep.mubr.f32.mxu0 0.0
        %4178 = vmatmul.mubr.f32.gmra.mrb[0].mxu0 %v3996
        %v4179 = vpop.f32.mrb[0].mxu0
        %v4180 = vadd.f32 0.0, %v4179
        %v4181 = vpop.f32.mrb[0].mxu0
        %4182 = vmatprep.mubr.f32.mxu0 0.0
        %4183 = vmatmul.mubr.f32.gmra.mrb[0].mxu0 %v3999
        %v4184 = vpop.f32.mrb[0].mxu0
        %v4185 = vadd.f32 0.0, %v4184
        %v4186 = vpop.f32.mrb[0].mxu0
        %4187 = vmatprep.mubr.f32.mxu0 0.0
        %4188 = vmatmul.mubr.f32.gmra.mrb[0].mxu0 %v4002
        %v4189 = vpop.f32.mrb[0].mxu0
        %v4190 = vadd.f32 0.0, %v4189
        %v4191 = vpop.f32.mrb[0].mxu0
        %4192 = vmatprep.mubr.f32.mxu0 0.0
        %4193 = vmatmul.mubr.f32.gmra.mrb[0].mxu0 %v4005
        %v4194 = vpop.f32.mrb[0].mxu0
        %v4195 = vadd.f32 0.0, %v4194
        %v4196 = vpop.f32.mrb[0].mxu0
        %4197 = vmatprep.mubr.f32.mxu0 0.0
        %4198 = vmatmul.mubr.f32.gmra.mrb[0].mxu0 %v4008
        %v4199 = vpop.f32.mrb[0].mxu0
        %v4200 = vadd.f32 0.0, %v4199
        %v4201 = vpop.f32.mrb[0].mxu0
        %4202 = vmatprep.mubr.f32.mxu0 0.0
        %4203 = vmatmul.mubr.f32.gmra.mrb[0].mxu0 %v4011
        %v4204 = vpop.f32.mrb[0].mxu0
        %v4205 = vadd.f32 0.0, %v4204
        %v4206 = vpop.f32.mrb[0].mxu0
        %4207 = vmatprep.mubr.f32.mxu0 0.0
        %4208 = vmatmul.mubr.f32.gmra.mrb[0].mxu0 %v4014
        %v4209 = vpop.f32.mrb[0].mxu0
        %v4210 = vadd.f32 0.0, %v4209
        %v4211 = vpop.f32.mrb[0].mxu0
        %4212 = vmatprep.mubr.f32.mxu0 0.0
        %4213 = vmatmul.mubr.f32.gmra.mrb[0].mxu0 %v4017
        %v4214 = vpop.f32.mrb[0].mxu0
        %v4215 = vadd.f32 0.0, %v4214
        %v4216 = vpop.f32.mrb[0].mxu0
        %4217 = vmatprep.mubr.f32.mxu0 0.0
        %4218 = vmatmul.mubr.f32.gmra.mrb[0].mxu0 %v4020
        %v4219 = vpop.f32.mrb[0].mxu0
        %v4220 = vadd.f32 0.0, %v4219
        %v4221 = vpop.f32.mrb[0].mxu0
        %4222 = vmatprep.mubr.f32.mxu0 0.0
        %4223 = vmatmul.mubr.f32.gmra.mrb[0].mxu0 %v4023
        %v4224 = vpop.f32.mrb[0].mxu0
        %v4225 = vadd.f32 0.0, %v4224
        %v4226 = vpop.f32.mrb[0].mxu0
        %4227 = vmatprep.mubr.f32.mxu0 0.0
        %4228 = vmatmul.mubr.f32.gmra.mrb[0].mxu0 %v4026
        %v4229 = vpop.f32.mrb[0].mxu0
        %v4230 = vadd.f32 0.0, %v4229
        %v4231 = vpop.f32.mrb[0].mxu0
        %4232 = vmatprep.mubr.f32.mxu0 0.0
        %4233 = vmatmul.mubr.f32.gmra.mrb[0].mxu0 %v4029
        %v4234 = vpop.f32.mrb[0].mxu0
        %v4235 = vadd.f32 0.0, %v4234
        %v4236 = vpop.f32.mrb[0].mxu0
        %4237 = vmatprep.mubr.f32.mxu0 0.0
        %4238 = vmatmul.mubr.f32.gmra.mrb[0].mxu0 %v4032
        %v4239 = vpop.f32.mrb[0].mxu0
        %v4240 = vadd.f32 0.0, %v4239
        %v4241 = vpop.f32.mrb[0].mxu0
        %4242 = vmatprep.mubr.f32.mxu0 0.0
        %4243 = vmatmul.mubr.f32.gmra.mrb[0].mxu0 %v4035
        %v4244 = vpop.f32.mrb[0].mxu0
        %v4245 = vadd.f32 0.0, %v4244
        %v4246 = vpop.f32.mrb[0].mxu0
        %4247 = vmatprep.mubr.f32.mxu0 0.0
        %4248 = vmatmul.mubr.f32.gmra.mrb[0].mxu0 %v4038
        %v4249 = vpop.f32.mrb[0].mxu0
        %v4250 = vadd.f32 0.0, %v4249
        %v4251 = vpop.f32.mrb[0].mxu0
        %4252 = vmatprep.mubr.f32.mxu0 0.0
        %4253 = vmatmul.mubr.f32.gmra.mrb[0].mxu0 %v4041
        %v4254 = vpop.f32.mrb[0].mxu0
        %v4255 = vadd.f32 0.0, %v4254
        %v4256 = vpop.f32.mrb[0].mxu0
        %4257 = vmatprep.mubr.f32.mxu0 0.0
        %4258 = vmatmul.mubr.f32.gmra.mrb[0].mxu0 %v4044
        %v4259 = vpop.f32.mrb[0].mxu0
        %v4260 = vadd.f32 0.0, %v4259
        %v4261 = vpop.f32.mrb[0].mxu0
        %4262 = vmatprep.mubr.f32.mxu0 0.0
        %4263 = vmatmul.mubr.f32.gmra.mrb[0].mxu0 %v4047
        %v4264 = vpop.f32.mrb[0].mxu0
        %v4265 = vadd.f32 0.0, %v4264
        %v4266 = vpop.f32.mrb[0].mxu0
        %4267 = vmatprep.mubr.f32.mxu0 0.0
        %4268 = vmatmul.mubr.f32.gmra.mrb[0].mxu0 %v4050
        %v4269 = vpop.f32.mrb[0].mxu0
        %v4270 = vadd.f32 0.0, %v4269
        %v4271 = vpop.f32.mrb[0].mxu0
        %4272 = vmatprep.mubr.f32.mxu0 0.0
        %4273 = vmatmul.mubr.f32.gmra.mrb[0].mxu0 %v4053
        %v4274 = vpop.f32.mrb[0].mxu0
        %v4275 = vadd.f32 0.0, %v4274
        %v4276 = vpop.f32.mrb[0].mxu0
        %4277 = vmatprep.mubr.f32.mxu0 0.0
        %4278 = vmatmul.mubr.f32.gmra.mrb[0].mxu0 %v4056
        %v4279 = vpop.f32.mrb[0].mxu0
        %v4280 = vadd.f32 0.0, %v4279
        %v4281 = vpop.f32.mrb[0].mxu0
        %4282 = vdwg.mxu0
        %v4283 = vadd.f32 %v3895, %v4125
        %v4284 = vadd.f32 %v3896, %v4130
        %v4285 = vadd.f32 %v3897, %v4135
        %v4286 = vadd.f32 %v3898, %v4140
        %v4287 = vadd.f32 %v3899, %v4145
        %v4288 = vadd.f32 %v3900, %v4150
        %v4289 = vadd.f32 %v3901, %v4155
        %v4290 = vadd.f32 %v3902, %v4160
        %v4291 = vadd.f32 %v3903, %v4165
        %v4292 = vadd.f32 %v3904, %v4170
        %v4293 = vadd.f32 %v3905, %v4175
        %v4294 = vadd.f32 %v3906, %v4180
        %v4295 = vadd.f32 %v3907, %v4185
        %v4296 = vadd.f32 %v3908, %v4190
        %v4297 = vadd.f32 %v3909, %v4195
        %v4298 = vadd.f32 %v3910, %v4200
        %v4299 = vadd.f32 %v3911, %v4205
        %v4300 = vadd.f32 %v3912, %v4210
        %v4301 = vadd.f32 %v3913, %v4215
        %v4302 = vadd.f32 %v3914, %v4220
        %v4303 = vadd.f32 %v3915, %v4225
        %v4304 = vadd.f32 %v3916, %v4230
        %v4305 = vadd.f32 %v3917, %v4235
        %v4306 = vadd.f32 %v3918, %v4240
        %v4307 = vadd.f32 %v3919, %v4245
        %v4308 = vadd.f32 %v3920, %v4250
        %v4309 = vadd.f32 %v3921, %v4255
        %v4310 = vadd.f32 %v3922, %v4260
        %v4311 = vadd.f32 %v3923, %v4265
        %v4312 = vadd.f32 %v3924, %v4270
        %v4313 = vadd.f32 %v3925, %v4275
        %v4314 = vadd.f32 %v3926, %v4280
        %v4315 = vld [vmem:[#allocation3 + $0x7] sm:$0xff]
        %v4316 = vld [vmem:[#allocation3 + $0xf] sm:$0xff]
        %v4317 = vld [vmem:[#allocation3 + $0x27] sm:$0xff]
        %v4318 = vld [vmem:[#allocation3 + $0x2f] sm:$0xff]
        %v4319 = vld [vmem:[#allocation3 + $0x47] sm:$0xff]
        %v4320 = vld [vmem:[#allocation3 + $0x4f] sm:$0xff]
        %v4321 = vld [vmem:[#allocation3 + $0x67] sm:$0xff]
        %v4322 = vld [vmem:[#allocation3 + $0x6f] sm:$0xff]
        %v4323 = vld [vmem:[#allocation3 + $0x87] sm:$0xff]
        %v4324 = vld [vmem:[#allocation3 + $0x8f] sm:$0xff]
        %v4325 = vld [vmem:[#allocation3 + $0xa7] sm:$0xff]
        %v4326 = vld [vmem:[#allocation3 + $0xaf] sm:$0xff]
        %v4327 = vld [vmem:[#allocation3 + $0xc7] sm:$0xff]
        %v4328 = vld [vmem:[#allocation3 + $0xcf] sm:$0xff]
        %v4329 = vld [vmem:[#allocation3 + $0xe7] sm:$0xff]
        %v4330 = vld [vmem:[#allocation3 + $0xef] sm:$0xff]
        %v4331 = vld [vmem:[#allocation3 + $0x107] sm:$0xff]
        %v4332 = vld [vmem:[#allocation3 + $0x10f] sm:$0xff]
        %v4333 = vld [vmem:[#allocation3 + $0x127] sm:$0xff]
        %v4334 = vld [vmem:[#allocation3 + $0x12f] sm:$0xff]
        %v4335 = vld [vmem:[#allocation3 + $0x147] sm:$0xff]
        %v4336 = vld [vmem:[#allocation3 + $0x14f] sm:$0xff]
        %v4337 = vld [vmem:[#allocation3 + $0x167] sm:$0xff]
        %v4338 = vld [vmem:[#allocation3 + $0x16f] sm:$0xff]
        %v4339 = vld [vmem:[#allocation3 + $0x187] sm:$0xff]
        %v4340 = vld [vmem:[#allocation3 + $0x18f] sm:$0xff]
        %v4341 = vld [vmem:[#allocation3 + $0x1a7] sm:$0xff]
        %v4342 = vld [vmem:[#allocation3 + $0x1af] sm:$0xff]
        %v4343 = vld [vmem:[#allocation3 + $0x1c7] sm:$0xff]
        %v4344 = vld [vmem:[#allocation3 + $0x1cf] sm:$0xff]
        %v4345 = vld [vmem:[#allocation3 + $0x1e7] sm:$0xff]
        %v4346 = vld [vmem:[#allocation3 + $0x1ef] sm:$0xff]
        %v4347 = vld [vmem:[#allocation3 + $0x8] sm:$0xff]
        %v4348 = vld [vmem:[#allocation3 + $0x10] sm:$0xff]
        %v4349 = vld [vmem:[#allocation3 + $0x28] sm:$0xff]
        %v4350 = vld [vmem:[#allocation3 + $0x30] sm:$0xff]
        %v4351 = vld [vmem:[#allocation3 + $0x48] sm:$0xff]
        %v4352 = vld [vmem:[#allocation3 + $0x50] sm:$0xff]
        %v4353 = vld [vmem:[#allocation3 + $0x68] sm:$0xff]
        %v4354 = vld [vmem:[#allocation3 + $0x70] sm:$0xff]
        %v4355 = vld [vmem:[#allocation3 + $0x88] sm:$0xff]
        %v4356 = vld [vmem:[#allocation3 + $0x90] sm:$0xff]
        %v4357 = vld [vmem:[#allocation3 + $0xa8] sm:$0xff]
        %v4358 = vld [vmem:[#allocation3 + $0xb0] sm:$0xff]
        %v4359 = vld [vmem:[#allocation3 + $0xc8] sm:$0xff]
        %v4360 = vld [vmem:[#allocation3 + $0xd0] sm:$0xff]
        %v4361 = vld [vmem:[#allocation3 + $0xe8] sm:$0xff]
        %v4362 = vld [vmem:[#allocation3 + $0xf0] sm:$0xff]
        %v4363 = vld [vmem:[#allocation3 + $0x108] sm:$0xff]
        %v4364 = vld [vmem:[#allocation3 + $0x110] sm:$0xff]
        %v4365 = vld [vmem:[#allocation3 + $0x128] sm:$0xff]
        %v4366 = vld [vmem:[#allocation3 + $0x130] sm:$0xff]
        %v4367 = vld [vmem:[#allocation3 + $0x148] sm:$0xff]
        %v4368 = vld [vmem:[#allocation3 + $0x150] sm:$0xff]
        %v4369 = vld [vmem:[#allocation3 + $0x168] sm:$0xff]
        %v4370 = vld [vmem:[#allocation3 + $0x170] sm:$0xff]
        %v4371 = vld [vmem:[#allocation3 + $0x188] sm:$0xff]
        %v4372 = vld [vmem:[#allocation3 + $0x190] sm:$0xff]
        %v4373 = vld [vmem:[#allocation3 + $0x1a8] sm:$0xff]
        %v4374 = vld [vmem:[#allocation3 + $0x1b0] sm:$0xff]
        %v4375 = vld [vmem:[#allocation3 + $0x1c8] sm:$0xff]
        %v4376 = vld [vmem:[#allocation3 + $0x1d0] sm:$0xff]
        %v4377 = vld [vmem:[#allocation3 + $0x1e8] sm:$0xff]
        %v4378 = vld [vmem:[#allocation3 + $0x1f0] sm:$0xff]
        %v4379 = vmax.f32 %v4315, %v4347
        %v4380 = vmax.f32 %v4316, %v4348
        %v4381 = vmax.f32 %v4317, %v4349
        %v4382 = vmax.f32 %v4318, %v4350
        %v4383 = vmax.f32 %v4319, %v4351
        %v4384 = vmax.f32 %v4320, %v4352
        %v4385 = vmax.f32 %v4321, %v4353
        %v4386 = vmax.f32 %v4322, %v4354
        %v4387 = vmax.f32 %v4323, %v4355
        %v4388 = vmax.f32 %v4324, %v4356
        %v4389 = vmax.f32 %v4325, %v4357
        %v4390 = vmax.f32 %v4326, %v4358
        %v4391 = vmax.f32 %v4327, %v4359
        %v4392 = vmax.f32 %v4328, %v4360
        %v4393 = vmax.f32 %v4329, %v4361
        %v4394 = vmax.f32 %v4330, %v4362
        %v4395 = vmax.f32 %v4331, %v4363
        %v4396 = vmax.f32 %v4332, %v4364
        %v4397 = vmax.f32 %v4333, %v4365
        %v4398 = vmax.f32 %v4334, %v4366
        %v4399 = vmax.f32 %v4335, %v4367
        %v4400 = vmax.f32 %v4336, %v4368
        %v4401 = vmax.f32 %v4337, %v4369
        %v4402 = vmax.f32 %v4338, %v4370
        %v4403 = vmax.f32 %v4339, %v4371
        %v4404 = vmax.f32 %v4340, %v4372
        %v4405 = vmax.f32 %v4341, %v4373
        %v4406 = vmax.f32 %v4342, %v4374
        %v4407 = vmax.f32 %v4343, %v4375
        %v4408 = vmax.f32 %v4344, %v4376
        %v4409 = vmax.f32 %v4345, %v4377
        %v4410 = vmax.f32 %v4346, %v4378
        %v4411 = vld [vmem:[#allocation3 + $0x9] sm:$0xff]
        %v4412 = vld [vmem:[#allocation3 + $0x11] sm:$0xff]
        %v4413 = vld [vmem:[#allocation3 + $0x29] sm:$0xff]
        %v4414 = vld [vmem:[#allocation3 + $0x31] sm:$0xff]
        %v4415 = vld [vmem:[#allocation3 + $0x49] sm:$0xff]
        %v4416 = vld [vmem:[#allocation3 + $0x51] sm:$0xff]
        %v4417 = vld [vmem:[#allocation3 + $0x69] sm:$0xff]
        %v4418 = vld [vmem:[#allocation3 + $0x71] sm:$0xff]
        %v4419 = vld [vmem:[#allocation3 + $0x89] sm:$0xff]
        %v4420 = vld [vmem:[#allocation3 + $0x91] sm:$0xff]
        %v4421 = vld [vmem:[#allocation3 + $0xa9] sm:$0xff]
        %v4422 = vld [vmem:[#allocation3 + $0xb1] sm:$0xff]
        %v4423 = vld [vmem:[#allocation3 + $0xc9] sm:$0xff]
        %v4424 = vld [vmem:[#allocation3 + $0xd1] sm:$0xff]
        %v4425 = vld [vmem:[#allocation3 + $0xe9] sm:$0xff]
        %v4426 = vld [vmem:[#allocation3 + $0xf1] sm:$0xff]
        %v4427 = vld [vmem:[#allocation3 + $0x109] sm:$0xff]
        %v4428 = vld [vmem:[#allocation3 + $0x111] sm:$0xff]
        %v4429 = vld [vmem:[#allocation3 + $0x129] sm:$0xff]
        %v4430 = vld [vmem:[#allocation3 + $0x131] sm:$0xff]
        %v4431 = vld [vmem:[#allocation3 + $0x149] sm:$0xff]
        %v4432 = vld [vmem:[#allocation3 + $0x151] sm:$0xff]
        %v4433 = vld [vmem:[#allocation3 + $0x169] sm:$0xff]
        %v4434 = vld [vmem:[#allocation3 + $0x171] sm:$0xff]
        %v4435 = vld [vmem:[#allocation3 + $0x189] sm:$0xff]
        %v4436 = vld [vmem:[#allocation3 + $0x191] sm:$0xff]
        %v4437 = vld [vmem:[#allocation3 + $0x1a9] sm:$0xff]
        %v4438 = vld [vmem:[#allocation3 + $0x1b1] sm:$0xff]
        %v4439 = vld [vmem:[#allocation3 + $0x1c9] sm:$0xff]
        %v4440 = vld [vmem:[#allocation3 + $0x1d1] sm:$0xff]
        %v4441 = vld [vmem:[#allocation3 + $0x1e9] sm:$0xff]
        %v4442 = vld [vmem:[#allocation3 + $0x1f1] sm:$0xff]
        %v4443 = vmax.f32 %v4379, %v4411
        %v4444 = vmax.f32 %v4380, %v4412
        %v4445 = vmax.f32 %v4381, %v4413
        %v4446 = vmax.f32 %v4382, %v4414
        %v4447 = vmax.f32 %v4383, %v4415
        %v4448 = vmax.f32 %v4384, %v4416
        %v4449 = vmax.f32 %v4385, %v4417
        %v4450 = vmax.f32 %v4386, %v4418
        %v4451 = vmax.f32 %v4387, %v4419
        %v4452 = vmax.f32 %v4388, %v4420
        %v4453 = vmax.f32 %v4389, %v4421
        %v4454 = vmax.f32 %v4390, %v4422
        %v4455 = vmax.f32 %v4391, %v4423
        %v4456 = vmax.f32 %v4392, %v4424
        %v4457 = vmax.f32 %v4393, %v4425
        %v4458 = vmax.f32 %v4394, %v4426
        %v4459 = vmax.f32 %v4395, %v4427
        %v4460 = vmax.f32 %v4396, %v4428
        %v4461 = vmax.f32 %v4397, %v4429
        %v4462 = vmax.f32 %v4398, %v4430
        %v4463 = vmax.f32 %v4399, %v4431
        %v4464 = vmax.f32 %v4400, %v4432
        %v4465 = vmax.f32 %v4401, %v4433
        %v4466 = vmax.f32 %v4402, %v4434
        %v4467 = vmax.f32 %v4403, %v4435
        %v4468 = vmax.f32 %v4404, %v4436
        %v4469 = vmax.f32 %v4405, %v4437
        %v4470 = vmax.f32 %v4406, %v4438
        %v4471 = vmax.f32 %v4407, %v4439
        %v4472 = vmax.f32 %v4408, %v4440
        %v4473 = vmax.f32 %v4409, %v4441
        %v4474 = vmax.f32 %v4410, %v4442
        %v4475 = vld [vmem:[%s854 + $0x7] sm:$0xff]
        %v4476 = vld [vmem:[%s854 + $0xf] sm:$0xff]
        %v4477 = vld [vmem:[%s854 + $0x27] sm:$0xff]
        %v4478 = vld [vmem:[%s854 + $0x2f] sm:$0xff]
        %v4479 = vld [vmem:[%s854 + $0x47] sm:$0xff]
        %v4480 = vld [vmem:[%s854 + $0x4f] sm:$0xff]
        %v4481 = vld [vmem:[%s854 + $0x67] sm:$0xff]
        %v4482 = vld [vmem:[%s854 + $0x6f] sm:$0xff]
        %v4483 = vld [vmem:[%s854 + $0x87] sm:$0xff]
        %v4484 = vld [vmem:[%s854 + $0x8f] sm:$0xff]
        %v4485 = vld [vmem:[%s854 + $0xa7] sm:$0xff]
        %v4486 = vld [vmem:[%s854 + $0xaf] sm:$0xff]
        %v4487 = vld [vmem:[%s854 + $0xc7] sm:$0xff]
        %v4488 = vld [vmem:[%s854 + $0xcf] sm:$0xff]
        %v4489 = vld [vmem:[%s854 + $0xe7] sm:$0xff]
        %v4490 = vld [vmem:[%s854 + $0xef] sm:$0xff]
        %v4491 = vld [vmem:[%s854 + $0x107] sm:$0xff]
        %v4492 = vld [vmem:[%s854 + $0x10f] sm:$0xff]
        %v4493 = vld [vmem:[%s854 + $0x127] sm:$0xff]
        %v4494 = vld [vmem:[%s854 + $0x12f] sm:$0xff]
        %v4495 = vld [vmem:[%s854 + $0x147] sm:$0xff]
        %v4496 = vld [vmem:[%s854 + $0x14f] sm:$0xff]
        %v4497 = vld [vmem:[%s854 + $0x167] sm:$0xff]
        %v4498 = vld [vmem:[%s854 + $0x16f] sm:$0xff]
        %v4499 = vld [vmem:[%s854 + $0x187] sm:$0xff]
        %v4500 = vld [vmem:[%s854 + $0x18f] sm:$0xff]
        %v4501 = vld [vmem:[%s854 + $0x1a7] sm:$0xff]
        %v4502 = vld [vmem:[%s854 + $0x1af] sm:$0xff]
        %v4503 = vld [vmem:[%s854 + $0x1c7] sm:$0xff]
        %v4504 = vld [vmem:[%s854 + $0x1cf] sm:$0xff]
        %v4505 = vld [vmem:[%s854 + $0x1e7] sm:$0xff]
        %v4506 = vld [vmem:[%s854 + $0x1ef] sm:$0xff]
        %v4507 = vmax.f32 %v4443, %v4475
        %v4508 = vmax.f32 %v4444, %v4476
        %v4509 = vmax.f32 %v4445, %v4477
        %v4510 = vmax.f32 %v4446, %v4478
        %v4511 = vmax.f32 %v4447, %v4479
        %v4512 = vmax.f32 %v4448, %v4480
        %v4513 = vmax.f32 %v4449, %v4481
        %v4514 = vmax.f32 %v4450, %v4482
        %v4515 = vmax.f32 %v4451, %v4483
        %v4516 = vmax.f32 %v4452, %v4484
        %v4517 = vmax.f32 %v4453, %v4485
        %v4518 = vmax.f32 %v4454, %v4486
        %v4519 = vmax.f32 %v4455, %v4487
        %v4520 = vmax.f32 %v4456, %v4488
        %v4521 = vmax.f32 %v4457, %v4489
        %v4522 = vmax.f32 %v4458, %v4490
        %v4523 = vmax.f32 %v4459, %v4491
        %v4524 = vmax.f32 %v4460, %v4492
        %v4525 = vmax.f32 %v4461, %v4493
        %v4526 = vmax.f32 %v4462, %v4494
        %v4527 = vmax.f32 %v4463, %v4495
        %v4528 = vmax.f32 %v4464, %v4496
        %v4529 = vmax.f32 %v4465, %v4497
        %v4530 = vmax.f32 %v4466, %v4498
        %v4531 = vmax.f32 %v4467, %v4499
        %v4532 = vmax.f32 %v4468, %v4500
        %v4533 = vmax.f32 %v4469, %v4501
        %v4534 = vmax.f32 %v4470, %v4502
        %v4535 = vmax.f32 %v4471, %v4503
        %v4536 = vmax.f32 %v4472, %v4504
        %v4537 = vmax.f32 %v4473, %v4505
        %v4538 = vmax.f32 %v4474, %v4506
        %v4539 = vld [vmem:[%s854 + $0x8] sm:$0xff]
        %v4540 = vld [vmem:[%s854 + $0x10] sm:$0xff]
        %v4541 = vld [vmem:[%s854 + $0x28] sm:$0xff]
        %v4542 = vld [vmem:[%s854 + $0x30] sm:$0xff]
        %v4543 = vld [vmem:[%s854 + $0x48] sm:$0xff]
        %v4544 = vld [vmem:[%s854 + $0x50] sm:$0xff]
        %v4545 = vld [vmem:[%s854 + $0x68] sm:$0xff]
        %v4546 = vld [vmem:[%s854 + $0x70] sm:$0xff]
        %v4547 = vld [vmem:[%s854 + $0x88] sm:$0xff]
        %v4548 = vld [vmem:[%s854 + $0x90] sm:$0xff]
        %v4549 = vld [vmem:[%s854 + $0xa8] sm:$0xff]
        %v4550 = vld [vmem:[%s854 + $0xb0] sm:$0xff]
        %v4551 = vld [vmem:[%s854 + $0xc8] sm:$0xff]
        %v4552 = vld [vmem:[%s854 + $0xd0] sm:$0xff]
        %v4553 = vld [vmem:[%s854 + $0xe8] sm:$0xff]
        %v4554 = vld [vmem:[%s854 + $0xf0] sm:$0xff]
        %v4555 = vld [vmem:[%s854 + $0x108] sm:$0xff]
        %v4556 = vld [vmem:[%s854 + $0x110] sm:$0xff]
        %v4557 = vld [vmem:[%s854 + $0x128] sm:$0xff]
        %v4558 = vld [vmem:[%s854 + $0x130] sm:$0xff]
        %v4559 = vld [vmem:[%s854 + $0x148] sm:$0xff]
        %v4560 = vld [vmem:[%s854 + $0x150] sm:$0xff]
        %v4561 = vld [vmem:[%s854 + $0x168] sm:$0xff]
        %v4562 = vld [vmem:[%s854 + $0x170] sm:$0xff]
        %v4563 = vld [vmem:[%s854 + $0x188] sm:$0xff]
        %v4564 = vld [vmem:[%s854 + $0x190] sm:$0xff]
        %v4565 = vld [vmem:[%s854 + $0x1a8] sm:$0xff]
        %v4566 = vld [vmem:[%s854 + $0x1b0] sm:$0xff]
        %v4567 = vld [vmem:[%s854 + $0x1c8] sm:$0xff]
        %v4568 = vld [vmem:[%s854 + $0x1d0] sm:$0xff]
        %v4569 = vld [vmem:[%s854 + $0x1e8] sm:$0xff]
        %v4570 = vld [vmem:[%s854 + $0x1f0] sm:$0xff]
        %v4571 = vmax.f32 %v4507, %v4539
        %v4572 = vmax.f32 %v4508, %v4540
        %v4573 = vmax.f32 %v4509, %v4541
        %v4574 = vmax.f32 %v4510, %v4542
        %v4575 = vmax.f32 %v4511, %v4543
        %v4576 = vmax.f32 %v4512, %v4544
        %v4577 = vmax.f32 %v4513, %v4545
        %v4578 = vmax.f32 %v4514, %v4546
        %v4579 = vmax.f32 %v4515, %v4547
        %v4580 = vmax.f32 %v4516, %v4548
        %v4581 = vmax.f32 %v4517, %v4549
        %v4582 = vmax.f32 %v4518, %v4550
        %v4583 = vmax.f32 %v4519, %v4551
        %v4584 = vmax.f32 %v4520, %v4552
        %v4585 = vmax.f32 %v4521, %v4553
        %v4586 = vmax.f32 %v4522, %v4554
        %v4587 = vmax.f32 %v4523, %v4555
        %v4588 = vmax.f32 %v4524, %v4556
        %v4589 = vmax.f32 %v4525, %v4557
        %v4590 = vmax.f32 %v4526, %v4558
        %v4591 = vmax.f32 %v4527, %v4559
        %v4592 = vmax.f32 %v4528, %v4560
        %v4593 = vmax.f32 %v4529, %v4561
        %v4594 = vmax.f32 %v4530, %v4562
        %v4595 = vmax.f32 %v4531, %v4563
        %v4596 = vmax.f32 %v4532, %v4564
        %v4597 = vmax.f32 %v4533, %v4565
        %v4598 = vmax.f32 %v4534, %v4566
        %v4599 = vmax.f32 %v4535, %v4567
        %v4600 = vmax.f32 %v4536, %v4568
        %v4601 = vmax.f32 %v4537, %v4569
        %v4602 = vmax.f32 %v4538, %v4570
        %v4603 = vld [vmem:[%s854 + $0x9] sm:$0xff]
        %v4604 = vld [vmem:[%s854 + $0x11] sm:$0xff]
        %v4605 = vld [vmem:[%s854 + $0x29] sm:$0xff]
        %v4606 = vld [vmem:[%s854 + $0x31] sm:$0xff]
        %v4607 = vld [vmem:[%s854 + $0x49] sm:$0xff]
        %v4608 = vld [vmem:[%s854 + $0x51] sm:$0xff]
        %v4609 = vld [vmem:[%s854 + $0x69] sm:$0xff]
        %v4610 = vld [vmem:[%s854 + $0x71] sm:$0xff]
        %v4611 = vld [vmem:[%s854 + $0x89] sm:$0xff]
        %v4612 = vld [vmem:[%s854 + $0x91] sm:$0xff]
        %v4613 = vld [vmem:[%s854 + $0xa9] sm:$0xff]
        %v4614 = vld [vmem:[%s854 + $0xb1] sm:$0xff]
        %v4615 = vld [vmem:[%s854 + $0xc9] sm:$0xff]
        %v4616 = vld [vmem:[%s854 + $0xd1] sm:$0xff]
        %v4617 = vld [vmem:[%s854 + $0xe9] sm:$0xff]
        %v4618 = vld [vmem:[%s854 + $0xf1] sm:$0xff]
        %v4619 = vld [vmem:[%s854 + $0x109] sm:$0xff]
        %v4620 = vld [vmem:[%s854 + $0x111] sm:$0xff]
        %v4621 = vld [vmem:[%s854 + $0x129] sm:$0xff]
        %v4622 = vld [vmem:[%s854 + $0x131] sm:$0xff]
        %v4623 = vld [vmem:[%s854 + $0x149] sm:$0xff]
        %v4624 = vld [vmem:[%s854 + $0x151] sm:$0xff]
        %v4625 = vld [vmem:[%s854 + $0x169] sm:$0xff]
        %v4626 = vld [vmem:[%s854 + $0x171] sm:$0xff]
        %v4627 = vld [vmem:[%s854 + $0x189] sm:$0xff]
        %v4628 = vld [vmem:[%s854 + $0x191] sm:$0xff]
        %v4629 = vld [vmem:[%s854 + $0x1a9] sm:$0xff]
        %v4630 = vld [vmem:[%s854 + $0x1b1] sm:$0xff]
        %v4631 = vld [vmem:[%s854 + $0x1c9] sm:$0xff]
        %v4632 = vld [vmem:[%s854 + $0x1d1] sm:$0xff]
        %v4633 = vld [vmem:[%s854 + $0x1e9] sm:$0xff]
        %v4634 = vld [vmem:[%s854 + $0x1f1] sm:$0xff]
        %v4635 = vmax.f32 %v4571, %v4603
        %v4636 = vmax.f32 %v4572, %v4604
        %v4637 = vmax.f32 %v4573, %v4605
        %v4638 = vmax.f32 %v4574, %v4606
        %v4639 = vmax.f32 %v4575, %v4607
        %v4640 = vmax.f32 %v4576, %v4608
        %v4641 = vmax.f32 %v4577, %v4609
        %v4642 = vmax.f32 %v4578, %v4610
        %v4643 = vmax.f32 %v4579, %v4611
        %v4644 = vmax.f32 %v4580, %v4612
        %v4645 = vmax.f32 %v4581, %v4613
        %v4646 = vmax.f32 %v4582, %v4614
        %v4647 = vmax.f32 %v4583, %v4615
        %v4648 = vmax.f32 %v4584, %v4616
        %v4649 = vmax.f32 %v4585, %v4617
        %v4650 = vmax.f32 %v4586, %v4618
        %v4651 = vmax.f32 %v4587, %v4619
        %v4652 = vmax.f32 %v4588, %v4620
        %v4653 = vmax.f32 %v4589, %v4621
        %v4654 = vmax.f32 %v4590, %v4622
        %v4655 = vmax.f32 %v4591, %v4623
        %v4656 = vmax.f32 %v4592, %v4624
        %v4657 = vmax.f32 %v4593, %v4625
        %v4658 = vmax.f32 %v4594, %v4626
        %v4659 = vmax.f32 %v4595, %v4627
        %v4660 = vmax.f32 %v4596, %v4628
        %v4661 = vmax.f32 %v4597, %v4629
        %v4662 = vmax.f32 %v4598, %v4630
        %v4663 = vmax.f32 %v4599, %v4631
        %v4664 = vmax.f32 %v4600, %v4632
        %v4665 = vmax.f32 %v4601, %v4633
        %v4666 = vmax.f32 %v4602, %v4634
        %s4667 = scalar_lea.vmem [#allocation3], 64
        %v4668 = vld [vmem:[%s4667 + $0x7] sm:$0xff]
        %v4669 = vld [vmem:[%s4667 + $0xf] sm:$0xff]
        %v4670 = vld [vmem:[%s4667 + $0x27] sm:$0xff]
        %v4671 = vld [vmem:[%s4667 + $0x2f] sm:$0xff]
        %v4672 = vld [vmem:[%s4667 + $0x47] sm:$0xff]
        %v4673 = vld [vmem:[%s4667 + $0x4f] sm:$0xff]
        %v4674 = vld [vmem:[%s4667 + $0x67] sm:$0xff]
        %v4675 = vld [vmem:[%s4667 + $0x6f] sm:$0xff]
        %v4676 = vld [vmem:[%s4667 + $0x87] sm:$0xff]
        %v4677 = vld [vmem:[%s4667 + $0x8f] sm:$0xff]
        %v4678 = vld [vmem:[%s4667 + $0xa7] sm:$0xff]
        %v4679 = vld [vmem:[%s4667 + $0xaf] sm:$0xff]
        %v4680 = vld [vmem:[%s4667 + $0xc7] sm:$0xff]
        %v4681 = vld [vmem:[%s4667 + $0xcf] sm:$0xff]
        %v4682 = vld [vmem:[%s4667 + $0xe7] sm:$0xff]
        %v4683 = vld [vmem:[%s4667 + $0xef] sm:$0xff]
        %v4684 = vld [vmem:[%s4667 + $0x107] sm:$0xff]
        %v4685 = vld [vmem:[%s4667 + $0x10f] sm:$0xff]
        %v4686 = vld [vmem:[%s4667 + $0x127] sm:$0xff]
        %v4687 = vld [vmem:[%s4667 + $0x12f] sm:$0xff]
        %v4688 = vld [vmem:[%s4667 + $0x147] sm:$0xff]
        %v4689 = vld [vmem:[%s4667 + $0x14f] sm:$0xff]
        %v4690 = vld [vmem:[%s4667 + $0x167] sm:$0xff]
        %v4691 = vld [vmem:[%s4667 + $0x16f] sm:$0xff]
        %v4692 = vld [vmem:[%s4667 + $0x187] sm:$0xff]
        %v4693 = vld [vmem:[%s4667 + $0x18f] sm:$0xff]
        %v4694 = vld [vmem:[%s4667 + $0x1a7] sm:$0xff]
        %v4695 = vld [vmem:[%s4667 + $0x1af] sm:$0xff]
        %v4696 = vld [vmem:[%s4667 + $0x1c7] sm:$0xff]
        %v4697 = vld [vmem:[%s4667 + $0x1cf] sm:$0xff]
        %v4698 = vld [vmem:[%s4667 + $0x1e7] sm:$0xff]
        %v4699 = vld [vmem:[%s4667 + $0x1ef] sm:$0xff]
        %v4700 = vmax.f32 %v4635, %v4668
        %v4701 = vmax.f32 %v4636, %v4669
        %v4702 = vmax.f32 %v4637, %v4670
        %v4703 = vmax.f32 %v4638, %v4671
        %v4704 = vmax.f32 %v4639, %v4672
        %v4705 = vmax.f32 %v4640, %v4673
        %v4706 = vmax.f32 %v4641, %v4674
        %v4707 = vmax.f32 %v4642, %v4675
        %v4708 = vmax.f32 %v4643, %v4676
        %v4709 = vmax.f32 %v4644, %v4677
        %v4710 = vmax.f32 %v4645, %v4678
        %v4711 = vmax.f32 %v4646, %v4679
        %v4712 = vmax.f32 %v4647, %v4680
        %v4713 = vmax.f32 %v4648, %v4681
        %v4714 = vmax.f32 %v4649, %v4682
        %v4715 = vmax.f32 %v4650, %v4683
        %v4716 = vmax.f32 %v4651, %v4684
        %v4717 = vmax.f32 %v4652, %v4685
        %v4718 = vmax.f32 %v4653, %v4686
        %v4719 = vmax.f32 %v4654, %v4687
        %v4720 = vmax.f32 %v4655, %v4688
        %v4721 = vmax.f32 %v4656, %v4689
        %v4722 = vmax.f32 %v4657, %v4690
        %v4723 = vmax.f32 %v4658, %v4691
        %v4724 = vmax.f32 %v4659, %v4692
        %v4725 = vmax.f32 %v4660, %v4693
        %v4726 = vmax.f32 %v4661, %v4694
        %v4727 = vmax.f32 %v4662, %v4695
        %v4728 = vmax.f32 %v4663, %v4696
        %v4729 = vmax.f32 %v4664, %v4697
        %v4730 = vmax.f32 %v4665, %v4698
        %v4731 = vmax.f32 %v4666, %v4699
        %v4732 = vld [vmem:[%s4667 + $0x8] sm:$0xff]
        %v4733 = vld [vmem:[%s4667 + $0x10] sm:$0xff]
        %v4734 = vld [vmem:[%s4667 + $0x28] sm:$0xff]
        %v4735 = vld [vmem:[%s4667 + $0x30] sm:$0xff]
        %v4736 = vld [vmem:[%s4667 + $0x48] sm:$0xff]
        %v4737 = vld [vmem:[%s4667 + $0x50] sm:$0xff]
        %v4738 = vld [vmem:[%s4667 + $0x68] sm:$0xff]
        %v4739 = vld [vmem:[%s4667 + $0x70] sm:$0xff]
        %v4740 = vld [vmem:[%s4667 + $0x88] sm:$0xff]
        %v4741 = vld [vmem:[%s4667 + $0x90] sm:$0xff]
        %v4742 = vld [vmem:[%s4667 + $0xa8] sm:$0xff]
        %v4743 = vld [vmem:[%s4667 + $0xb0] sm:$0xff]
        %v4744 = vld [vmem:[%s4667 + $0xc8] sm:$0xff]
        %v4745 = vld [vmem:[%s4667 + $0xd0] sm:$0xff]
        %v4746 = vld [vmem:[%s4667 + $0xe8] sm:$0xff]
        %v4747 = vld [vmem:[%s4667 + $0xf0] sm:$0xff]
        %v4748 = vld [vmem:[%s4667 + $0x108] sm:$0xff]
        %v4749 = vld [vmem:[%s4667 + $0x110] sm:$0xff]
        %v4750 = vld [vmem:[%s4667 + $0x128] sm:$0xff]
        %v4751 = vld [vmem:[%s4667 + $0x130] sm:$0xff]
        %v4752 = vld [vmem:[%s4667 + $0x148] sm:$0xff]
        %v4753 = vld [vmem:[%s4667 + $0x150] sm:$0xff]
        %v4754 = vld [vmem:[%s4667 + $0x168] sm:$0xff]
        %v4755 = vld [vmem:[%s4667 + $0x170] sm:$0xff]
        %v4756 = vld [vmem:[%s4667 + $0x188] sm:$0xff]
        %v4757 = vld [vmem:[%s4667 + $0x190] sm:$0xff]
        %v4758 = vld [vmem:[%s4667 + $0x1a8] sm:$0xff]
        %v4759 = vld [vmem:[%s4667 + $0x1b0] sm:$0xff]
        %v4760 = vld [vmem:[%s4667 + $0x1c8] sm:$0xff]
        %v4761 = vld [vmem:[%s4667 + $0x1d0] sm:$0xff]
        %v4762 = vld [vmem:[%s4667 + $0x1e8] sm:$0xff]
        %v4763 = vld [vmem:[%s4667 + $0x1f0] sm:$0xff]
        %v4764 = vmax.f32 %v4700, %v4732
        %v4765 = vmax.f32 %v4701, %v4733
        %v4766 = vmax.f32 %v4702, %v4734
        %v4767 = vmax.f32 %v4703, %v4735
        %v4768 = vmax.f32 %v4704, %v4736
        %v4769 = vmax.f32 %v4705, %v4737
        %v4770 = vmax.f32 %v4706, %v4738
        %v4771 = vmax.f32 %v4707, %v4739
        %v4772 = vmax.f32 %v4708, %v4740
        %v4773 = vmax.f32 %v4709, %v4741
        %v4774 = vmax.f32 %v4710, %v4742
        %v4775 = vmax.f32 %v4711, %v4743
        %v4776 = vmax.f32 %v4712, %v4744
        %v4777 = vmax.f32 %v4713, %v4745
        %v4778 = vmax.f32 %v4714, %v4746
        %v4779 = vmax.f32 %v4715, %v4747
        %v4780 = vmax.f32 %v4716, %v4748
        %v4781 = vmax.f32 %v4717, %v4749
        %v4782 = vmax.f32 %v4718, %v4750
        %v4783 = vmax.f32 %v4719, %v4751
        %v4784 = vmax.f32 %v4720, %v4752
        %v4785 = vmax.f32 %v4721, %v4753
        %v4786 = vmax.f32 %v4722, %v4754
        %v4787 = vmax.f32 %v4723, %v4755
        %v4788 = vmax.f32 %v4724, %v4756
        %v4789 = vmax.f32 %v4725, %v4757
        %v4790 = vmax.f32 %v4726, %v4758
        %v4791 = vmax.f32 %v4727, %v4759
        %v4792 = vmax.f32 %v4728, %v4760
        %v4793 = vmax.f32 %v4729, %v4761
        %v4794 = vmax.f32 %v4730, %v4762
        %v4795 = vmax.f32 %v4731, %v4763
        %v4796 = vld [vmem:[%s4667 + $0x9] sm:$0xff]
        %v4797 = vld [vmem:[%s4667 + $0x11] sm:$0xff]
        %v4798 = vld [vmem:[%s4667 + $0x29] sm:$0xff]
        %v4799 = vld [vmem:[%s4667 + $0x31] sm:$0xff]
        %v4800 = vld [vmem:[%s4667 + $0x49] sm:$0xff]
        %v4801 = vld [vmem:[%s4667 + $0x51] sm:$0xff]
        %v4802 = vld [vmem:[%s4667 + $0x69] sm:$0xff]
        %v4803 = vld [vmem:[%s4667 + $0x71] sm:$0xff]
        %v4804 = vld [vmem:[%s4667 + $0x89] sm:$0xff]
        %v4805 = vld [vmem:[%s4667 + $0x91] sm:$0xff]
        %v4806 = vld [vmem:[%s4667 + $0xa9] sm:$0xff]
        %v4807 = vld [vmem:[%s4667 + $0xb1] sm:$0xff]
        %v4808 = vld [vmem:[%s4667 + $0xc9] sm:$0xff]
        %v4809 = vld [vmem:[%s4667 + $0xd1] sm:$0xff]
        %v4810 = vld [vmem:[%s4667 + $0xe9] sm:$0xff]
        %v4811 = vld [vmem:[%s4667 + $0xf1] sm:$0xff]
        %v4812 = vld [vmem:[%s4667 + $0x109] sm:$0xff]
        %v4813 = vld [vmem:[%s4667 + $0x111] sm:$0xff]
        %v4814 = vld [vmem:[%s4667 + $0x129] sm:$0xff]
        %v4815 = vld [vmem:[%s4667 + $0x131] sm:$0xff]
        %v4816 = vld [vmem:[%s4667 + $0x149] sm:$0xff]
        %v4817 = vld [vmem:[%s4667 + $0x151] sm:$0xff]
        %v4818 = vld [vmem:[%s4667 + $0x169] sm:$0xff]
        %v4819 = vld [vmem:[%s4667 + $0x171] sm:$0xff]
        %v4820 = vld [vmem:[%s4667 + $0x189] sm:$0xff]
        %v4821 = vld [vmem:[%s4667 + $0x191] sm:$0xff]
        %v4822 = vld [vmem:[%s4667 + $0x1a9] sm:$0xff]
        %v4823 = vld [vmem:[%s4667 + $0x1b1] sm:$0xff]
        %v4824 = vld [vmem:[%s4667 + $0x1c9] sm:$0xff]
        %v4825 = vld [vmem:[%s4667 + $0x1d1] sm:$0xff]
        %v4826 = vld [vmem:[%s4667 + $0x1e9] sm:$0xff]
        %v4827 = vld [vmem:[%s4667 + $0x1f1] sm:$0xff]
        %v4828 = vmax.f32 %v4764, %v4796
        %v4829 = vmax.f32 %v4765, %v4797
        %v4830 = vmax.f32 %v4766, %v4798
        %v4831 = vmax.f32 %v4767, %v4799
        %v4832 = vmax.f32 %v4768, %v4800
        %v4833 = vmax.f32 %v4769, %v4801
        %v4834 = vmax.f32 %v4770, %v4802
        %v4835 = vmax.f32 %v4771, %v4803
        %v4836 = vmax.f32 %v4772, %v4804
        %v4837 = vmax.f32 %v4773, %v4805
        %v4838 = vmax.f32 %v4774, %v4806
        %v4839 = vmax.f32 %v4775, %v4807
        %v4840 = vmax.f32 %v4776, %v4808
        %v4841 = vmax.f32 %v4777, %v4809
        %v4842 = vmax.f32 %v4778, %v4810
        %v4843 = vmax.f32 %v4779, %v4811
        %v4844 = vmax.f32 %v4780, %v4812
        %v4845 = vmax.f32 %v4781, %v4813
        %v4846 = vmax.f32 %v4782, %v4814
        %v4847 = vmax.f32 %v4783, %v4815
        %v4848 = vmax.f32 %v4784, %v4816
        %v4849 = vmax.f32 %v4785, %v4817
        %v4850 = vmax.f32 %v4786, %v4818
        %v4851 = vmax.f32 %v4787, %v4819
        %v4852 = vmax.f32 %v4788, %v4820
        %v4853 = vmax.f32 %v4789, %v4821
        %v4854 = vmax.f32 %v4790, %v4822
        %v4855 = vmax.f32 %v4791, %v4823
        %v4856 = vmax.f32 %v4792, %v4824
        %v4857 = vmax.f32 %v4793, %v4825
        %v4858 = vmax.f32 %v4794, %v4826
        %v4859 = vmax.f32 %v4795, %v4827
        %v4860 = vld [vmem:[%s4] sm:$0xff]
        %v4862 = vsel %vm290, %v4828, 0
        %v4865 = vsel %vm290, %v4829, 0
        %v4868 = vsel %vm290, %v4830, 0
        %v4871 = vsel %vm290, %v4831, 0
        %v4874 = vsel %vm290, %v4832, 0
        %v4877 = vsel %vm290, %v4833, 0
        %v4880 = vsel %vm290, %v4834, 0
        %v4883 = vsel %vm290, %v4835, 0
        %v4886 = vsel %vm290, %v4836, 0
        %v4889 = vsel %vm290, %v4837, 0
        %v4892 = vsel %vm290, %v4838, 0
        %v4895 = vsel %vm290, %v4839, 0
        %v4898 = vsel %vm290, %v4840, 0
        %v4901 = vsel %vm290, %v4841, 0
        %v4904 = vsel %vm290, %v4842, 0
        %v4907 = vsel %vm290, %v4843, 0
        %v4910 = vsel %vm290, %v4844, 0
        %v4913 = vsel %vm290, %v4845, 0
        %v4916 = vsel %vm290, %v4846, 0
        %v4919 = vsel %vm290, %v4847, 0
        %v4922 = vsel %vm290, %v4848, 0
        %v4925 = vsel %vm290, %v4849, 0
        %v4928 = vsel %vm290, %v4850, 0
        %v4931 = vsel %vm290, %v4851, 0
        %v4934 = vsel %vm290, %v4852, 0
        %v4937 = vsel %vm290, %v4853, 0
        %v4940 = vsel %vm290, %v4854, 0
        %v4943 = vsel %vm290, %v4855, 0
        %v4946 = vsel %vm290, %v4856, 0
        %v4949 = vsel %vm290, %v4857, 0
        %v4952 = vsel %vm290, %v4858, 0
        %v4955 = vsel %vm290, %v4859, 0
        %4957 = vmatprep.subr.mxu0 0.0
        %4958 = vmatpush1.msra.mxu0 %v4860
        %4959 = vmatprep.subr.mxu0 0.0
        %4960 = vmatpush1.msra.mxu0 0.0
        %4961 = vmatprep.subr.mxu0 0.0
        %4962 = vmatpush1.msra.mxu0 0.0
        %4963 = vmatprep.subr.mxu0 0.0
        %4964 = vmatpush1.msra.mxu0 0.0
        %4965 = vmatprep.subr.mxu0 0.0
        %4966 = vmatpush1.msra.mxu0 0.0
        %4967 = vmatprep.subr.mxu0 0.0
        %4968 = vmatpush1.msra.mxu0 0.0
        %4969 = vmatprep.subr.mxu0 0.0
        %4970 = vmatpush1.msra.mxu0 0.0
        %4971 = vmatprep.subr.mxu0 0.0
        %4972 = vmatpush1.msra.mxu0 0.0
        %4973 = vmatprep.subr.mxu0 0.0
        %4974 = vmatpush1.msra.mxu0 0.0
        %4975 = vmatprep.subr.mxu0 0.0
        %4976 = vmatpush1.msra.mxu0 0.0
        %4977 = vmatprep.subr.mxu0 0.0
        %4978 = vmatpush1.msra.mxu0 0.0
        %4979 = vmatprep.subr.mxu0 0.0
        %4980 = vmatpush1.msra.mxu0 0.0
        %4981 = vmatprep.subr.mxu0 0.0
        %4982 = vmatpush1.msra.mxu0 0.0
        %4983 = vmatprep.subr.mxu0 0.0
        %4984 = vmatpush1.msra.mxu0 0.0
        %4985 = vmatprep.subr.mxu0 0.0
        %4986 = vmatpush1.msra.mxu0 0.0
        %4987 = vmatprep.subr.mxu0 0.0
        %4988 = vmatpush1.msra.mxu0 0.0
        %4989 = vmatprep.subr.mxu0 0.0
        %4990 = vmatpush1.msra.mxu0 0.0
        %4991 = vmatprep.subr.mxu0 0.0
        %4992 = vmatpush1.msra.mxu0 0.0
        %4993 = vmatprep.subr.mxu0 0.0
        %4994 = vmatpush1.msra.mxu0 0.0
        %4995 = vmatprep.subr.mxu0 0.0
        %4996 = vmatpush1.msra.mxu0 0.0
        %4997 = vmatprep.subr.mxu0 0.0
        %4998 = vmatpush1.msra.mxu0 0.0
        %4999 = vmatprep.subr.mxu0 0.0
        %5000 = vmatpush1.msra.mxu0 0.0
        %5001 = vmatprep.subr.mxu0 0.0
        %5002 = vmatpush1.msra.mxu0 0.0
        %5003 = vmatprep.subr.mxu0 0.0
        %5004 = vmatpush1.msra.mxu0 0.0
        %5005 = vmatprep.subr.mxu0 0.0
        %5006 = vmatpush1.msra.mxu0 0.0
        %5007 = vmatprep.subr.mxu0 0.0
        %5008 = vmatpush1.msra.mxu0 0.0
        %5009 = vmatprep.subr.mxu0 0.0
        %5010 = vmatpush1.msra.mxu0 0.0
        %5011 = vmatprep.subr.mxu0 0.0
        %5012 = vmatpush1.msra.mxu0 0.0
        %5013 = vmatprep.subr.mxu0 0.0
        %5014 = vmatpush1.msra.mxu0 0.0
        %5015 = vmatprep.subr.mxu0 0.0
        %5016 = vmatpush1.msra.mxu0 0.0
        %5017 = vmatprep.subr.mxu0 0.0
        %5018 = vmatpush1.msra.mxu0 0.0
        %5019 = vmatprep.subr.mxu0 0.0
        %5020 = vmatpush1.msra.mxu0 0.0
        %5021 = vmatprep.mubr.f32.mxu0 0.0
        %5022 = vmatmul.mubr.f32.gmra.mrb[0].mxu0 %v4862
        %v5023 = vpop.f32.mrb[0].mxu0
        %v5024 = vadd.f32 0.0, %v5023
        %v5025 = vpop.f32.mrb[0].mxu0
        %5026 = vmatprep.mubr.f32.mxu0 0.0
        %5027 = vmatmul.mubr.f32.gmra.mrb[0].mxu0 %v4865
        %v5028 = vpop.f32.mrb[0].mxu0
        %v5029 = vadd.f32 0.0, %v5028
        %v5030 = vpop.f32.mrb[0].mxu0
        %5031 = vmatprep.mubr.f32.mxu0 0.0
        %5032 = vmatmul.mubr.f32.gmra.mrb[0].mxu0 %v4868
        %v5033 = vpop.f32.mrb[0].mxu0
        %v5034 = vadd.f32 0.0, %v5033
        %v5035 = vpop.f32.mrb[0].mxu0
        %5036 = vmatprep.mubr.f32.mxu0 0.0
        %5037 = vmatmul.mubr.f32.gmra.mrb[0].mxu0 %v4871
        %v5038 = vpop.f32.mrb[0].mxu0
        %v5039 = vadd.f32 0.0, %v5038
        %v5040 = vpop.f32.mrb[0].mxu0
        %5041 = vmatprep.mubr.f32.mxu0 0.0
        %5042 = vmatmul.mubr.f32.gmra.mrb[0].mxu0 %v4874
        %v5043 = vpop.f32.mrb[0].mxu0
        %v5044 = vadd.f32 0.0, %v5043
        %v5045 = vpop.f32.mrb[0].mxu0
        %5046 = vmatprep.mubr.f32.mxu0 0.0
        %5047 = vmatmul.mubr.f32.gmra.mrb[0].mxu0 %v4877
        %v5048 = vpop.f32.mrb[0].mxu0
        %v5049 = vadd.f32 0.0, %v5048
        %v5050 = vpop.f32.mrb[0].mxu0
        %5051 = vmatprep.mubr.f32.mxu0 0.0
        %5052 = vmatmul.mubr.f32.gmra.mrb[0].mxu0 %v4880
        %v5053 = vpop.f32.mrb[0].mxu0
        %v5054 = vadd.f32 0.0, %v5053
        %v5055 = vpop.f32.mrb[0].mxu0
        %5056 = vmatprep.mubr.f32.mxu0 0.0
        %5057 = vmatmul.mubr.f32.gmra.mrb[0].mxu0 %v4883
        %v5058 = vpop.f32.mrb[0].mxu0
        %v5059 = vadd.f32 0.0, %v5058
        %v5060 = vpop.f32.mrb[0].mxu0
        %5061 = vmatprep.mubr.f32.mxu0 0.0
        %5062 = vmatmul.mubr.f32.gmra.mrb[0].mxu0 %v4886
        %v5063 = vpop.f32.mrb[0].mxu0
        %v5064 = vadd.f32 0.0, %v5063
        %v5065 = vpop.f32.mrb[0].mxu0
        %5066 = vmatprep.mubr.f32.mxu0 0.0
        %5067 = vmatmul.mubr.f32.gmra.mrb[0].mxu0 %v4889
        %v5068 = vpop.f32.mrb[0].mxu0
        %v5069 = vadd.f32 0.0, %v5068
        %v5070 = vpop.f32.mrb[0].mxu0
        %5071 = vmatprep.mubr.f32.mxu0 0.0
        %5072 = vmatmul.mubr.f32.gmra.mrb[0].mxu0 %v4892
        %v5073 = vpop.f32.mrb[0].mxu0
        %v5074 = vadd.f32 0.0, %v5073
        %v5075 = vpop.f32.mrb[0].mxu0
        %5076 = vmatprep.mubr.f32.mxu0 0.0
        %5077 = vmatmul.mubr.f32.gmra.mrb[0].mxu0 %v4895
        %v5078 = vpop.f32.mrb[0].mxu0
        %v5079 = vadd.f32 0.0, %v5078
        %v5080 = vpop.f32.mrb[0].mxu0
        %5081 = vmatprep.mubr.f32.mxu0 0.0
        %5082 = vmatmul.mubr.f32.gmra.mrb[0].mxu0 %v4898
        %v5083 = vpop.f32.mrb[0].mxu0
        %v5084 = vadd.f32 0.0, %v5083
        %v5085 = vpop.f32.mrb[0].mxu0
        %5086 = vmatprep.mubr.f32.mxu0 0.0
        %5087 = vmatmul.mubr.f32.gmra.mrb[0].mxu0 %v4901
        %v5088 = vpop.f32.mrb[0].mxu0
        %v5089 = vadd.f32 0.0, %v5088
        %v5090 = vpop.f32.mrb[0].mxu0
        %5091 = vmatprep.mubr.f32.mxu0 0.0
        %5092 = vmatmul.mubr.f32.gmra.mrb[0].mxu0 %v4904
        %v5093 = vpop.f32.mrb[0].mxu0
        %v5094 = vadd.f32 0.0, %v5093
        %v5095 = vpop.f32.mrb[0].mxu0
        %5096 = vmatprep.mubr.f32.mxu0 0.0
        %5097 = vmatmul.mubr.f32.gmra.mrb[0].mxu0 %v4907
        %v5098 = vpop.f32.mrb[0].mxu0
        %v5099 = vadd.f32 0.0, %v5098
        %v5100 = vpop.f32.mrb[0].mxu0
        %5101 = vmatprep.mubr.f32.mxu0 0.0
        %5102 = vmatmul.mubr.f32.gmra.mrb[0].mxu0 %v4910
        %v5103 = vpop.f32.mrb[0].mxu0
        %v5104 = vadd.f32 0.0, %v5103
        %v5105 = vpop.f32.mrb[0].mxu0
        %5106 = vmatprep.mubr.f32.mxu0 0.0
        %5107 = vmatmul.mubr.f32.gmra.mrb[0].mxu0 %v4913
        %v5108 = vpop.f32.mrb[0].mxu0
        %v5109 = vadd.f32 0.0, %v5108
        %v5110 = vpop.f32.mrb[0].mxu0
        %5111 = vmatprep.mubr.f32.mxu0 0.0
        %5112 = vmatmul.mubr.f32.gmra.mrb[0].mxu0 %v4916
        %v5113 = vpop.f32.mrb[0].mxu0
        %v5114 = vadd.f32 0.0, %v5113
        %v5115 = vpop.f32.mrb[0].mxu0
        %5116 = vmatprep.mubr.f32.mxu0 0.0
        %5117 = vmatmul.mubr.f32.gmra.mrb[0].mxu0 %v4919
        %v5118 = vpop.f32.mrb[0].mxu0
        %v5119 = vadd.f32 0.0, %v5118
        %v5120 = vpop.f32.mrb[0].mxu0
        %5121 = vmatprep.mubr.f32.mxu0 0.0
        %5122 = vmatmul.mubr.f32.gmra.mrb[0].mxu0 %v4922
        %v5123 = vpop.f32.mrb[0].mxu0
        %v5124 = vadd.f32 0.0, %v5123
        %v5125 = vpop.f32.mrb[0].mxu0
        %5126 = vmatprep.mubr.f32.mxu0 0.0
        %5127 = vmatmul.mubr.f32.gmra.mrb[0].mxu0 %v4925
        %v5128 = vpop.f32.mrb[0].mxu0
        %v5129 = vadd.f32 0.0, %v5128
        %v5130 = vpop.f32.mrb[0].mxu0
        %5131 = vmatprep.mubr.f32.mxu0 0.0
        %5132 = vmatmul.mubr.f32.gmra.mrb[0].mxu0 %v4928
        %v5133 = vpop.f32.mrb[0].mxu0
        %v5134 = vadd.f32 0.0, %v5133
        %v5135 = vpop.f32.mrb[0].mxu0
        %5136 = vmatprep.mubr.f32.mxu0 0.0
        %5137 = vmatmul.mubr.f32.gmra.mrb[0].mxu0 %v4931
        %v5138 = vpop.f32.mrb[0].mxu0
        %v5139 = vadd.f32 0.0, %v5138
        %v5140 = vpop.f32.mrb[0].mxu0
        %5141 = vmatprep.mubr.f32.mxu0 0.0
        %5142 = vmatmul.mubr.f32.gmra.mrb[0].mxu0 %v4934
        %v5143 = vpop.f32.mrb[0].mxu0
        %v5144 = vadd.f32 0.0, %v5143
        %v5145 = vpop.f32.mrb[0].mxu0
        %5146 = vmatprep.mubr.f32.mxu0 0.0
        %5147 = vmatmul.mubr.f32.gmra.mrb[0].mxu0 %v4937
        %v5148 = vpop.f32.mrb[0].mxu0
        %v5149 = vadd.f32 0.0, %v5148
        %v5150 = vpop.f32.mrb[0].mxu0
        %5151 = vmatprep.mubr.f32.mxu0 0.0
        %5152 = vmatmul.mubr.f32.gmra.mrb[0].mxu0 %v4940
        %v5153 = vpop.f32.mrb[0].mxu0
        %v5154 = vadd.f32 0.0, %v5153
        %v5155 = vpop.f32.mrb[0].mxu0
        %5156 = vmatprep.mubr.f32.mxu0 0.0
        %5157 = vmatmul.mubr.f32.gmra.mrb[0].mxu0 %v4943
        %v5158 = vpop.f32.mrb[0].mxu0
        %v5159 = vadd.f32 0.0, %v5158
        %v5160 = vpop.f32.mrb[0].mxu0
        %5161 = vmatprep.mubr.f32.mxu0 0.0
        %5162 = vmatmul.mubr.f32.gmra.mrb[0].mxu0 %v4946
        %v5163 = vpop.f32.mrb[0].mxu0
        %v5164 = vadd.f32 0.0, %v5163
        %v5165 = vpop.f32.mrb[0].mxu0
        %5166 = vmatprep.mubr.f32.mxu0 0.0
        %5167 = vmatmul.mubr.f32.gmra.mrb[0].mxu0 %v4949
        %v5168 = vpop.f32.mrb[0].mxu0
        %v5169 = vadd.f32 0.0, %v5168
        %v5170 = vpop.f32.mrb[0].mxu0
        %5171 = vmatprep.mubr.f32.mxu0 0.0
        %5172 = vmatmul.mubr.f32.gmra.mrb[0].mxu0 %v4952
        %v5173 = vpop.f32.mrb[0].mxu0
        %v5174 = vadd.f32 0.0, %v5173
        %v5175 = vpop.f32.mrb[0].mxu0
        %5176 = vmatprep.mubr.f32.mxu0 0.0
        %5177 = vmatmul.mubr.f32.gmra.mrb[0].mxu0 %v4955
        %v5178 = vpop.f32.mrb[0].mxu0
        %v5179 = vadd.f32 0.0, %v5178
        %v5180 = vpop.f32.mrb[0].mxu0
        %5181 = vdwg.mxu0
        %v5182 = vadd.f32 %v4283, %v5024
        %v5183 = vadd.f32 %v4284, %v5029
        %v5184 = vadd.f32 %v4285, %v5034
        %v5185 = vadd.f32 %v4286, %v5039
        %v5186 = vadd.f32 %v4287, %v5044
        %v5187 = vadd.f32 %v4288, %v5049
        %v5188 = vadd.f32 %v4289, %v5054
        %v5189 = vadd.f32 %v4290, %v5059
        %v5190 = vadd.f32 %v4291, %v5064
        %v5191 = vadd.f32 %v4292, %v5069
        %v5192 = vadd.f32 %v4293, %v5074
        %v5193 = vadd.f32 %v4294, %v5079
        %v5194 = vadd.f32 %v4295, %v5084
        %v5195 = vadd.f32 %v4296, %v5089
        %v5196 = vadd.f32 %v4297, %v5094
        %v5197 = vadd.f32 %v4298, %v5099
        %v5198 = vadd.f32 %v4299, %v5104
        %v5199 = vadd.f32 %v4300, %v5109
        %v5200 = vadd.f32 %v4301, %v5114
        %v5201 = vadd.f32 %v4302, %v5119
        %v5202 = vadd.f32 %v4303, %v5124
        %v5203 = vadd.f32 %v4304, %v5129
        %v5204 = vadd.f32 %v4305, %v5134
        %v5205 = vadd.f32 %v4306, %v5139
        %v5206 = vadd.f32 %v4307, %v5144
        %v5207 = vadd.f32 %v4308, %v5149
        %v5208 = vadd.f32 %v4309, %v5154
        %v5209 = vadd.f32 %v4310, %v5159
        %v5210 = vadd.f32 %v4311, %v5164
        %v5211 = vadd.f32 %v4312, %v5169
        %v5212 = vadd.f32 %v4313, %v5174
        %v5213 = vadd.f32 %v4314, %v5179
        %v5214 = vld [vmem:[%s5] sm:$0x1]
        %v5216 = vlaneseq
        %v5217 = vshrl.u32 %v5216, 7
        %v5218 = vsub.s32 0, %v5217
        %v5219 = vrot.slane %v5214, %v5218
        %v5221 = vadd.f32 %v5182, %v5219
        %v5222 = vadd.f32 %v5183, %v5219
        %v5223 = vadd.f32 %v5184, %v5219
        %v5224 = vadd.f32 %v5185, %v5219
        %v5225 = vadd.f32 %v5186, %v5219
        %v5226 = vadd.f32 %v5187, %v5219
        %v5227 = vadd.f32 %v5188, %v5219
        %v5228 = vadd.f32 %v5189, %v5219
        %v5229 = vadd.f32 %v5190, %v5219
        %v5230 = vadd.f32 %v5191, %v5219
        %v5231 = vadd.f32 %v5192, %v5219
        %v5232 = vadd.f32 %v5193, %v5219
        %v5233 = vadd.f32 %v5194, %v5219
        %v5234 = vadd.f32 %v5195, %v5219
        %v5235 = vadd.f32 %v5196, %v5219
        %v5236 = vadd.f32 %v5197, %v5219
        %v5237 = vadd.f32 %v5198, %v5219
        %v5238 = vadd.f32 %v5199, %v5219
        %v5239 = vadd.f32 %v5200, %v5219
        %v5240 = vadd.f32 %v5201, %v5219
        %v5241 = vadd.f32 %v5202, %v5219
        %v5242 = vadd.f32 %v5203, %v5219
        %v5243 = vadd.f32 %v5204, %v5219
        %v5244 = vadd.f32 %v5205, %v5219
        %v5245 = vadd.f32 %v5206, %v5219
        %v5246 = vadd.f32 %v5207, %v5219
        %v5247 = vadd.f32 %v5208, %v5219
        %v5248 = vadd.f32 %v5209, %v5219
        %v5249 = vadd.f32 %v5210, %v5219
        %v5250 = vadd.f32 %v5211, %v5219
        %v5251 = vadd.f32 %v5212, %v5219
        %v5252 = vadd.f32 %v5213, %v5219
        %v5253 = vmax.f32 %v5221, 0.0
        %v5254 = vmax.f32 %v5222, 0.0
        %v5255 = vmax.f32 %v5223, 0.0
        %v5256 = vmax.f32 %v5224, 0.0
        %v5257 = vmax.f32 %v5225, 0.0
        %v5258 = vmax.f32 %v5226, 0.0
        %v5259 = vmax.f32 %v5227, 0.0
        %v5260 = vmax.f32 %v5228, 0.0
        %v5261 = vmax.f32 %v5229, 0.0
        %v5262 = vmax.f32 %v5230, 0.0
        %v5263 = vmax.f32 %v5231, 0.0
        %v5264 = vmax.f32 %v5232, 0.0
        %v5265 = vmax.f32 %v5233, 0.0
        %v5266 = vmax.f32 %v5234, 0.0
        %v5267 = vmax.f32 %v5235, 0.0
        %v5268 = vmax.f32 %v5236, 0.0
        %v5269 = vmax.f32 %v5237, 0.0
        %v5270 = vmax.f32 %v5238, 0.0
        %v5271 = vmax.f32 %v5239, 0.0
        %v5272 = vmax.f32 %v5240, 0.0
        %v5273 = vmax.f32 %v5241, 0.0
        %v5274 = vmax.f32 %v5242, 0.0
        %v5275 = vmax.f32 %v5243, 0.0
        %v5276 = vmax.f32 %v5244, 0.0
        %v5277 = vmax.f32 %v5245, 0.0
        %v5278 = vmax.f32 %v5246, 0.0
        %v5279 = vmax.f32 %v5247, 0.0
        %v5280 = vmax.f32 %v5248, 0.0
        %v5281 = vmax.f32 %v5249, 0.0
        %v5282 = vmax.f32 %v5250, 0.0
        %v5283 = vmax.f32 %v5251, 0.0
        %v5284 = vmax.f32 %v5252, 0.0
        %vm5285 = vcmask 261120
        %5286 = vst.msk [vmem:[%s244] sm:$0xff] %vm5285, %v5253
        %5287 = vst.msk [vmem:[%s244 + $0x8] sm:$0xff] %vm5285, %v5254
        %5288 = vst.msk [vmem:[%s244 + $0x10] sm:$0xff] %vm5285, %v5255
        %5289 = vst.msk [vmem:[%s244 + $0x18] sm:$0xff] %vm5285, %v5256
        %5290 = vst.msk [vmem:[%s244 + $0x20] sm:$0xff] %vm5285, %v5257
        %5291 = vst.msk [vmem:[%s244 + $0x28] sm:$0xff] %vm5285, %v5258
        %5292 = vst.msk [vmem:[%s244 + $0x30] sm:$0xff] %vm5285, %v5259
        %5293 = vst.msk [vmem:[%s244 + $0x38] sm:$0xff] %vm5285, %v5260
        %5294 = vst.msk [vmem:[%s244 + $0x40] sm:$0xff] %vm5285, %v5261
        %5295 = vst.msk [vmem:[%s244 + $0x48] sm:$0xff] %vm5285, %v5262
        %5296 = vst.msk [vmem:[%s244 + $0x50] sm:$0xff] %vm5285, %v5263
        %5297 = vst.msk [vmem:[%s244 + $0x58] sm:$0xff] %vm5285, %v5264
        %5298 = vst.msk [vmem:[%s244 + $0x60] sm:$0xff] %vm5285, %v5265
        %5299 = vst.msk [vmem:[%s244 + $0x68] sm:$0xff] %vm5285, %v5266
        %5300 = vst.msk [vmem:[%s244 + $0x70] sm:$0xff] %vm5285, %v5267
        %5301 = vst.msk [vmem:[%s244 + $0x78] sm:$0xff] %vm5285, %v5268
        %5302 = vst.msk [vmem:[%s244 + $0x80] sm:$0xff] %vm5285, %v5269
        %5303 = vst.msk [vmem:[%s244 + $0x88] sm:$0xff] %vm5285, %v5270
        %5304 = vst.msk [vmem:[%s244 + $0x90] sm:$0xff] %vm5285, %v5271
        %5305 = vst.msk [vmem:[%s244 + $0x98] sm:$0xff] %vm5285, %v5272
        %5306 = vst.msk [vmem:[%s244 + $0xa0] sm:$0xff] %vm5285, %v5273
        %5307 = vst.msk [vmem:[%s244 + $0xa8] sm:$0xff] %vm5285, %v5274
        %5308 = vst.msk [vmem:[%s244 + $0xb0] sm:$0xff] %vm5285, %v5275
        %5309 = vst.msk [vmem:[%s244 + $0xb8] sm:$0xff] %vm5285, %v5276
        %5310 = vst.msk [vmem:[%s244 + $0xc0] sm:$0xff] %vm5285, %v5277
        %5311 = vst.msk [vmem:[%s244 + $0xc8] sm:$0xff] %vm5285, %v5278
        %5312 = vst.msk [vmem:[%s244 + $0xd0] sm:$0xff] %vm5285, %v5279
        %5313 = vst.msk [vmem:[%s244 + $0xd8] sm:$0xff] %vm5285, %v5280
        %5314 = vst.msk [vmem:[%s244 + $0xe0] sm:$0xff] %vm5285, %v5281
        %5315 = vst.msk [vmem:[%s244 + $0xe8] sm:$0xff] %vm5285, %v5282
        %5316 = vst.msk [vmem:[%s244 + $0xf0] sm:$0xff] %vm5285, %v5283
        %5317 = vst.msk [vmem:[%s244 + $0xf8] sm:$0xff] %vm5285, %v5284
        %s5318 = sand.u32 %s159, 1
        %s5319 = scalar_lea.sflag [#allocation5], %s5318
        %s5320 = sand.u32 %s159, 1
        %s5321 = smul.addr %s5320, 256
        %s5322 = scalar_lea.vmem [#allocation4], %s5321
        // Predicated region
        $region45: #{inception_forward.1} parent=43 // pred_check
          %p5323 = pneg %p169
        $region46: #{inception_forward.1} parent=43 // pred_check_branch
          %5325 = sbr.rel (%p5323) target = $region48
        $region47: #{inception_forward.1} parent=43 // pred_region
          %s5327 = ssub.s32 4096, 4096
          %5328 = vsyncadd %s5319, %s5327
          %s5329 = smul.addr %s20, 32
          %s5330 = smul.addr %s5329, 128
          %s5331 = scalar_lea.hbm %s6, %s5330
          %s5332 = sshll.u32 %s5322, 4
          %s5333 = int_to_ptr.vmem [resolvable:$true] %s5332
          %5338 = dma.vmem_to_hbm [thread:$0]  %s5333, 4096, %s5331, %s5319, 128, 128, 8
        $region48: #{inception_forward.1} parent=43 // pred_fallthru
          _
      $region44: #{inception_forward.1} parent=5 // pred_fallthru
        _
      %p5339 = scmp.le.s32.totalorder 2, %s15
      // Predicated region
      $region49: #{inception_forward.1} parent=5 // pred_check
        %p5340 = pneg %p5339
      $region50: #{inception_forward.1} parent=5 // pred_check_branch
        %5342 = sbr.rel (%p5340) target = $region52
      $region51: #{inception_forward.1} parent=5 // pred_region
        %s5343 = ssub.s32 %s15, 2
        // Predicated region
        $region53: #{inception_forward.1} parent=51 // pred_check
          %p5344 = pneg %p175
        $region54: #{inception_forward.1} parent=51 // pred_check_branch
          %5346 = sbr.rel (%p5344) target = $region56
        $region55: #{inception_forward.1} parent=51 // pred_region
          %s5347 = sand.u32 %s160, 1
          %s5348 = scalar_lea.sflag [#allocation5], %s5347
          %s5349 = sand.u32 %s160, 1
          %s5350 = smul.addr %s5349, 256
          %s5351 = scalar_lea.vmem [#allocation4], %s5350
          %5352 = dma.done %s5348, 4096
        $region56: #{inception_forward.1} parent=51 // pred_fallthru
          _
      $region52: #{inception_forward.1} parent=5 // pred_fallthru
        _
    $region6: #{inception_forward.1} parent=1 // loop_footer
      %s19 = sadd.s32 1, %s15
    $region7: #{inception_forward.1} parent=1 // loop_footer_branch
      %14 = sbr.rel target = $region3
    $region8: #{inception_forward.1} parent=1 // loop_exit
      _
    %5353 = vsyncpa [#allocation5], 1
    %s5354 = scalar_lea.sflag [#allocation5], 1
    %5355 = vsyncpa %s5354, 1

</llo_original>
